<compile_context>
chip_gen: v7x
topology: tpu7x:2x2x1
jax: 0.10.0
libtpu: 0.0.40
codegen_flags: <defaults>
</compile_context>

<pallas_src>
import functools

import numpy as np
import jax
import jax.numpy as jnp
from jax.experimental import pallas as pl
from jax.experimental.pallas import tpu as pltpu


def _round_up(x, m):
    return (x + m - 1) // m * m


def _elu(x):
    # elu(x) = x if x > 0 else exp(x) - 1   (alpha = 1)
    return jnp.where(x > 0, x, jnp.exp(jnp.minimum(x, 0.0)) - 1.0)


def _pick_vmem_limit():
    """Generation-dependent scoped-VMEM limit (~3/4 of physical VMEM)."""
    try:
        cap = getattr(pltpu.get_tpu_info(), "vmem_capacity_bytes", None)
    except Exception:
        cap = None
    if not cap:
        return 48 * 1024 * 1024            # safe on every generation (v7x: 64 MiB)
    return min(int(cap) * 3 // 4, 112 * 1024 * 1024)   # 96 MiB on v5e/v6e, 48 MiB on v7x


@functools.lru_cache(maxsize=None)
def _single_buffering_supported():
    """Probe once whether pl.Buffered(1) (single-buffered constant inputs) lowers."""
    try:
        def _probe(x_ref, o_ref):
            o_ref[...] = x_ref[...] + 1.0

        out = pl.pallas_call(
            _probe,
            grid=(2,),
            in_specs=[pl.BlockSpec((8, 128), lambda i: (0, 0),
                                   pipeline_mode=pl.Buffered(1))],
            out_specs=pl.BlockSpec((8, 128), lambda i: (i, 0)),
            out_shape=jax.ShapeDtypeStruct((16, 128), jnp.float32),
        )(jnp.zeros((8, 128), jnp.float32))
        jax.block_until_ready(out)
        return True
    except Exception:
        return False


def _lmufft_kernel(x_ref, d2_ref, i2_ref, wr_ref, wi_ref,
                   wm_ref, wx_ref, bias_ref, h_ref, m_ref, y_ref):
    tb = x_ref.shape[0]
    f_pad = wr_ref.shape[0]

    d2 = d2_ref[...]                                     # (2Fp, Sp) bf16
    i2 = i2_ref[...]                                     # (Sp, 2Fp) bf16
    wm = wm_ref[...]                                     # (H, H)    bf16
    wx = wx_ref[...]                                     # (H, H)    bf16
    wr = wr_ref[...].astype(jnp.float32)                 # (Fp, H)
    wi = wi_ref[...].astype(jnp.float32)                 # (Fp, H)
    bias = bias_ref[...]                                 # (1, H)    f32

    # Static (unrolled) loop over the TB batch elements of this block; every
    # matmul keeps the hidden dimension as the lane axis.
    for b in range(tb):
        xb = x_ref[b]                                    # (Sp, H) bf16

        # rfft over seq: fused real-DFT matmul, rows [0:Fp) real, [Fp:2Fp) imag.
        xy = jnp.dot(d2, xb, preferred_element_type=jnp.float32)   # (2Fp, H) f32
        xr = xy[:f_pad]
        xi = xy[f_pad:]

        # Complex elementwise multiply with weights_fft (f32 on the VPU),
        # written straight into a bf16 scratch (no concatenate transient).
        y_ref[pl.ds(0, f_pad), :] = (xr * wr - xi * wi).astype(jnp.bfloat16)
        y_ref[pl.ds(f_pad, f_pad), :] = (xr * wi + xi * wr).astype(jnp.bfloat16)

        # irfft over seq (eval-mode bn_2 scale pre-folded into i2).
        m_f = jnp.dot(i2, y_ref[...], preferred_element_type=jnp.float32)   # (Sp, H)

        # tiny_conv_linear (1x1, 2H->H) as two (Sp,H)@(H,H) dots; bn_1 folded.
        h_f = (jnp.dot(m_f.astype(jnp.bfloat16), wm,
                       preferred_element_type=jnp.float32)
               + jnp.dot(xb, wx, preferred_element_type=jnp.float32)
               + bias)

        # TODO(synk): nn.Dropout(p=0.5) is stochastic in train mode; eval-mode identity here.
        h_ref[b] = _elu(h_f).astype(h_ref.dtype)
        m_ref[b] = _elu(m_f).astype(m_ref.dtype)


def prepare_operands(params, seq_len, hidden_size, eps=1e-5):
    """One-time host-side preprocessing (DFT matrices, BN folding, casts).

    Nothing here depends on the activations, so call once and reuse.
    """
    S, H = seq_len, hidden_size
    F = S // 2 + 1
    Sp = _round_up(S, 16)          # bf16 packs 16 rows per sublane group
    Fp = _round_up(F, 16)

    f32, bf16 = jnp.float32, jnp.bfloat16

    # Eval-mode BatchNorm1d(seq_len) with default running stats: constant
    # scale, zero shift.
    # TODO(synk): trained (non-default) running stats are per-seq-position and
    # would need per-row folding instead of these scalar scales.
    bn1_scale = 1.0 / np.sqrt(1.0 + eps)
    bn2_scale = 1.0 / np.sqrt(1.0 + eps)

    # Fused forward real-DFT matrix [cos; -sin], zero-padded to (2Fp, Sp).
    f_idx = np.arange(F)[:, None].astype(np.float64)
    s_idx = np.arange(S)[None, :].astype(np.float64)
    ang = 2.0 * np.pi * f_idx * s_idx / S
    d2 = np.zeros((2 * Fp, Sp), np.float32)
    d2[:F, :S] = np.cos(ang)
    d2[Fp:Fp + F, :S] = -np.sin(ang)

    # Fused inverse real-DFT matrix [iar | iai], bn_2 scale folded in.
    eye_f = np.eye(F)
    iar = np.fft.irfft(eye_f.astype(np.complex128), n=S, axis=0).real
    iai = np.fft.irfft(1j * eye_f, n=S, axis=0).real
    i2 = np.zeros((Sp, 2 * Fp), np.float32)
    i2[:S, :F] = iar * bn2_scale
    i2[:S, Fp:Fp + F] = iai * bn2_scale

    # weights_fft, zero-padded to (Fp, H); unreplicated, bf16 (upcast in-kernel).
    wr = jnp.zeros((Fp, H), f32).at[:F].set(jnp.asarray(params["wr"], f32)).astype(bf16)
    wi = jnp.zeros((Fp, H), f32).at[:F].set(jnp.asarray(params["wi"], f32)).astype(bf16)

    # tiny_conv_linear weights split per input branch; bn_1 folded in, the
    # m-branch divided by bn_2's scale (i2 already carries bn_2).
    w_lin = jnp.asarray(params["w_lin"], f32)                        # (H, 2H)
    wm = (w_lin[:, :H].T * (bn1_scale / bn2_scale)).astype(bf16)     # (H, H)
    wx = (w_lin[:, H:].T * bn1_scale).astype(bf16)                   # (H, H)
    bias = (jnp.asarray(params["b_lin"], f32) * bn1_scale).reshape(1, H)

    return dict(seq_len=S, hidden_size=H, s_pad=Sp, f_pad=Fp,
                d2=jnp.asarray(d2, bf16), i2=jnp.asarray(i2, bf16),
                wr=wr, wi=wi, wm=wm, wx=wx, bias=bias)


def _choose_tb(batch, s_pad, f_pad, hidden, vmem_limit):
    """Largest batch sub-block (<= 8) whose pipeline buffers fit comfortably."""
    const_bytes = (2 * (2 * f_pad) * s_pad * 2      # d2 + i2   (bf16)
                   + 2 * f_pad * hidden * 2         # wr + wi   (bf16)
                   + 2 * hidden * hidden * 2        # wm + wx   (bf16)
                   + hidden * 4)                    # bias      (f32)
    transient = (3 * (2 * f_pad) * hidden * 4       # xy and complex-mul temporaries (f32)
                 + 4 * s_pad * hidden * 4           # m_f / h_f temporaries (f32)
                 + (2 * f_pad) * hidden * 2)        # y scratch (bf16)
    fixed = 2 * const_bytes + transient             # 2x: consts may be double-buffered
    per_b = 3 * 2 * s_pad * hidden * 2              # x + h + m blocks, double-buffered bf16
    budget = int(vmem_limit * 0.6) - fixed
    tb_fit = max(1, budget // max(per_b, 1))
    tb_cap = max(1, batch // 2)                     # keep the grid >= 2 without heavy padding
    for cand in (8, 4, 2, 1):
        if cand <= tb_fit and cand <= tb_cap:
            return cand
    return 1


def lmufft_forward(x, ops):
    """Eval-mode LMUFFT_nccl forward pass. Returns (h, m) in bfloat16."""
    B, S, H = x.shape
    assert S == ops["seq_len"] and H == ops["hidden_size"]
    Sp, Fp = ops["s_pad"], ops["f_pad"]

    vmem_limit = _pick_vmem_limit()
    TB = _choose_tb(B, Sp, Fp, H, vmem_limit)
    Bp = _round_up(B, 2 * TB)              # grid = Bp/TB is even and >= 2 (v7x: 2 TCs)
    G = Bp // TB

    bf16 = jnp.bfloat16
    x_p = jnp.pad(x, ((0, Bp - B), (0, Sp - S), (0, 0))).astype(bf16)

    const_kwargs = {}
    if _single_buffering_supported():
        const_kwargs = dict(pipeline_mode=pl.Buffered(1))   # constants: no double buffer

    def const_spec(arr):
        nd = arr.ndim
        return pl.BlockSpec(arr.shape, lambda j, _nd=nd: (0,) * _nd, **const_kwargs)

    blk_spec = pl.BlockSpec((TB, Sp, H), lambda j: (j, 0, 0))

    # TODO(synk): for very long seq_len (d2/i2 ~ 4*S^2 bytes in bf16 no longer
    # fit v7x's 64 MiB VMEM) the two DFT matmuls should be tiled over Sp/Fp
    # chunks with a reduction grid axis instead of keeping d2/i2 resident.
    in_specs = [blk_spec,
                const_spec(ops["d2"]), const_spec(ops["i2"]),
                const_spec(ops["wr"]), const_spec(ops["wi"]),
                const_spec(ops["wm"]), const_spec(ops["wx"]),
                const_spec(ops["bias"])]
    out_specs = (blk_spec, blk_spec)
    out_shape = (jax.ShapeDtypeStruct((Bp, Sp, H), bf16),
                 jax.ShapeDtypeStruct((Bp, Sp, H), bf16))

    # Cost estimate: constants are DMA'd once; activations in once, out twice.
    per_b_flops = (2 * (2 * Fp) * Sp * H        # forward real DFT
                   + 2 * Sp * (2 * Fp) * H      # inverse real DFT
                   + 2 * 2 * Sp * H * H)        # two (Sp,H)@(H,H) conv dots
    const_bytes = (2 * (2 * Fp) * Sp * 2 + 2 * Fp * H * 2 + 2 * H * H * 2 + H * 4)
    cost = pl.CostEstimate(
        flops=int(Bp * per_b_flops),
        transcendentals=int(2 * Bp * Sp * H),
        bytes_accessed=int(Bp * Sp * H * 2 + 2 * Bp * Sp * H * 2 + const_bytes))

    h_p, m_p = pl.pallas_call(
        _lmufft_kernel,
        grid=(G,),
        in_specs=in_specs,
        out_specs=out_specs,
        out_shape=out_shape,
        scratch_shapes=[pltpu.VMEM((2 * Fp, H), bf16)],
        compiler_params=pltpu.CompilerParams(
            dimension_semantics=("parallel",),
            vmem_limit_bytes=vmem_limit),
        cost_estimate=cost,
    )(x_p, ops["d2"], ops["i2"], ops["wr"], ops["wi"],
      ops["wm"], ops["wx"], ops["bias"])

    # Padded batch/seq rows contain elu(bias)/zeros -> slice them off here.
    return h_p[:B, :S], m_p[:B, :S]


def make_params(key, seq_len, hidden_size):
    """Deterministic parameter init mirroring LMUFFT_nccl.__init__ shapes."""
    S, H = seq_len, hidden_size
    F = S // 2 + 1
    k1, k2, k3 = jax.random.split(key, 3)

    # weights_fft: (F, H, 2), kaiming_uniform(fan_in = 2H, relu gain)
    bound_fft = float(np.sqrt(3.0 / H))
    wfft = jax.random.uniform(k1, (F, H, 2), jnp.float32,
                              minval=-bound_fft, maxval=bound_fft)

    # tiny_conv_linear: Conv1d(2H -> H, k=1) default init.
    bound_lin = float(1.0 / np.sqrt(2 * H))
    w_lin = jax.random.uniform(k2, (H, 2 * H), jnp.float32,
                               minval=-bound_lin, maxval=bound_lin)
    b_lin = jax.random.uniform(k3, (H,), jnp.float32,
                               minval=-bound_lin, maxval=bound_lin)

    return dict(wr=wfft[..., 0], wi=wfft[..., 1], w_lin=w_lin, b_lin=b_lin)


def reference_forward(x, params, eps=1e-5):
    """Pure-JAX reference (jnp.fft, f32) for validation."""
    S = x.shape[1]
    X = jnp.fft.rfft(x, n=S, axis=-2)
    W = params["wr"] + 1j * params["wi"]
    m = jnp.fft.irfft(X * W[None], n=S, axis=-2)
    inp = jnp.concatenate([m, x], axis=-1)
    h = jnp.einsum("bsc,oc->bso", inp, params["w_lin"]) + params["b_lin"]
    scale = 1.0 / np.sqrt(1.0 + eps)
    return jax.nn.elu(h * scale), jax.nn.elu(m * scale)


if __name__ == "__main__":
    B, S, H = 16, 8, 32    # batch, seq_len, hidden_size (small demo shapes)
    key = jax.random.PRNGKey(0)
    kx, kp = jax.random.split(key)
    x = jax.random.normal(kx, (B, S, H), jnp.float32)
    params = make_params(kp, seq_len=S, hidden_size=H)

    ops = prepare_operands(params, seq_len=S, hidden_size=H)   # one-time prep
    h, m = lmufft_forward(x, ops)
    jax.block_until_ready((h, m))

    h_want, m_want = reference_forward(x, params)
    # Tolerance accounts for bf16 MXU operands / bf16 outputs (f32 accumulation).
    np.testing.assert_allclose(np.asarray(h.astype(jnp.float32)), np.asarray(h_want),
                               rtol=5e-2, atol=5e-2)
    np.testing.assert_allclose(np.asarray(m.astype(jnp.float32)), np.asarray(m_want),
                               rtol=5e-2, atol=5e-2)
    print("KERNEL_OK")
</pallas_src>

<mosaic_0001>
module attributes {stable_mosaic.version = 11 : i64} {
  func.func @_probe(%arg0: i32, %arg1: memref<8x128xf32, #tpu.memory_space<vmem>>, %arg2: memref<8x128xf32, #tpu.memory_space<vmem>>) attributes {dimension_semantics = [#tpu.dimension_semantics<arbitrary>], iteration_bounds = array<i64: 2>, scalar_prefetch = 0 : i64, scratch_operands = 0 : i64, tpu.core_type = #tpu.core_type<tc>, window_params = [{pipeline_mode = #tpu.pipeline_mode<synchronous>, transform_indices = @transform_0, window_bounds = array<i64: 8, 128>}, {transform_indices = @transform_1, window_bounds = array<i64: 8, 128>}]} {
    %c0 = arith.constant 0 : index
    %c0_0 = arith.constant 0 : index
    %0 = vector.load %arg1[%c0, %c0_0] : memref<8x128xf32, #tpu.memory_space<vmem>>, vector<8x128xf32>
    %cst = arith.constant 1.000000e+00 : f32
    %1 = vector.broadcast %cst : f32 to vector<8x128xf32>
    %2 = arith.addf %0, %1 : vector<8x128xf32>
    %c0_1 = arith.constant 0 : index
    %c0_2 = arith.constant 0 : index
    %3 = vector.load %arg2[%c0_1, %c0_2] : memref<8x128xf32, #tpu.memory_space<vmem>>, vector<8x128xf32>
    tpu.vector_store %arg2[%c0_1, %c0_2], %2 {strides = array<i32>} : memref<8x128xf32, #tpu.memory_space<vmem>>, vector<8x128xf32>,
    return
  }
  func.func @transform_0(%arg0: i32) -> (i32, i32) {
    %c0_i32 = arith.constant 0 : i32
    %c0_i32_0 = arith.constant 0 : i32
    %c0_i32_1 = arith.constant 0 : i32
    return %c0_i32, %c0_i32_0 : i32, i32
  }
  func.func @transform_1(%arg0: i32) -> (i32, i32) {
    %c0_i32 = arith.constant 0 : i32
    %c0_i32_0 = arith.constant 0 : i32
    return %arg0, %c0_i32 : i32, i32
  }
}

module attributes {stable_mosaic.version = 11 : i64} {
  func.func @_lmufft_kernel(%arg0: i32, %arg1: memref<8x16x32xbf16, #tpu.memory_space<vmem>>, %arg2: memref<32x16xbf16, #tpu.memory_space<vmem>>, %arg3: memref<16x32xbf16, #tpu.memory_space<vmem>>, %arg4: memref<16x32xbf16, #tpu.memory_space<vmem>>, %arg5: memref<16x32xbf16, #tpu.memory_space<vmem>>, %arg6: memref<32x32xbf16, #tpu.memory_space<vmem>>, %arg7: memref<32x32xbf16, #tpu.memory_space<vmem>>, %arg8: memref<1x32xf32, #tpu.memory_space<vmem>>, %arg9: memref<8x16x32xbf16, #tpu.memory_space<vmem>>, %arg10: memref<8x16x32xbf16, #tpu.memory_space<vmem>>, %arg11: memref<32x32xbf16, #tpu.memory_space<vmem>>) attributes {dimension_semantics = [#tpu.dimension_semantics<parallel>], iteration_bounds = array<i64: 2>, scalar_prefetch = 0 : i64, scratch_operands = 1 : i64, tpu.core_type = #tpu.core_type<tc>, window_params = [{transform_indices = @transform_0, window_bounds = array<i64: 8, 16, 32>}, {pipeline_mode = #tpu.pipeline_mode<synchronous>, transform_indices = @transform_1, window_bounds = array<i64: 32, 16>}, {pipeline_mode = #tpu.pipeline_mode<synchronous>, transform_indices = @transform_2, window_bounds = array<i64: 16, 32>}, {pipeline_mode = #tpu.pipeline_mode<synchronous>, transform_indices = @transform_3, window_bounds = array<i64: 16, 32>}, {pipeline_mode = #tpu.pipeline_mode<synchronous>, transform_indices = @transform_4, window_bounds = array<i64: 16, 32>}, {pipeline_mode = #tpu.pipeline_mode<synchronous>, transform_indices = @transform_5, window_bounds = array<i64: 32, 32>}, {pipeline_mode = #tpu.pipeline_mode<synchronous>, transform_indices = @transform_6, window_bounds = array<i64: 32, 32>}, {pipeline_mode = #tpu.pipeline_mode<synchronous>, transform_indices = @transform_7, window_bounds = array<i64: 1, 32>}, {transform_indices = @transform_8, window_bounds = array<i64: 8, 16, 32>}, {transform_indices = @transform_9, window_bounds = array<i64: 8, 16, 32>}]} {
    %c0 = arith.constant 0 : index
    %c0_0 = arith.constant 0 : index
    %0 = vector.load %arg2[%c0, %c0_0] : memref<32x16xbf16, #tpu.memory_space<vmem>>, vector<32x16xbf16>
    %c0_1 = arith.constant 0 : index
    %c0_2 = arith.constant 0 : index
    %1 = vector.load %arg3[%c0_1, %c0_2] : memref<16x32xbf16, #tpu.memory_space<vmem>>, vector<16x32xbf16>
    %c0_3 = arith.constant 0 : index
    %c0_4 = arith.constant 0 : index
    %2 = vector.load %arg6[%c0_3, %c0_4] : memref<32x32xbf16, #tpu.memory_space<vmem>>, vector<32x32xbf16>
    %c0_5 = arith.constant 0 : index
    %c0_6 = arith.constant 0 : index
    %3 = vector.load %arg7[%c0_5, %c0_6] : memref<32x32xbf16, #tpu.memory_space<vmem>>, vector<32x32xbf16>
    %c0_7 = arith.constant 0 : index
    %c0_8 = arith.constant 0 : index
    %4 = vector.load %arg4[%c0_7, %c0_8] : memref<16x32xbf16, #tpu.memory_space<vmem>>, vector<16x32xbf16>
    %5 = arith.extf %4 : vector<16x32xbf16> to vector<16x32xf32>
    %c0_9 = arith.constant 0 : index
    %c0_10 = arith.constant 0 : index
    %6 = vector.load %arg5[%c0_9, %c0_10] : memref<16x32xbf16, #tpu.memory_space<vmem>>, vector<16x32xbf16>
    %7 = arith.extf %6 : vector<16x32xbf16> to vector<16x32xf32>
    %c0_11 = arith.constant 0 : index
    %c0_12 = arith.constant 0 : index
    %8 = vector.load %arg8[%c0_11, %c0_12] : memref<1x32xf32, #tpu.memory_space<vmem>>, vector<1x32xf32>
    %c0_13 = arith.constant 0 : index
    %c0_14 = arith.constant 0 : index
    %c0_15 = arith.constant 0 : index
    %9 = vector.load %arg1[%c0_13, %c0_14, %c0_15] : memref<8x16x32xbf16, #tpu.memory_space<vmem>>, vector<1x16x32xbf16>
    %10 = vector.shape_cast %9 : vector<1x16x32xbf16> to vector<16x32xbf16>
    %cst = arith.constant dense<0.000000e+00> : vector<32x32xf32>
    %11 = tpu.matmul %0, %10, %cst {dimension_numbers = #tpu.dot_dimension_numbers<[1], [0], [0], [1], [0, 0, 1, 1], [], []>} : vector<32x16xbf16>, vector<16x32xbf16>, vector<32x32xf32> -> vector<32x32xf32>
    %12 = vector.extract_strided_slice %11 {offsets = [0, 0], sizes = [16, 32], strides = [1, 1]} : vector<32x32xf32> to vector<16x32xf32>
    %13 = vector.extract_strided_slice %11 {offsets = [16, 0], sizes = [16, 32], strides = [1, 1]} : vector<32x32xf32> to vector<16x32xf32>
    %14 = arith.mulf %12, %5 : vector<16x32xf32>
    %15 = arith.mulf %13, %7 : vector<16x32xf32>
    %16 = arith.subf %14, %15 : vector<16x32xf32>
    %17 = arith.truncf %16 : vector<16x32xf32> to vector<16x32xbf16>
    %c0_16 = arith.constant 0 : index
    %c0_17 = arith.constant 0 : index
    %18 = vector.load %arg11[%c0_16, %c0_17] : memref<32x32xbf16, #tpu.memory_space<vmem>>, vector<16x32xbf16>
    tpu.vector_store %arg11[%c0_16, %c0_17], %17 {strides = array<i32>} : memref<32x32xbf16, #tpu.memory_space<vmem>>, vector<16x32xbf16>,
    %19 = arith.mulf %12, %7 : vector<16x32xf32>
    %20 = arith.mulf %13, %5 : vector<16x32xf32>
    %21 = arith.addf %19, %20 : vector<16x32xf32>
    %22 = arith.truncf %21 : vector<16x32xf32> to vector<16x32xbf16>
    %c16 = arith.constant 16 : index
    %c0_18 = arith.constant 0 : index
    %23 = vector.load %arg11[%c16, %c0_18] : memref<32x32xbf16, #tpu.memory_space<vmem>>, vector<16x32xbf16>
    tpu.vector_store %arg11[%c16, %c0_18], %22 {strides = array<i32>} : memref<32x32xbf16, #tpu.memory_space<vmem>>, vector<16x32xbf16>,
    %c0_19 = arith.constant 0 : index
    %c0_20 = arith.constant 0 : index
    %24 = vector.load %arg11[%c0_19, %c0_20] : memref<32x32xbf16, #tpu.memory_space<vmem>>, vector<32x32xbf16>
    %cst_21 = arith.constant dense<0.000000e+00> : vector<16x32xf32>
    %25 = tpu.matmul %1, %24, %cst_21 {dimension_numbers = #tpu.dot_dimension_numbers<[1], [0], [0], [1], [0, 0, 1, 1], [], []>} : vector<16x32xbf16>, vector<32x32xbf16>, vector<16x32xf32> -> vector<16x32xf32>
    %26 = arith.truncf %25 : vector<16x32xf32> to vector<16x32xbf16>
    %cst_22 = arith.constant dense<0.000000e+00> : vector<16x32xf32>
    %27 = tpu.matmul %26, %2, %cst_22 {dimension_numbers = #tpu.dot_dimension_numbers<[1], [0], [0], [1], [0, 0, 1, 1], [], []>} : vector<16x32xbf16>, vector<32x32xbf16>, vector<16x32xf32> -> vector<16x32xf32>
    %cst_23 = arith.constant dense<0.000000e+00> : vector<16x32xf32>
    %28 = tpu.matmul %10, %3, %cst_23 {dimension_numbers = #tpu.dot_dimension_numbers<[1], [0], [0], [1], [0, 0, 1, 1], [], []>} : vector<16x32xbf16>, vector<32x32xbf16>, vector<16x32xf32> -> vector<16x32xf32>
    %29 = arith.addf %27, %28 : vector<16x32xf32>
    %30 = vector.broadcast %8 : vector<1x32xf32> to vector<16x32xf32>
    %31 = arith.addf %29, %30 : vector<16x32xf32>
    %cst_24 = arith.constant 0.000000e+00 : f32
    %32 = vector.broadcast %cst_24 : f32 to vector<16x32xf32>
    %33 = arith.cmpf ogt, %31, %32 : vector<16x32xf32>
    %cst_25 = arith.constant 0.000000e+00 : f32
    %34 = vector.broadcast %cst_25 : f32 to vector<16x32xf32>
    %35 = arith.minimumf %31, %34 : vector<16x32xf32>
    %36 = math.exp %35 : vector<16x32xf32>
    %cst_26 = arith.constant 1.000000e+00 : f32
    %37 = vector.broadcast %cst_26 : f32 to vector<16x32xf32>
    %38 = arith.subf %36, %37 : vector<16x32xf32>
    %39 = arith.select %33, %31, %38 : vector<16x32xi1>, vector<16x32xf32>
    %40 = arith.truncf %39 : vector<16x32xf32> to vector<16x32xbf16>
    %c0_27 = arith.constant 0 : index
    %c0_28 = arith.constant 0 : index
    %c0_29 = arith.constant 0 : index
    %41 = vector.load %arg9[%c0_27, %c0_28, %c0_29] : memref<8x16x32xbf16, #tpu.memory_space<vmem>>, vector<1x16x32xbf16>
    %42 = vector.shape_cast %41 : vector<1x16x32xbf16> to vector<16x32xbf16>
    %43 = vector.shape_cast %40 : vector<16x32xbf16> to vector<1x16x32xbf16>
    tpu.vector_store %arg9[%c0_27, %c0_28, %c0_29], %43 {strides = array<i32>} : memref<8x16x32xbf16, #tpu.memory_space<vmem>>, vector<1x16x32xbf16>,
    %cst_30 = arith.constant 0.000000e+00 : f32
    %44 = vector.broadcast %cst_30 : f32 to vector<16x32xf32>
    %45 = arith.cmpf ogt, %25, %44 : vector<16x32xf32>
    %cst_31 = arith.constant 0.000000e+00 : f32
    %46 = vector.broadcast %cst_31 : f32 to vector<16x32xf32>
    %47 = arith.minimumf %25, %46 : vector<16x32xf32>
    %48 = math.exp %47 : vector<16x32xf32>
    %cst_32 = arith.constant 1.000000e+00 : f32
    %49 = vector.broadcast %cst_32 : f32 to vector<16x32xf32>
    %50 = arith.subf %48, %49 : vector<16x32xf32>
    %51 = arith.select %45, %25, %50 : vector<16x32xi1>, vector<16x32xf32>
    %52 = arith.truncf %51 : vector<16x32xf32> to vector<16x32xbf16>
    %c0_33 = arith.constant 0 : index
    %c0_34 = arith.constant 0 : index
    %c0_35 = arith.constant 0 : index
    %53 = vector.load %arg10[%c0_33, %c0_34, %c0_35] : memref<8x16x32xbf16, #tpu.memory_space<vmem>>, vector<1x16x32xbf16>
    %54 = vector.shape_cast %53 : vector<1x16x32xbf16> to vector<16x32xbf16>
    %55 = vector.shape_cast %52 : vector<16x32xbf16> to vector<1x16x32xbf16>
    tpu.vector_store %arg10[%c0_33, %c0_34, %c0_35], %55 {strides = array<i32>} : memref<8x16x32xbf16, #tpu.memory_space<vmem>>, vector<1x16x32xbf16>,
    %c1 = arith.constant 1 : index
    %c0_36 = arith.constant 0 : index
    %c0_37 = arith.constant 0 : index
    %56 = vector.load %arg1[%c1, %c0_36, %c0_37] : memref<8x16x32xbf16, #tpu.memory_space<vmem>>, vector<1x16x32xbf16>
    %57 = vector.shape_cast %56 : vector<1x16x32xbf16> to vector<16x32xbf16>
    %cst_38 = arith.constant dense<0.000000e+00> : vector<32x32xf32>
    %58 = tpu.matmul %0, %57, %cst_38 {dimension_numbers = #tpu.dot_dimension_numbers<[1], [0], [0], [1], [0, 0, 1, 1], [], []>} : vector<32x16xbf16>, vector<16x32xbf16>, vector<32x32xf32> -> vector<32x32xf32>
    %59 = vector.extract_strided_slice %58 {offsets = [0, 0], sizes = [16, 32], strides = [1, 1]} : vector<32x32xf32> to vector<16x32xf32>
    %60 = vector.extract_strided_slice %58 {offsets = [16, 0], sizes = [16, 32], strides = [1, 1]} : vector<32x32xf32> to vector<16x32xf32>
    %61 = arith.mulf %59, %5 : vector<16x32xf32>
    %62 = arith.mulf %60, %7 : vector<16x32xf32>
    %63 = arith.subf %61, %62 : vector<16x32xf32>
    %64 = arith.truncf %63 : vector<16x32xf32> to vector<16x32xbf16>
    %c0_39 = arith.constant 0 : index
    %c0_40 = arith.constant 0 : index
    %65 = vector.load %arg11[%c0_39, %c0_40] : memref<32x32xbf16, #tpu.memory_space<vmem>>, vector<16x32xbf16>
    tpu.vector_store %arg11[%c0_39, %c0_40], %64 {strides = array<i32>} : memref<32x32xbf16, #tpu.memory_space<vmem>>, vector<16x32xbf16>,
    %66 = arith.mulf %59, %7 : vector<16x32xf32>
    %67 = arith.mulf %60, %5 : vector<16x32xf32>
    %68 = arith.addf %66, %67 : vector<16x32xf32>
    %69 = arith.truncf %68 : vector<16x32xf32> to vector<16x32xbf16>
    %c16_41 = arith.constant 16 : index
    %c0_42 = arith.constant 0 : index
    %70 = vector.load %arg11[%c16_41, %c0_42] : memref<32x32xbf16, #tpu.memory_space<vmem>>, vector<16x32xbf16>
    tpu.vector_store %arg11[%c16_41, %c0_42], %69 {strides = array<i32>} : memref<32x32xbf16, #tpu.memory_space<vmem>>, vector<16x32xbf16>,
    %c0_43 = arith.constant 0 : index
    %c0_44 = arith.constant 0 : index
    %71 = vector.load %arg11[%c0_43, %c0_44] : memref<32x32xbf16, #tpu.memory_space<vmem>>, vector<32x32xbf16>
    %cst_45 = arith.constant dense<0.000000e+00> : vector<16x32xf32>
    %72 = tpu.matmul %1, %71, %cst_45 {dimension_numbers = #tpu.dot_dimension_numbers<[1], [0], [0], [1], [0, 0, 1, 1], [], []>} : vector<16x32xbf16>, vector<32x32xbf16>, vector<16x32xf32> -> vector<16x32xf32>
    %73 = arith.truncf %72 : vector<16x32xf32> to vector<16x32xbf16>
    %cst_46 = arith.constant dense<0.000000e+00> : vector<16x32xf32>
    %74 = tpu.matmul %73, %2, %cst_46 {dimension_numbers = #tpu.dot_dimension_numbers<[1], [0], [0], [1], [0, 0, 1, 1], [], []>} : vector<16x32xbf16>, vector<32x32xbf16>, vector<16x32xf32> -> vector<16x32xf32>
    %cst_47 = arith.constant dense<0.000000e+00> : vector<16x32xf32>
    %75 = tpu.matmul %57, %3, %cst_47 {dimension_numbers = #tpu.dot_dimension_numbers<[1], [0], [0], [1], [0, 0, 1, 1], [], []>} : vector<16x32xbf16>, vector<32x32xbf16>, vector<16x32xf32> -> vector<16x32xf32>
    %76 = arith.addf %74, %75 : vector<16x32xf32>
    %77 = vector.broadcast %8 : vector<1x32xf32> to vector<16x32xf32>
    %78 = arith.addf %76, %77 : vector<16x32xf32>
    %cst_48 = arith.constant 0.000000e+00 : f32
    %79 = vector.broadcast %cst_48 : f32 to vector<16x32xf32>
    %80 = arith.cmpf ogt, %78, %79 : vector<16x32xf32>
    %cst_49 = arith.constant 0.000000e+00 : f32
    %81 = vector.broadcast %cst_49 : f32 to vector<16x32xf32>
    %82 = arith.minimumf %78, %81 : vector<16x32xf32>
    %83 = math.exp %82 : vector<16x32xf32>
    %cst_50 = arith.constant 1.000000e+00 : f32
    %84 = vector.broadcast %cst_50 : f32 to vector<16x32xf32>
    %85 = arith.subf %83, %84 : vector<16x32xf32>
    %86 = arith.select %80, %78, %85 : vector<16x32xi1>, vector<16x32xf32>
    %87 = arith.truncf %86 : vector<16x32xf32> to vector<16x32xbf16>
    %c1_51 = arith.constant 1 : index
    %c0_52 = arith.constant 0 : index
    %c0_53 = arith.constant 0 : index
    %88 = vector.load %arg9[%c1_51, %c0_52, %c0_53] : memref<8x16x32xbf16, #tpu.memory_space<vmem>>, vector<1x16x32xbf16>
    %89 = vector.shape_cast %88 : vector<1x16x32xbf16> to vector<16x32xbf16>
    %90 = vector.shape_cast %87 : vector<16x32xbf16> to vector<1x16x32xbf16>
    tpu.vector_store %arg9[%c1_51, %c0_52, %c0_53], %90 {strides = array<i32>} : memref<8x16x32xbf16, #tpu.memory_space<vmem>>, vector<1x16x32xbf16>,
    %cst_54 = arith.constant 0.000000e+00 : f32
    %91 = vector.broadcast %cst_54 : f32 to vector<16x32xf32>
    %92 = arith.cmpf ogt, %72, %91 : vector<16x32xf32>
    %cst_55 = arith.constant 0.000000e+00 : f32
    %93 = vector.broadcast %cst_55 : f32 to vector<16x32xf32>
    %94 = arith.minimumf %72, %93 : vector<16x32xf32>
    %95 = math.exp %94 : vector<16x32xf32>
    %cst_56 = arith.constant 1.000000e+00 : f32
    %96 = vector.broadcast %cst_56 : f32 to vector<16x32xf32>
    %97 = arith.subf %95, %96 : vector<16x32xf32>
    %98 = arith.select %92, %72, %97 : vector<16x32xi1>, vector<16x32xf32>
    %99 = arith.truncf %98 : vector<16x32xf32> to vector<16x32xbf16>
    %c1_57 = arith.constant 1 : index
    %c0_58 = arith.constant 0 : index
    %c0_59 = arith.constant 0 : index
    %100 = vector.load %arg10[%c1_57, %c0_58, %c0_59] : memref<8x16x32xbf16, #tpu.memory_space<vmem>>, vector<1x16x32xbf16>
    %101 = vector.shape_cast %100 : vector<1x16x32xbf16> to vector<16x32xbf16>
    %102 = vector.shape_cast %99 : vector<16x32xbf16> to vector<1x16x32xbf16>
    tpu.vector_store %arg10[%c1_57, %c0_58, %c0_59], %102 {strides = array<i32>} : memref<8x16x32xbf16, #tpu.memory_space<vmem>>, vector<1x16x32xbf16>,
    %c2 = arith.constant 2 : index
    %c0_60 = arith.constant 0 : index
    %c0_61 = arith.constant 0 : index
    %103 = vector.load %arg1[%c2, %c0_60, %c0_61] : memref<8x16x32xbf16, #tpu.memory_space<vmem>>, vector<1x16x32xbf16>
    %104 = vector.shape_cast %103 : vector<1x16x32xbf16> to vector<16x32xbf16>
    %cst_62 = arith.constant dense<0.000000e+00> : vector<32x32xf32>
    %105 = tpu.matmul %0, %104, %cst_62 {dimension_numbers = #tpu.dot_dimension_numbers<[1], [0], [0], [1], [0, 0, 1, 1], [], []>} : vector<32x16xbf16>, vector<16x32xbf16>, vector<32x32xf32> -> vector<32x32xf32>
    %106 = vector.extract_strided_slice %105 {offsets = [0, 0], sizes = [16, 32], strides = [1, 1]} : vector<32x32xf32> to vector<16x32xf32>
    %107 = vector.extract_strided_slice %105 {offsets = [16, 0], sizes = [16, 32], strides = [1, 1]} : vector<32x32xf32> to vector<16x32xf32>
    %108 = arith.mulf %106, %5 : vector<16x32xf32>
    %109 = arith.mulf %107, %7 : vector<16x32xf32>
    %110 = arith.subf %108, %109 : vector<16x32xf32>
    %111 = arith.truncf %110 : vector<16x32xf32> to vector<16x32xbf16>
    %c0_63 = arith.constant 0 : index
    %c0_64 = arith.constant 0 : index
    %112 = vector.load %arg11[%c0_63, %c0_64] : memref<32x32xbf16, #tpu.memory_space<vmem>>, vector<16x32xbf16>
    tpu.vector_store %arg11[%c0_63, %c0_64], %111 {strides = array<i32>} : memref<32x32xbf16, #tpu.memory_space<vmem>>, vector<16x32xbf16>,
    %113 = arith.mulf %106, %7 : vector<16x32xf32>
    %114 = arith.mulf %107, %5 : vector<16x32xf32>
    %115 = arith.addf %113, %114 : vector<16x32xf32>
    %116 = arith.truncf %115 : vector<16x32xf32> to vector<16x32xbf16>
    %c16_65 = arith.constant 16 : index
    %c0_66 = arith.constant 0 : index
    %117 = vector.load %arg11[%c16_65, %c0_66] : memref<32x32xbf16, #tpu.memory_space<vmem>>, vector<16x32xbf16>
    tpu.vector_store %arg11[%c16_65, %c0_66], %116 {strides = array<i32>} : memref<32x32xbf16, #tpu.memory_space<vmem>>, vector<16x32xbf16>,
    %c0_67 = arith.constant 0 : index
    %c0_68 = arith.constant 0 : index
    %118 = vector.load %arg11[%c0_67, %c0_68] : memref<32x32xbf16, #tpu.memory_space<vmem>>, vector<32x32xbf16>
    %cst_69 = arith.constant dense<0.000000e+00> : vector<16x32xf32>
    %119 = tpu.matmul %1, %118, %cst_69 {dimension_numbers = #tpu.dot_dimension_numbers<[1], [0], [0], [1], [0, 0, 1, 1], [], []>} : vector<16x32xbf16>, vector<32x32xbf16>, vector<16x32xf32> -> vector<16x32xf32>
    %120 = arith.truncf %119 : vector<16x32xf32> to vector<16x32xbf16>
    %cst_70 = arith.constant dense<0.000000e+00> : vector<16x32xf32>
    %121 = tpu.matmul %120, %2, %cst_70 {dimension_numbers = #tpu.dot_dimension_numbers<[1], [0], [0], [1], [0, 0, 1, 1], [], []>} : vector<16x32xbf16>, vector<32x32xbf16>, vector<16x32xf32> -> vector<16x32xf32>
    %cst_71 = arith.constant dense<0.000000e+00> : vector<16x32xf32>
    %122 = tpu.matmul %104, %3, %cst_71 {dimension_numbers = #tpu.dot_dimension_numbers<[1], [0], [0], [1], [0, 0, 1, 1], [], []>} : vector<16x32xbf16>, vector<32x32xbf16>, vector<16x32xf32> -> vector<16x32xf32>
    %123 = arith.addf %121, %122 : vector<16x32xf32>
    %124 = vector.broadcast %8 : vector<1x32xf32> to vector<16x32xf32>
    %125 = arith.addf %123, %124 : vector<16x32xf32>
    %cst_72 = arith.constant 0.000000e+00 : f32
    %126 = vector.broadcast %cst_72 : f32 to vector<16x32xf32>
    %127 = arith.cmpf ogt, %125, %126 : vector<16x32xf32>
    %cst_73 = arith.constant 0.000000e+00 : f32
    %128 = vector.broadcast %cst_73 : f32 to vector<16x32xf32>
    %129 = arith.minimumf %125, %128 : vector<16x32xf32>
    %130 = math.exp %129 : vector<16x32xf32>
    %cst_74 = arith.constant 1.000000e+00 : f32
    %131 = vector.broadcast %cst_74 : f32 to vector<16x32xf32>
    %132 = arith.subf %130, %131 : vector<16x32xf32>
    %133 = arith.select %127, %125, %132 : vector<16x32xi1>, vector<16x32xf32>
    %134 = arith.truncf %133 : vector<16x32xf32> to vector<16x32xbf16>
    %c2_75 = arith.constant 2 : index
    %c0_76 = arith.constant 0 : index
    %c0_77 = arith.constant 0 : index
    %135 = vector.load %arg9[%c2_75, %c0_76, %c0_77] : memref<8x16x32xbf16, #tpu.memory_space<vmem>>, vector<1x16x32xbf16>
    %136 = vector.shape_cast %135 : vector<1x16x32xbf16> to vector<16x32xbf16>
    %137 = vector.shape_cast %134 : vector<16x32xbf16> to vector<1x16x32xbf16>
    tpu.vector_store %arg9[%c2_75, %c0_76, %c0_77], %137 {strides = array<i32>} : memref<8x16x32xbf16, #tpu.memory_space<vmem>>, vector<1x16x32xbf16>,
    %cst_78 = arith.constant 0.000000e+00 : f32
    %138 = vector.broadcast %cst_78 : f32 to vector<16x32xf32>
    %139 = arith.cmpf ogt, %119, %138 : vector<16x32xf32>
    %cst_79 = arith.constant 0.000000e+00 : f32
    %140 = vector.broadcast %cst_79 : f32 to vector<16x32xf32>
    %141 = arith.minimumf %119, %140 : vector<16x32xf32>
    %142 = math.exp %141 : vector<16x32xf32>
    %cst_80 = arith.constant 1.000000e+00 : f32
    %143 = vector.broadcast %cst_80 : f32 to vector<16x32xf32>
    %144 = arith.subf %142, %143 : vector<16x32xf32>
    %145 = arith.select %139, %119, %144 : vector<16x32xi1>, vector<16x32xf32>
    %146 = arith.truncf %145 : vector<16x32xf32> to vector<16x32xbf16>
    %c2_81 = arith.constant 2 : index
    %c0_82 = arith.constant 0 : index
    %c0_83 = arith.constant 0 : index
    %147 = vector.load %arg10[%c2_81, %c0_82, %c0_83] : memref<8x16x32xbf16, #tpu.memory_space<vmem>>, vector<1x16x32xbf16>
    %148 = vector.shape_cast %147 : vector<1x16x32xbf16> to vector<16x32xbf16>
    %149 = vector.shape_cast %146 : vector<16x32xbf16> to vector<1x16x32xbf16>
    tpu.vector_store %arg10[%c2_81, %c0_82, %c0_83], %149 {strides = array<i32>} : memref<8x16x32xbf16, #tpu.memory_space<vmem>>, vector<1x16x32xbf16>,
    %c3 = arith.constant 3 : index
    %c0_84 = arith.constant 0 : index
    %c0_85 = arith.constant 0 : index
    %150 = vector.load %arg1[%c3, %c0_84, %c0_85] : memref<8x16x32xbf16, #tpu.memory_space<vmem>>, vector<1x16x32xbf16>
    %151 = vector.shape_cast %150 : vector<1x16x32xbf16> to vector<16x32xbf16>
    %cst_86 = arith.constant dense<0.000000e+00> : vector<32x32xf32>
    %152 = tpu.matmul %0, %151, %cst_86 {dimension_numbers = #tpu.dot_dimension_numbers<[1], [0], [0], [1], [0, 0, 1, 1], [], []>} : vector<32x16xbf16>, vector<16x32xbf16>, vector<32x32xf32> -> vector<32x32xf32>
    %153 = vector.extract_strided_slice %152 {offsets = [0, 0], sizes = [16, 32], strides = [1, 1]} : vector<32x32xf32> to vector<16x32xf32>
    %154 = vector.extract_strided_slice %152 {offsets = [16, 0], sizes = [16, 32], strides = [1, 1]} : vector<32x32xf32> to vector<16x32xf32>
    %155 = arith.mulf %153, %5 : vector<16x32xf32>
    %156 = arith.mulf %154, %7 : vector<16x32xf32>
    %157 = arith.subf %155, %156 : vector<16x32xf32>
    %158 = arith.truncf %157 : vector<16x32xf32> to vector<16x32xbf16>
    %c0_87 = arith.constant 0 : index
    %c0_88 = arith.constant 0 : index
    %159 = vector.load %arg11[%c0_87, %c0_88] : memref<32x32xbf16, #tpu.memory_space<vmem>>, vector<16x32xbf16>
    tpu.vector_store %arg11[%c0_87, %c0_88], %158 {strides = array<i32>} : memref<32x32xbf16, #tpu.memory_space<vmem>>, vector<16x32xbf16>,
    %160 = arith.mulf %153, %7 : vector<16x32xf32>
    %161 = arith.mulf %154, %5 : vector<16x32xf32>
    %162 = arith.addf %160, %161 : vector<16x32xf32>
    %163 = arith.truncf %162 : vector<16x32xf32> to vector<16x32xbf16>
    %c16_89 = arith.constant 16 : index
    %c0_90 = arith.constant 0 : index
    %164 = vector.load %arg11[%c16_89, %c0_90] : memref<32x32xbf16, #tpu.memory_space<vmem>>, vector<16x32xbf16>
    tpu.vector_store %arg11[%c16_89, %c0_90], %163 {strides = array<i32>} : memref<32x32xbf16, #tpu.memory_space<vmem>>, vector<16x32xbf16>,
    %c0_91 = arith.constant 0 : index
    %c0_92 = arith.constant 0 : index
    %165 = vector.load %arg11[%c0_91, %c0_92] : memref<32x32xbf16, #tpu.memory_space<vmem>>, vector<32x32xbf16>
    %cst_93 = arith.constant dense<0.000000e+00> : vector<16x32xf32>
    %166 = tpu.matmul %1, %165, %cst_93 {dimension_numbers = #tpu.dot_dimension_numbers<[1], [0], [0], [1], [0, 0, 1, 1], [], []>} : vector<16x32xbf16>, vector<32x32xbf16>, vector<16x32xf32> -> vector<16x32xf32>
    %167 = arith.truncf %166 : vector<16x32xf32> to vector<16x32xbf16>
    %cst_94 = arith.constant dense<0.000000e+00> : vector<16x32xf32>
    %168 = tpu.matmul %167, %2, %cst_94 {dimension_numbers = #tpu.dot_dimension_numbers<[1], [0], [0], [1], [0, 0, 1, 1], [], []>} : vector<16x32xbf16>, vector<32x32xbf16>, vector<16x32xf32> -> vector<16x32xf32>
    %cst_95 = arith.constant dense<0.000000e+00> : vector<16x32xf32>
    %169 = tpu.matmul %151, %3, %cst_95 {dimension_numbers = #tpu.dot_dimension_numbers<[1], [0], [0], [1], [0, 0, 1, 1], [], []>} : vector<16x32xbf16>, vector<32x32xbf16>, vector<16x32xf32> -> vector<16x32xf32>
    %170 = arith.addf %168, %169 : vector<16x32xf32>
    %171 = vector.broadcast %8 : vector<1x32xf32> to vector<16x32xf32>
    %172 = arith.addf %170, %171 : vector<16x32xf32>
    %cst_96 = arith.constant 0.000000e+00 : f32
    %173 = vector.broadcast %cst_96 : f32 to vector<16x32xf32>
    %174 = arith.cmpf ogt, %172, %173 : vector<16x32xf32>
    %cst_97 = arith.constant 0.000000e+00 : f32
    %175 = vector.broadcast %cst_97 : f32 to vector<16x32xf32>
    %176 = arith.minimumf %172, %175 : vector<16x32xf32>
    %177 = math.exp %176 : vector<16x32xf32>
    %cst_98 = arith.constant 1.000000e+00 : f32
    %178 = vector.broadcast %cst_98 : f32 to vector<16x32xf32>
    %179 = arith.subf %177, %178 : vector<16x32xf32>
    %180 = arith.select %174, %172, %179 : vector<16x32xi1>, vector<16x32xf32>
    %181 = arith.truncf %180 : vector<16x32xf32> to vector<16x32xbf16>
    %c3_99 = arith.constant 3 : index
    %c0_100 = arith.constant 0 : index
    %c0_101 = arith.constant 0 : index
    %182 = vector.load %arg9[%c3_99, %c0_100, %c0_101] : memref<8x16x32xbf16, #tpu.memory_space<vmem>>, vector<1x16x32xbf16>
    %183 = vector.shape_cast %182 : vector<1x16x32xbf16> to vector<16x32xbf16>
    %184 = vector.shape_cast %181 : vector<16x32xbf16> to vector<1x16x32xbf16>
    tpu.vector_store %arg9[%c3_99, %c0_100, %c0_101], %184 {strides = array<i32>} : memref<8x16x32xbf16, #tpu.memory_space<vmem>>, vector<1x16x32xbf16>,
    %cst_102 = arith.constant 0.000000e+00 : f32
    %185 = vector.broadcast %cst_102 : f32 to vector<16x32xf32>
    %186 = arith.cmpf ogt, %166, %185 : vector<16x32xf32>
    %cst_103 = arith.constant 0.000000e+00 : f32
    %187 = vector.broadcast %cst_103 : f32 to vector<16x32xf32>
    %188 = arith.minimumf %166, %187 : vector<16x32xf32>
    %189 = math.exp %188 : vector<16x32xf32>
    %cst_104 = arith.constant 1.000000e+00 : f32
    %190 = vector.broadcast %cst_104 : f32 to vector<16x32xf32>
    %191 = arith.subf %189, %190 : vector<16x32xf32>
    %192 = arith.select %186, %166, %191 : vector<16x32xi1>, vector<16x32xf32>
    %193 = arith.truncf %192 : vector<16x32xf32> to vector<16x32xbf16>
    %c3_105 = arith.constant 3 : index
    %c0_106 = arith.constant 0 : index
    %c0_107 = arith.constant 0 : index
    %194 = vector.load %arg10[%c3_105, %c0_106, %c0_107] : memref<8x16x32xbf16, #tpu.memory_space<vmem>>, vector<1x16x32xbf16>
    %195 = vector.shape_cast %194 : vector<1x16x32xbf16> to vector<16x32xbf16>
    %196 = vector.shape_cast %193 : vector<16x32xbf16> to vector<1x16x32xbf16>
    tpu.vector_store %arg10[%c3_105, %c0_106, %c0_107], %196 {strides = array<i32>} : memref<8x16x32xbf16, #tpu.memory_space<vmem>>, vector<1x16x32xbf16>,
    %c4 = arith.constant 4 : index
    %c0_108 = arith.constant 0 : index
    %c0_109 = arith.constant 0 : index
    %197 = vector.load %arg1[%c4, %c0_108, %c0_109] : memref<8x16x32xbf16, #tpu.memory_space<vmem>>, vector<1x16x32xbf16>
    %198 = vector.shape_cast %197 : vector<1x16x32xbf16> to vector<16x32xbf16>
    %cst_110 = arith.constant dense<0.000000e+00> : vector<32x32xf32>
    %199 = tpu.matmul %0, %198, %cst_110 {dimension_numbers = #tpu.dot_dimension_numbers<[1], [0], [0], [1], [0, 0, 1, 1], [], []>} : vector<32x16xbf16>, vector<16x32xbf16>, vector<32x32xf32> -> vector<32x32xf32>
    %200 = vector.extract_strided_slice %199 {offsets = [0, 0], sizes = [16, 32], strides = [1, 1]} : vector<32x32xf32> to vector<16x32xf32>
    %201 = vector.extract_strided_slice %199 {offsets = [16, 0], sizes = [16, 32], strides = [1, 1]} : vector<32x32xf32> to vector<16x32xf32>
    %202 = arith.mulf %200, %5 : vector<16x32xf32>
    %203 = arith.mulf %201, %7 : vector<16x32xf32>
    %204 = arith.subf %202, %203 : vector<16x32xf32>
    %205 = arith.truncf %204 : vector<16x32xf32> to vector<16x32xbf16>
    %c0_111 = arith.constant 0 : index
    %c0_112 = arith.constant 0 : index
    %206 = vector.load %arg11[%c0_111, %c0_112] : memref<32x32xbf16, #tpu.memory_space<vmem>>, vector<16x32xbf16>
    tpu.vector_store %arg11[%c0_111, %c0_112], %205 {strides = array<i32>} : memref<32x32xbf16, #tpu.memory_space<vmem>>, vector<16x32xbf16>,
    %207 = arith.mulf %200, %7 : vector<16x32xf32>
    %208 = arith.mulf %201, %5 : vector<16x32xf32>
    %209 = arith.addf %207, %208 : vector<16x32xf32>
    %210 = arith.truncf %209 : vector<16x32xf32> to vector<16x32xbf16>
    %c16_113 = arith.constant 16 : index
    %c0_114 = arith.constant 0 : index
    %211 = vector.load %arg11[%c16_113, %c0_114] : memref<32x32xbf16, #tpu.memory_space<vmem>>, vector<16x32xbf16>
    tpu.vector_store %arg11[%c16_113, %c0_114], %210 {strides = array<i32>} : memref<32x32xbf16, #tpu.memory_space<vmem>>, vector<16x32xbf16>,
    %c0_115 = arith.constant 0 : index
    %c0_116 = arith.constant 0 : index
    %212 = vector.load %arg11[%c0_115, %c0_116] : memref<32x32xbf16, #tpu.memory_space<vmem>>, vector<32x32xbf16>
    %cst_117 = arith.constant dense<0.000000e+00> : vector<16x32xf32>
    %213 = tpu.matmul %1, %212, %cst_117 {dimension_numbers = #tpu.dot_dimension_numbers<[1], [0], [0], [1], [0, 0, 1, 1], [], []>} : vector<16x32xbf16>, vector<32x32xbf16>, vector<16x32xf32> -> vector<16x32xf32>
    %214 = arith.truncf %213 : vector<16x32xf32> to vector<16x32xbf16>
    %cst_118 = arith.constant dense<0.000000e+00> : vector<16x32xf32>
    %215 = tpu.matmul %214, %2, %cst_118 {dimension_numbers = #tpu.dot_dimension_numbers<[1], [0], [0], [1], [0, 0, 1, 1], [], []>} : vector<16x32xbf16>, vector<32x32xbf16>, vector<16x32xf32> -> vector<16x32xf32>
    %cst_119 = arith.constant dense<0.000000e+00> : vector<16x32xf32>
    %216 = tpu.matmul %198, %3, %cst_119 {dimension_numbers = #tpu.dot_dimension_numbers<[1], [0], [0], [1], [0, 0, 1, 1], [], []>} : vector<16x32xbf16>, vector<32x32xbf16>, vector<16x32xf32> -> vector<16x32xf32>
    %217 = arith.addf %215, %216 : vector<16x32xf32>
    %218 = vector.broadcast %8 : vector<1x32xf32> to vector<16x32xf32>
    %219 = arith.addf %217, %218 : vector<16x32xf32>
    %cst_120 = arith.constant 0.000000e+00 : f32
    %220 = vector.broadcast %cst_120 : f32 to vector<16x32xf32>
    %221 = arith.cmpf ogt, %219, %220 : vector<16x32xf32>
    %cst_121 = arith.constant 0.000000e+00 : f32
    %222 = vector.broadcast %cst_121 : f32 to vector<16x32xf32>
    %223 = arith.minimumf %219, %222 : vector<16x32xf32>
    %224 = math.exp %223 : vector<16x32xf32>
    %cst_122 = arith.constant 1.000000e+00 : f32
    %225 = vector.broadcast %cst_122 : f32 to vector<16x32xf32>
    %226 = arith.subf %224, %225 : vector<16x32xf32>
    %227 = arith.select %221, %219, %226 : vector<16x32xi1>, vector<16x32xf32>
    %228 = arith.truncf %227 : vector<16x32xf32> to vector<16x32xbf16>
    %c4_123 = arith.constant 4 : index
    %c0_124 = arith.constant 0 : index
    %c0_125 = arith.constant 0 : index
    %229 = vector.load %arg9[%c4_123, %c0_124, %c0_125] : memref<8x16x32xbf16, #tpu.memory_space<vmem>>, vector<1x16x32xbf16>
    %230 = vector.shape_cast %229 : vector<1x16x32xbf16> to vector<16x32xbf16>
    %231 = vector.shape_cast %228 : vector<16x32xbf16> to vector<1x16x32xbf16>
    tpu.vector_store %arg9[%c4_123, %c0_124, %c0_125], %231 {strides = array<i32>} : memref<8x16x32xbf16, #tpu.memory_space<vmem>>, vector<1x16x32xbf16>,
    %cst_126 = arith.constant 0.000000e+00 : f32
    %232 = vector.broadcast %cst_126 : f32 to vector<16x32xf32>
    %233 = arith.cmpf ogt, %213, %232 : vector<16x32xf32>
    %cst_127 = arith.constant 0.000000e+00 : f32
    %234 = vector.broadcast %cst_127 : f32 to vector<16x32xf32>
    %235 = arith.minimumf %213, %234 : vector<16x32xf32>
    %236 = math.exp %235 : vector<16x32xf32>
    %cst_128 = arith.constant 1.000000e+00 : f32
    %237 = vector.broadcast %cst_128 : f32 to vector<16x32xf32>
    %238 = arith.subf %236, %237 : vector<16x32xf32>
    %239 = arith.select %233, %213, %238 : vector<16x32xi1>, vector<16x32xf32>
    %240 = arith.truncf %239 : vector<16x32xf32> to vector<16x32xbf16>
    %c4_129 = arith.constant 4 : index
    %c0_130 = arith.constant 0 : index
    %c0_131 = arith.constant 0 : index
    %241 = vector.load %arg10[%c4_129, %c0_130, %c0_131] : memref<8x16x32xbf16, #tpu.memory_space<vmem>>, vector<1x16x32xbf16>
    %242 = vector.shape_cast %241 : vector<1x16x32xbf16> to vector<16x32xbf16>
    %243 = vector.shape_cast %240 : vector<16x32xbf16> to vector<1x16x32xbf16>
    tpu.vector_store %arg10[%c4_129, %c0_130, %c0_131], %243 {strides = array<i32>} : memref<8x16x32xbf16, #tpu.memory_space<vmem>>, vector<1x16x32xbf16>,
    %c5 = arith.constant 5 : index
    %c0_132 = arith.constant 0 : index
    %c0_133 = arith.constant 0 : index
    %244 = vector.load %arg1[%c5, %c0_132, %c0_133] : memref<8x16x32xbf16, #tpu.memory_space<vmem>>, vector<1x16x32xbf16>
    %245 = vector.shape_cast %244 : vector<1x16x32xbf16> to vector<16x32xbf16>
    %cst_134 = arith.constant dense<0.000000e+00> : vector<32x32xf32>
    %246 = tpu.matmul %0, %245, %cst_134 {dimension_numbers = #tpu.dot_dimension_numbers<[1], [0], [0], [1], [0, 0, 1, 1], [], []>} : vector<32x16xbf16>, vector<16x32xbf16>, vector<32x32xf32> -> vector<32x32xf32>
    %247 = vector.extract_strided_slice %246 {offsets = [0, 0], sizes = [16, 32], strides = [1, 1]} : vector<32x32xf32> to vector<16x32xf32>
    %248 = vector.extract_strided_slice %246 {offsets = [16, 0], sizes = [16, 32], strides = [1, 1]} : vector<32x32xf32> to vector<16x32xf32>
    %249 = arith.mulf %247, %5 : vector<16x32xf32>
    %250 = arith.mulf %248, %7 : vector<16x32xf32>
    %251 = arith.subf %249, %250 : vector<16x32xf32>
    %252 = arith.truncf %251 : vector<16x32xf32> to vector<16x32xbf16>
    %c0_135 = arith.constant 0 : index
    %c0_136 = arith.constant 0 : index
    %253 = vector.load %arg11[%c0_135, %c0_136] : memref<32x32xbf16, #tpu.memory_space<vmem>>, vector<16x32xbf16>
    tpu.vector_store %arg11[%c0_135, %c0_136], %252 {strides = array<i32>} : memref<32x32xbf16, #tpu.memory_space<vmem>>, vector<16x32xbf16>,
    %254 = arith.mulf %247, %7 : vector<16x32xf32>
    %255 = arith.mulf %248, %5 : vector<16x32xf32>
    %256 = arith.addf %254, %255 : vector<16x32xf32>
    %257 = arith.truncf %256 : vector<16x32xf32> to vector<16x32xbf16>
    %c16_137 = arith.constant 16 : index
    %c0_138 = arith.constant 0 : index
    %258 = vector.load %arg11[%c16_137, %c0_138] : memref<32x32xbf16, #tpu.memory_space<vmem>>, vector<16x32xbf16>
    tpu.vector_store %arg11[%c16_137, %c0_138], %257 {strides = array<i32>} : memref<32x32xbf16, #tpu.memory_space<vmem>>, vector<16x32xbf16>,
    %c0_139 = arith.constant 0 : index
    %c0_140 = arith.constant 0 : index
    %259 = vector.load %arg11[%c0_139, %c0_140] : memref<32x32xbf16, #tpu.memory_space<vmem>>, vector<32x32xbf16>
    %cst_141 = arith.constant dense<0.000000e+00> : vector<16x32xf32>
    %260 = tpu.matmul %1, %259, %cst_141 {dimension_numbers = #tpu.dot_dimension_numbers<[1], [0], [0], [1], [0, 0, 1, 1], [], []>} : vector<16x32xbf16>, vector<32x32xbf16>, vector<16x32xf32> -> vector<16x32xf32>
    %261 = arith.truncf %260 : vector<16x32xf32> to vector<16x32xbf16>
    %cst_142 = arith.constant dense<0.000000e+00> : vector<16x32xf32>
    %262 = tpu.matmul %261, %2, %cst_142 {dimension_numbers = #tpu.dot_dimension_numbers<[1], [0], [0], [1], [0, 0, 1, 1], [], []>} : vector<16x32xbf16>, vector<32x32xbf16>, vector<16x32xf32> -> vector<16x32xf32>
    %cst_143 = arith.constant dense<0.000000e+00> : vector<16x32xf32>
    %263 = tpu.matmul %245, %3, %cst_143 {dimension_numbers = #tpu.dot_dimension_numbers<[1], [0], [0], [1], [0, 0, 1, 1], [], []>} : vector<16x32xbf16>, vector<32x32xbf16>, vector<16x32xf32> -> vector<16x32xf32>
    %264 = arith.addf %262, %263 : vector<16x32xf32>
    %265 = vector.broadcast %8 : vector<1x32xf32> to vector<16x32xf32>
    %266 = arith.addf %264, %265 : vector<16x32xf32>
    %cst_144 = arith.constant 0.000000e+00 : f32
    %267 = vector.broadcast %cst_144 : f32 to vector<16x32xf32>
    %268 = arith.cmpf ogt, %266, %267 : vector<16x32xf32>
    %cst_145 = arith.constant 0.000000e+00 : f32
    %269 = vector.broadcast %cst_145 : f32 to vector<16x32xf32>
    %270 = arith.minimumf %266, %269 : vector<16x32xf32>
    %271 = math.exp %270 : vector<16x32xf32>
    %cst_146 = arith.constant 1.000000e+00 : f32
    %272 = vector.broadcast %cst_146 : f32 to vector<16x32xf32>
    %273 = arith.subf %271, %272 : vector<16x32xf32>
    %274 = arith.select %268, %266, %273 : vector<16x32xi1>, vector<16x32xf32>
    %275 = arith.truncf %274 : vector<16x32xf32> to vector<16x32xbf16>
    %c5_147 = arith.constant 5 : index
    %c0_148 = arith.constant 0 : index
    %c0_149 = arith.constant 0 : index
    %276 = vector.load %arg9[%c5_147, %c0_148, %c0_149] : memref<8x16x32xbf16, #tpu.memory_space<vmem>>, vector<1x16x32xbf16>
    %277 = vector.shape_cast %276 : vector<1x16x32xbf16> to vector<16x32xbf16>
    %278 = vector.shape_cast %275 : vector<16x32xbf16> to vector<1x16x32xbf16>
    tpu.vector_store %arg9[%c5_147, %c0_148, %c0_149], %278 {strides = array<i32>} : memref<8x16x32xbf16, #tpu.memory_space<vmem>>, vector<1x16x32xbf16>,
    %cst_150 = arith.constant 0.000000e+00 : f32
    %279 = vector.broadcast %cst_150 : f32 to vector<16x32xf32>
    %280 = arith.cmpf ogt, %260, %279 : vector<16x32xf32>
    %cst_151 = arith.constant 0.000000e+00 : f32
    %281 = vector.broadcast %cst_151 : f32 to vector<16x32xf32>
    %282 = arith.minimumf %260, %281 : vector<16x32xf32>
    %283 = math.exp %282 : vector<16x32xf32>
    %cst_152 = arith.constant 1.000000e+00 : f32
    %284 = vector.broadcast %cst_152 : f32 to vector<16x32xf32>
    %285 = arith.subf %283, %284 : vector<16x32xf32>
    %286 = arith.select %280, %260, %285 : vector<16x32xi1>, vector<16x32xf32>
    %287 = arith.truncf %286 : vector<16x32xf32> to vector<16x32xbf16>
    %c5_153 = arith.constant 5 : index
    %c0_154 = arith.constant 0 : index
    %c0_155 = arith.constant 0 : index
    %288 = vector.load %arg10[%c5_153, %c0_154, %c0_155] : memref<8x16x32xbf16, #tpu.memory_space<vmem>>, vector<1x16x32xbf16>
    %289 = vector.shape_cast %288 : vector<1x16x32xbf16> to vector<16x32xbf16>
    %290 = vector.shape_cast %287 : vector<16x32xbf16> to vector<1x16x32xbf16>
    tpu.vector_store %arg10[%c5_153, %c0_154, %c0_155], %290 {strides = array<i32>} : memref<8x16x32xbf16, #tpu.memory_space<vmem>>, vector<1x16x32xbf16>,
    %c6 = arith.constant 6 : index
    %c0_156 = arith.constant 0 : index
    %c0_157 = arith.constant 0 : index
    %291 = vector.load %arg1[%c6, %c0_156, %c0_157] : memref<8x16x32xbf16, #tpu.memory_space<vmem>>, vector<1x16x32xbf16>
    %292 = vector.shape_cast %291 : vector<1x16x32xbf16> to vector<16x32xbf16>
    %cst_158 = arith.constant dense<0.000000e+00> : vector<32x32xf32>
    %293 = tpu.matmul %0, %292, %cst_158 {dimension_numbers = #tpu.dot_dimension_numbers<[1], [0], [0], [1], [0, 0, 1, 1], [], []>} : vector<32x16xbf16>, vector<16x32xbf16>, vector<32x32xf32> -> vector<32x32xf32>
    %294 = vector.extract_strided_slice %293 {offsets = [0, 0], sizes = [16, 32], strides = [1, 1]} : vector<32x32xf32> to vector<16x32xf32>
    %295 = vector.extract_strided_slice %293 {offsets = [16, 0], sizes = [16, 32], strides = [1, 1]} : vector<32x32xf32> to vector<16x32xf32>
    %296 = arith.mulf %294, %5 : vector<16x32xf32>
    %297 = arith.mulf %295, %7 : vector<16x32xf32>
    %298 = arith.subf %296, %297 : vector<16x32xf32>
    %299 = arith.truncf %298 : vector<16x32xf32> to vector<16x32xbf16>
    %c0_159 = arith.constant 0 : index
    %c0_160 = arith.constant 0 : index
    %300 = vector.load %arg11[%c0_159, %c0_160] : memref<32x32xbf16, #tpu.memory_space<vmem>>, vector<16x32xbf16>
    tpu.vector_store %arg11[%c0_159, %c0_160], %299 {strides = array<i32>} : memref<32x32xbf16, #tpu.memory_space<vmem>>, vector<16x32xbf16>,
    %301 = arith.mulf %294, %7 : vector<16x32xf32>
    %302 = arith.mulf %295, %5 : vector<16x32xf32>
    %303 = arith.addf %301, %302 : vector<16x32xf32>
    %304 = arith.truncf %303 : vector<16x32xf32> to vector<16x32xbf16>
    %c16_161 = arith.constant 16 : index
    %c0_162 = arith.constant 0 : index
    %305 = vector.load %arg11[%c16_161, %c0_162] : memref<32x32xbf16, #tpu.memory_space<vmem>>, vector<16x32xbf16>
    tpu.vector_store %arg11[%c16_161, %c0_162], %304 {strides = array<i32>} : memref<32x32xbf16, #tpu.memory_space<vmem>>, vector<16x32xbf16>,
    %c0_163 = arith.constant 0 : index
    %c0_164 = arith.constant 0 : index
    %306 = vector.load %arg11[%c0_163, %c0_164] : memref<32x32xbf16, #tpu.memory_space<vmem>>, vector<32x32xbf16>
    %cst_165 = arith.constant dense<0.000000e+00> : vector<16x32xf32>
    %307 = tpu.matmul %1, %306, %cst_165 {dimension_numbers = #tpu.dot_dimension_numbers<[1], [0], [0], [1], [0, 0, 1, 1], [], []>} : vector<16x32xbf16>, vector<32x32xbf16>, vector<16x32xf32> -> vector<16x32xf32>
    %308 = arith.truncf %307 : vector<16x32xf32> to vector<16x32xbf16>
    %cst_166 = arith.constant dense<0.000000e+00> : vector<16x32xf32>
    %309 = tpu.matmul %308, %2, %cst_166 {dimension_numbers = #tpu.dot_dimension_numbers<[1], [0], [0], [1], [0, 0, 1, 1], [], []>} : vector<16x32xbf16>, vector<32x32xbf16>, vector<16x32xf32> -> vector<16x32xf32>
    %cst_167 = arith.constant dense<0.000000e+00> : vector<16x32xf32>
    %310 = tpu.matmul %292, %3, %cst_167 {dimension_numbers = #tpu.dot_dimension_numbers<[1], [0], [0], [1], [0, 0, 1, 1], [], []>} : vector<16x32xbf16>, vector<32x32xbf16>, vector<16x32xf32> -> vector<16x32xf32>
    %311 = arith.addf %309, %310 : vector<16x32xf32>
    %312 = vector.broadcast %8 : vector<1x32xf32> to vector<16x32xf32>
    %313 = arith.addf %311, %312 : vector<16x32xf32>
    %cst_168 = arith.constant 0.000000e+00 : f32
    %314 = vector.broadcast %cst_168 : f32 to vector<16x32xf32>
    %315 = arith.cmpf ogt, %313, %314 : vector<16x32xf32>
    %cst_169 = arith.constant 0.000000e+00 : f32
    %316 = vector.broadcast %cst_169 : f32 to vector<16x32xf32>
    %317 = arith.minimumf %313, %316 : vector<16x32xf32>
    %318 = math.exp %317 : vector<16x32xf32>
    %cst_170 = arith.constant 1.000000e+00 : f32
    %319 = vector.broadcast %cst_170 : f32 to vector<16x32xf32>
    %320 = arith.subf %318, %319 : vector<16x32xf32>
    %321 = arith.select %315, %313, %320 : vector<16x32xi1>, vector<16x32xf32>
    %322 = arith.truncf %321 : vector<16x32xf32> to vector<16x32xbf16>
    %c6_171 = arith.constant 6 : index
    %c0_172 = arith.constant 0 : index
    %c0_173 = arith.constant 0 : index
    %323 = vector.load %arg9[%c6_171, %c0_172, %c0_173] : memref<8x16x32xbf16, #tpu.memory_space<vmem>>, vector<1x16x32xbf16>
    %324 = vector.shape_cast %323 : vector<1x16x32xbf16> to vector<16x32xbf16>
    %325 = vector.shape_cast %322 : vector<16x32xbf16> to vector<1x16x32xbf16>
    tpu.vector_store %arg9[%c6_171, %c0_172, %c0_173], %325 {strides = array<i32>} : memref<8x16x32xbf16, #tpu.memory_space<vmem>>, vector<1x16x32xbf16>,
    %cst_174 = arith.constant 0.000000e+00 : f32
    %326 = vector.broadcast %cst_174 : f32 to vector<16x32xf32>
    %327 = arith.cmpf ogt, %307, %326 : vector<16x32xf32>
    %cst_175 = arith.constant 0.000000e+00 : f32
    %328 = vector.broadcast %cst_175 : f32 to vector<16x32xf32>
    %329 = arith.minimumf %307, %328 : vector<16x32xf32>
    %330 = math.exp %329 : vector<16x32xf32>
    %cst_176 = arith.constant 1.000000e+00 : f32
    %331 = vector.broadcast %cst_176 : f32 to vector<16x32xf32>
    %332 = arith.subf %330, %331 : vector<16x32xf32>
    %333 = arith.select %327, %307, %332 : vector<16x32xi1>, vector<16x32xf32>
    %334 = arith.truncf %333 : vector<16x32xf32> to vector<16x32xbf16>
    %c6_177 = arith.constant 6 : index
    %c0_178 = arith.constant 0 : index
    %c0_179 = arith.constant 0 : index
    %335 = vector.load %arg10[%c6_177, %c0_178, %c0_179] : memref<8x16x32xbf16, #tpu.memory_space<vmem>>, vector<1x16x32xbf16>
    %336 = vector.shape_cast %335 : vector<1x16x32xbf16> to vector<16x32xbf16>
    %337 = vector.shape_cast %334 : vector<16x32xbf16> to vector<1x16x32xbf16>
    tpu.vector_store %arg10[%c6_177, %c0_178, %c0_179], %337 {strides = array<i32>} : memref<8x16x32xbf16, #tpu.memory_space<vmem>>, vector<1x16x32xbf16>,
    %c7 = arith.constant 7 : index
    %c0_180 = arith.constant 0 : index
    %c0_181 = arith.constant 0 : index
    %338 = vector.load %arg1[%c7, %c0_180, %c0_181] : memref<8x16x32xbf16, #tpu.memory_space<vmem>>, vector<1x16x32xbf16>
    %339 = vector.shape_cast %338 : vector<1x16x32xbf16> to vector<16x32xbf16>
    %cst_182 = arith.constant dense<0.000000e+00> : vector<32x32xf32>
    %340 = tpu.matmul %0, %339, %cst_182 {dimension_numbers = #tpu.dot_dimension_numbers<[1], [0], [0], [1], [0, 0, 1, 1], [], []>} : vector<32x16xbf16>, vector<16x32xbf16>, vector<32x32xf32> -> vector<32x32xf32>
    %341 = vector.extract_strided_slice %340 {offsets = [0, 0], sizes = [16, 32], strides = [1, 1]} : vector<32x32xf32> to vector<16x32xf32>
    %342 = vector.extract_strided_slice %340 {offsets = [16, 0], sizes = [16, 32], strides = [1, 1]} : vector<32x32xf32> to vector<16x32xf32>
    %343 = arith.mulf %341, %5 : vector<16x32xf32>
    %344 = arith.mulf %342, %7 : vector<16x32xf32>
    %345 = arith.subf %343, %344 : vector<16x32xf32>
    %346 = arith.truncf %345 : vector<16x32xf32> to vector<16x32xbf16>
    %c0_183 = arith.constant 0 : index
    %c0_184 = arith.constant 0 : index
    %347 = vector.load %arg11[%c0_183, %c0_184] : memref<32x32xbf16, #tpu.memory_space<vmem>>, vector<16x32xbf16>
    tpu.vector_store %arg11[%c0_183, %c0_184], %346 {strides = array<i32>} : memref<32x32xbf16, #tpu.memory_space<vmem>>, vector<16x32xbf16>,
    %348 = arith.mulf %341, %7 : vector<16x32xf32>
    %349 = arith.mulf %342, %5 : vector<16x32xf32>
    %350 = arith.addf %348, %349 : vector<16x32xf32>
    %351 = arith.truncf %350 : vector<16x32xf32> to vector<16x32xbf16>
    %c16_185 = arith.constant 16 : index
    %c0_186 = arith.constant 0 : index
    %352 = vector.load %arg11[%c16_185, %c0_186] : memref<32x32xbf16, #tpu.memory_space<vmem>>, vector<16x32xbf16>
    tpu.vector_store %arg11[%c16_185, %c0_186], %351 {strides = array<i32>} : memref<32x32xbf16, #tpu.memory_space<vmem>>, vector<16x32xbf16>,
    %c0_187 = arith.constant 0 : index
    %c0_188 = arith.constant 0 : index
    %353 = vector.load %arg11[%c0_187, %c0_188] : memref<32x32xbf16, #tpu.memory_space<vmem>>, vector<32x32xbf16>
    %cst_189 = arith.constant dense<0.000000e+00> : vector<16x32xf32>
    %354 = tpu.matmul %1, %353, %cst_189 {dimension_numbers = #tpu.dot_dimension_numbers<[1], [0], [0], [1], [0, 0, 1, 1], [], []>} : vector<16x32xbf16>, vector<32x32xbf16>, vector<16x32xf32> -> vector<16x32xf32>
    %355 = arith.truncf %354 : vector<16x32xf32> to vector<16x32xbf16>
    %cst_190 = arith.constant dense<0.000000e+00> : vector<16x32xf32>
    %356 = tpu.matmul %355, %2, %cst_190 {dimension_numbers = #tpu.dot_dimension_numbers<[1], [0], [0], [1], [0, 0, 1, 1], [], []>} : vector<16x32xbf16>, vector<32x32xbf16>, vector<16x32xf32> -> vector<16x32xf32>
    %cst_191 = arith.constant dense<0.000000e+00> : vector<16x32xf32>
    %357 = tpu.matmul %339, %3, %cst_191 {dimension_numbers = #tpu.dot_dimension_numbers<[1], [0], [0], [1], [0, 0, 1, 1], [], []>} : vector<16x32xbf16>, vector<32x32xbf16>, vector<16x32xf32> -> vector<16x32xf32>
    %358 = arith.addf %356, %357 : vector<16x32xf32>
    %359 = vector.broadcast %8 : vector<1x32xf32> to vector<16x32xf32>
    %360 = arith.addf %358, %359 : vector<16x32xf32>
    %cst_192 = arith.constant 0.000000e+00 : f32
    %361 = vector.broadcast %cst_192 : f32 to vector<16x32xf32>
    %362 = arith.cmpf ogt, %360, %361 : vector<16x32xf32>
    %cst_193 = arith.constant 0.000000e+00 : f32
    %363 = vector.broadcast %cst_193 : f32 to vector<16x32xf32>
    %364 = arith.minimumf %360, %363 : vector<16x32xf32>
    %365 = math.exp %364 : vector<16x32xf32>
    %cst_194 = arith.constant 1.000000e+00 : f32
    %366 = vector.broadcast %cst_194 : f32 to vector<16x32xf32>
    %367 = arith.subf %365, %366 : vector<16x32xf32>
    %368 = arith.select %362, %360, %367 : vector<16x32xi1>, vector<16x32xf32>
    %369 = arith.truncf %368 : vector<16x32xf32> to vector<16x32xbf16>
    %c7_195 = arith.constant 7 : index
    %c0_196 = arith.constant 0 : index
    %c0_197 = arith.constant 0 : index
    %370 = vector.load %arg9[%c7_195, %c0_196, %c0_197] : memref<8x16x32xbf16, #tpu.memory_space<vmem>>, vector<1x16x32xbf16>
    %371 = vector.shape_cast %370 : vector<1x16x32xbf16> to vector<16x32xbf16>
    %372 = vector.shape_cast %369 : vector<16x32xbf16> to vector<1x16x32xbf16>
    tpu.vector_store %arg9[%c7_195, %c0_196, %c0_197], %372 {strides = array<i32>} : memref<8x16x32xbf16, #tpu.memory_space<vmem>>, vector<1x16x32xbf16>,
    %cst_198 = arith.constant 0.000000e+00 : f32
    %373 = vector.broadcast %cst_198 : f32 to vector<16x32xf32>
    %374 = arith.cmpf ogt, %354, %373 : vector<16x32xf32>
    %cst_199 = arith.constant 0.000000e+00 : f32
    %375 = vector.broadcast %cst_199 : f32 to vector<16x32xf32>
    %376 = arith.minimumf %354, %375 : vector<16x32xf32>
    %377 = math.exp %376 : vector<16x32xf32>
    %cst_200 = arith.constant 1.000000e+00 : f32
    %378 = vector.broadcast %cst_200 : f32 to vector<16x32xf32>
    %379 = arith.subf %377, %378 : vector<16x32xf32>
    %380 = arith.select %374, %354, %379 : vector<16x32xi1>, vector<16x32xf32>
    %381 = arith.truncf %380 : vector<16x32xf32> to vector<16x32xbf16>
    %c7_201 = arith.constant 7 : index
    %c0_202 = arith.constant 0 : index
    %c0_203 = arith.constant 0 : index
    %382 = vector.load %arg10[%c7_201, %c0_202, %c0_203] : memref<8x16x32xbf16, #tpu.memory_space<vmem>>, vector<1x16x32xbf16>
    %383 = vector.shape_cast %382 : vector<1x16x32xbf16> to vector<16x32xbf16>
    %384 = vector.shape_cast %381 : vector<16x32xbf16> to vector<1x16x32xbf16>
    tpu.vector_store %arg10[%c7_201, %c0_202, %c0_203], %384 {strides = array<i32>} : memref<8x16x32xbf16, #tpu.memory_space<vmem>>, vector<1x16x32xbf16>,
    return
  }
  func.func @transform_0(%arg0: i32) -> (i32, i32, i32) {
    %c0_i32 = arith.constant 0 : i32
    %c0_i32_0 = arith.constant 0 : i32
    %c0_i32_1 = arith.constant 0 : i32
    return %arg0, %c0_i32, %c0_i32_0 : i32, i32, i32
  }
  func.func @transform_1(%arg0: i32) -> (i32, i32) {
    %c0_i32 = arith.constant 0 : i32
    %c0_i32_0 = arith.constant 0 : i32
    %c0_i32_1 = arith.constant 0 : i32
    return %c0_i32, %c0_i32_0 : i32, i32
  }
  func.func @transform_2(%arg0: i32) -> (i32, i32) {
    %c0_i32 = arith.constant 0 : i32
    %c0_i32_0 = arith.constant 0 : i32
    %c0_i32_1 = arith.constant 0 : i32
    return %c0_i32, %c0_i32_0 : i32, i32
  }
  func.func @transform_3(%arg0: i32) -> (i32, i32) {
    %c0_i32 = arith.constant 0 : i32
    %c0_i32_0 = arith.constant 0 : i32
    %c0_i32_1 = arith.constant 0 : i32
    return %c0_i32, %c0_i32_0 : i32, i32
  }
  func.func @transform_4(%arg0: i32) -> (i32, i32) {
    %c0_i32 = arith.constant 0 : i32
    %c0_i32_0 = arith.constant 0 : i32
    %c0_i32_1 = arith.constant 0 : i32
    return %c0_i32, %c0_i32_0 : i32, i32
  }
  func.func @transform_5(%arg0: i32) -> (i32, i32) {
    %c0_i32 = arith.constant 0 : i32
    %c0_i32_0 = arith.constant 0 : i32
    %c0_i32_1 = arith.constant 0 : i32
    return %c0_i32, %c0_i32_0 : i32, i32
  }
  func.func @transform_6(%arg0: i32) -> (i32, i32) {
    %c0_i32 = arith.constant 0 : i32
    %c0_i32_0 = arith.constant 0 : i32
    %c0_i32_1 = arith.constant 0 : i32
    return %c0_i32, %c0_i32_0 : i32, i32
  }
  func.func @transform_7(%arg0: i32) -> (i32, i32) {
    %c0_i32 = arith.constant 0 : i32
    %c0_i32_0 = arith.constant 0 : i32
    %c0_i32_1 = arith.constant 0 : i32
    return %c0_i32, %c0_i32_0 : i32, i32
  }
  func.func @transform_8(%arg0: i32) -> (i32, i32, i32) {
    %c0_i32 = arith.constant 0 : i32
    %c0_i32_0 = arith.constant 0 : i32
    %c0_i32_1 = arith.constant 0 : i32
    return %arg0, %c0_i32, %c0_i32_0 : i32, i32, i32
  }
  func.func @transform_9(%arg0: i32) -> (i32, i32, i32) {
    %c0_i32 = arith.constant 0 : i32
    %c0_i32_0 = arith.constant 0 : i32
    %c0_i32_1 = arith.constant 0 : i32
    return %arg0, %c0_i32, %c0_i32_0 : i32, i32, i32
  }
}

</mosaic_0001>

<llo_original>
// kernel: tpu_custom_call.1
$region0: #{tpu_custom_call.1}
  #allocation0 [shape = 'u32[]', space=smem, size = 0x4, offset = 0x4, fixed_abs, tag = 'smem constant byte address 0x4 - core index']
  #allocation1 [shape = 'u32[144,128]{1,0:T(1,128)}', space=vmem, size = 0x12000, scoped, tag = 'internal scratch']
  %s0 = inlined_call_operand.hbm [shape: f32[8,128], index: 0, kind: input, shape index: {}]
  %s1 = inlined_call_operand.hbm [shape: f32[16,128], index: 1, kind: output, shape index: {}]
  %s2 = sld [smem:[#allocation0]]
  $region41: #{tpu_custom_call.1} parent=0
    _
  %s4 = ssub.s32 1, %s2
  %s5 = scalar_select 0, %s4, %s2
  $region1: #{tpu_custom_call.1} parent=0
    #allocation2 [shape = 'u8[4096]{0}', space=vmem, size = 0x1000, scoped, tag = 'input window, operand 0, single buffered']
    #allocation3 [shape = 's32[2]{0}', space=sflag, size = 0x8, scoped, tag = 'scoped memory for tpu_custom_call.1']
    #allocation4 [shape = 's32[2]{0}', space=sflag, size = 0x8, scoped, tag = 'scoped memory for tpu_custom_call.1']
    #allocation5 [shape = 'u8[8192]{0}', space=vmem, size = 0x2000, scoped, tag = 'output window, operand 0']
    %6 = vsyncpa [#allocation3], 0
    %7 = vsyncpa [#allocation4], 0
    %s8 = scalar_lea.sflag [#allocation4], 1
    %9 = vsyncpa %s8, 0
    loop: start=0, step=1, limit=4
    $region2: #{tpu_custom_call.1} parent=1 // loop_pre_header
      _
    $region3: #{tpu_custom_call.1} parent=1 // loop_header
      %s11 = sphi 0, %s15
      %p12 = scmp.ge.s32.totalorder %s11, 4
      %s19 = sphi 0, %s19
      %s21 = sphi 0, %s19
      %s22 = sphi 0, %s21
      %s36 = sphi 0, %s22
      %s42 = sphi 0, %s44
      %s45 = sphi 0, %s42
      %s46 = sphi 0, %s45
      %s62 = sphi 0, %s46
    $region4: #{tpu_custom_call.1} parent=1 // loop_header_branch
      %14 = sbr.rel (%p12) target = $region8
    $region5: #{tpu_custom_call.1} parent=1 // loop_body
      %s16 = ssub.s32 %s11, 1
      %s17 = ssub.s32 %s11, 2
      %s18 = sadd.s32 %s11, 1
      %s20 = sadd.s32 %s19, 1
      %p23 = scmp.eq.s32.totalorder %s11, 1
      %p24 = scmp.ne.s32.totalorder %s19, %s21
      %p25 = scmp.eq.s32.totalorder %s11, 0
      %p26 = por %p24, %p25
      %p27 = scmp.ne.s32.totalorder %s19, %s21
      %p28 = scmp.eq.s32.totalorder %s16, 1
      %p29 = por %p27, %p28
      %p30 = scmp.ne.s32.totalorder %s21, %s22
      %p31 = scmp.eq.s32.totalorder %s16, 0
      %p32 = por %p30, %p31
      %p33 = scmp.ne.s32.totalorder %s21, %s22
      %p34 = scmp.eq.s32.totalorder %s17, 1
      %p35 = por %p33, %p34
      %p37 = scmp.ne.s32.totalorder %s22, %s36
      %p38 = scmp.eq.s32.totalorder %s17, 0
      %p39 = por %p37, %p38
      %s40 = ssub.s32 %s11, %s18
      %p41 = scmp.eq.s32.totalorder %s40, 0
      %s43 = sadd.s32 %s42, 1
      %s44 = scalar_select %p41, %s42, %s43
      %p47 = pneg %p41
      %p48 = scmp.eq.s32.totalorder %s11, 1
      %p49 = por %p47, %p48
      %p50 = scmp.ne.s32.totalorder %s42, %s45
      %p51 = scmp.eq.s32.totalorder %s11, 0
      %p52 = por %p50, %p51
      %p53 = scmp.ne.s32.totalorder %s42, %s45
      %p54 = scmp.eq.s32.totalorder %s16, 1
      %p55 = por %p53, %p54
      %p56 = scmp.ne.s32.totalorder %s45, %s46
      %p57 = scmp.eq.s32.totalorder %s16, 0
      %p58 = por %p56, %p57
      %p59 = scmp.ne.s32.totalorder %s45, %s46
      %p60 = scmp.eq.s32.totalorder %s17, 1
      %p61 = por %p59, %p60
      %p63 = scmp.ne.s32.totalorder %s46, %s62
      %p64 = scmp.eq.s32.totalorder %s17, 0
      %p65 = por %p63, %p64
      %p66 = scmp.le.s32.totalorder 1, %s11
      %p67 = scmp.lt.s32.totalorder %s11, 3
      %p68 = pnand %p66, %p67
      %p69 = pneg %p68
      // Predicated region
      $region9: #{tpu_custom_call.1} parent=5 // pred_check
        _
      $region10: #{tpu_custom_call.1} parent=5 // pred_check_branch
        %71 = sbr.rel (%p68) target = $region12
      $region11: #{tpu_custom_call.1} parent=5 // pred_region
        %s72 = ssub.s32 %s11, 1
        // Predicated region
        $region13: #{tpu_custom_call.1} parent=11 // pred_check
          %p73 = pneg %p32
        $region14: #{tpu_custom_call.1} parent=11 // pred_check_branch
          %75 = sbr.rel (%p73) target = $region16
        $region15: #{tpu_custom_call.1} parent=11 // pred_region
          %s77 = ssub.s32 128, 128
          %78 = vsyncadd [#allocation3], %s77
          %s80 = sshll.u32 [#allocation2], 4
          %s81 = int_to_ptr.vmem [resolvable:$true] %s80
          %83 = dma.hbm_to_vmem [thread:$0]  %s0, 128, %s81, [#allocation3]
        $region16: #{tpu_custom_call.1} parent=11 // pred_fallthru
          _
      $region12: #{tpu_custom_call.1} parent=5 // pred_fallthru
        _
      %p84 = scmp.lt.s32.totalorder %s11, 2
      // Predicated region
      $region17: #{tpu_custom_call.1} parent=5 // pred_check
        %p85 = pneg %p84
      $region18: #{tpu_custom_call.1} parent=5 // pred_check_branch
        %87 = sbr.rel (%p85) target = $region20
      $region19: #{tpu_custom_call.1} parent=5 // pred_region
        _
      $region20: #{tpu_custom_call.1} parent=5 // pred_fallthru
        _
      %p88 = scmp.le.s32.totalorder 1, %s11
      %p89 = scmp.lt.s32.totalorder %s11, 3
      %p90 = pnand %p88, %p89
      %p91 = pneg %p90
      // Predicated region
      $region21: #{tpu_custom_call.1} parent=5 // pred_check
        _
      $region22: #{tpu_custom_call.1} parent=5 // pred_check_branch
        %93 = sbr.rel (%p90) target = $region24
      $region23: #{tpu_custom_call.1} parent=5 // pred_region
        %s94 = ssub.s32 %s11, 1
        // Predicated region
        $region25: #{tpu_custom_call.1} parent=23 // pred_check
          %p95 = pneg %p32
        $region26: #{tpu_custom_call.1} parent=23 // pred_check_branch
          %97 = sbr.rel (%p95) target = $region28
        $region27: #{tpu_custom_call.1} parent=23 // pred_region
          %98 = dma.done [#allocation3], 128
        $region28: #{tpu_custom_call.1} parent=23 // pred_fallthru
          _
        %p99 = pneg %p32
        %p100 = pneg %p29
        %p101 = pneg %p58
        %p102 = pneg %p55
        %s103 = sand.u32 %s45, 1
        %s104 = scalar_lea.sflag [#allocation4], %s103
        %s105 = sand.u32 %s45, 1
        %s106 = smul.addr %s105, 8
        %s107 = scalar_lea.vmem [#allocation5], %s106
        %v108 = vld [vmem:[#allocation2] sm:$0xff]
        %v109 = vadd.f32 %v108, 1.0
        %110 = vst [vmem:[%s107] sm:$0xff] %v109
        %s111 = sand.u32 %s45, 1
        %s112 = scalar_lea.sflag [#allocation4], %s111
        %s113 = sand.u32 %s45, 1
        %s114 = smul.addr %s113, 8
        %s115 = scalar_lea.vmem [#allocation5], %s114
        // Predicated region
        $region29: #{tpu_custom_call.1} parent=23 // pred_check
          %p116 = pneg %p55
        $region30: #{tpu_custom_call.1} parent=23 // pred_check_branch
          %118 = sbr.rel (%p116) target = $region32
        $region31: #{tpu_custom_call.1} parent=23 // pred_region
          %s120 = ssub.s32 128, 128
          %121 = vsyncadd %s112, %s120
          %s122 = smul.addr %s16, 128
          %s123 = scalar_lea.hbm %s1, %s122
          %s125 = sshll.u32 %s115, 4
          %s126 = int_to_ptr.vmem [resolvable:$true] %s125
          %128 = dma.vmem_to_hbm [thread:$0]  %s126, 128, %s123, %s112
        $region32: #{tpu_custom_call.1} parent=23 // pred_fallthru
          _
      $region24: #{tpu_custom_call.1} parent=5 // pred_fallthru
        _
      %p129 = scmp.le.s32.totalorder 2, %s11
      // Predicated region
      $region33: #{tpu_custom_call.1} parent=5 // pred_check
        %p130 = pneg %p129
      $region34: #{tpu_custom_call.1} parent=5 // pred_check_branch
        %132 = sbr.rel (%p130) target = $region36
      $region35: #{tpu_custom_call.1} parent=5 // pred_region
        %s133 = ssub.s32 %s11, 2
        // Predicated region
        $region37: #{tpu_custom_call.1} parent=35 // pred_check
          %p134 = pneg %p61
        $region38: #{tpu_custom_call.1} parent=35 // pred_check_branch
          %136 = sbr.rel (%p134) target = $region40
        $region39: #{tpu_custom_call.1} parent=35 // pred_region
          %s137 = sand.u32 %s46, 1
          %s138 = scalar_lea.sflag [#allocation4], %s137
          %s139 = sand.u32 %s46, 1
          %s140 = smul.addr %s139, 8
          %s141 = scalar_lea.vmem [#allocation5], %s140
          %142 = dma.done %s138, 128
        $region40: #{tpu_custom_call.1} parent=35 // pred_fallthru
          _
      $region36: #{tpu_custom_call.1} parent=5 // pred_fallthru
        _
    $region6: #{tpu_custom_call.1} parent=1 // loop_footer
      %s15 = sadd.s32 1, %s11
    $region7: #{tpu_custom_call.1} parent=1 // loop_footer_branch
      %10 = sbr.rel target = $region3
    $region8: #{tpu_custom_call.1} parent=1 // loop_exit
      _
    %143 = vsyncpa [#allocation3], 1
    %s144 = scalar_lea.sflag [#allocation3], 1
    %145 = vsyncpa %s144, 1
    %146 = vsyncpa [#allocation4], 1
    %s147 = scalar_lea.sflag [#allocation4], 1
    %148 = vsyncpa %s147, 1

// kernel: tpu_custom_call.1
$region0: #{tpu_custom_call.1}
  #allocation0 [shape = 'u32[]', space=smem, size = 0x4, offset = 0x4, fixed_abs, tag = 'smem constant byte address 0x4 - core index']
  #allocation1 [shape = 'u32[144,128]{1,0:T(1,128)}', space=vmem, size = 0x12000, scoped, tag = 'internal scratch']
  #allocation2 [shape = 'bf16[32,32]{1,0:T(16,128)(2,1)}', space=vmem, size = 0x2000, scoped, tag = 'scratch operand']
  %s0 = inlined_call_operand.hbm [shape: bf16[16,16,32], index: 0, kind: input, shape index: {}]
  %s1 = inlined_call_operand.vmem [shape: bf16[32,16], index: 1, kind: input, shape index: {}]
  %s2 = inlined_call_operand.hbm [shape: bf16[16,32], index: 2, kind: input, shape index: {}]
  %s3 = inlined_call_operand.hbm [shape: bf16[16,32], index: 3, kind: input, shape index: {}]
  %s4 = inlined_call_operand.hbm [shape: bf16[16,32], index: 4, kind: input, shape index: {}]
  %s5 = inlined_call_operand.vmem [shape: bf16[32,32], index: 5, kind: input, shape index: {}]
  %s6 = inlined_call_operand.vmem [shape: bf16[32,32], index: 6, kind: input, shape index: {}]
  %s7 = inlined_call_operand.vmem [shape: f32[1,32], index: 7, kind: input, shape index: {}]
  %s8 = inlined_call_operand.hbm [shape: bf16[16,16,32], index: 8, kind: output, shape index: {0}]
  %s9 = inlined_call_operand.hbm [shape: bf16[16,16,32], index: 9, kind: output, shape index: {1}]
  %10 = xla_tuple %s8, %s9
  %s11 = sld [smem:[#allocation0]]
  $region89: #{tpu_custom_call.1} parent=0
    _
  %s13 = ssub.s32 1, %s11
  %s14 = scalar_select 0, %s13, %s11
  $region1: #{tpu_custom_call.1} parent=0
    #allocation3 [shape = 'u8[65536]{0}', space=vmem, size = 0x10000, scoped, tag = 'input window, operand 0']
    #allocation4 [shape = 's32[2]{0}', space=sflag, size = 0x8, scoped, tag = 'scoped memory for tpu_custom_call.1']
    #allocation5 [shape = 's32[2]{0}', space=sflag, size = 0x8, scoped, tag = 'scoped memory for tpu_custom_call.1']
    #allocation6 [shape = 'u8[4096]{0}', space=vmem, size = 0x1000, scoped, tag = 'input window, operand 2, single buffered']
    #allocation7 [shape = 's32[1]{0}', space=sflag, size = 0x4, scoped, tag = 'scoped memory for tpu_custom_call.1']
    #allocation8 [shape = 'u8[4096]{0}', space=vmem, size = 0x1000, scoped, tag = 'input window, operand 3, single buffered']
    #allocation9 [shape = 'u8[4096]{0}', space=vmem, size = 0x1000, scoped, tag = 'input window, operand 4, single buffered']
    #allocation10 [shape = 's32[1]{0}', space=sflag, size = 0x4, scoped, tag = 'scoped memory for tpu_custom_call.1']
    #allocation11 [shape = 'u8[65536]{0}', space=vmem, size = 0x10000, scoped, tag = 'output window, operand 0']
    #allocation12 [shape = 'u8[65536]{0}', space=vmem, size = 0x10000, scoped, tag = 'output window, operand 1']
    #allocation13 [shape = 's32[2]{0}', space=sflag, size = 0x8, scoped, tag = 'scoped memory for tpu_custom_call.1']
    %15 = vsyncpa [#allocation4], 0
    %s16 = scalar_lea.sflag [#allocation4], 1
    %17 = vsyncpa %s16, 0
    %18 = vsyncpa [#allocation7], 0
    %19 = vsyncpa [#allocation10], 0
    %20 = vsyncpa [#allocation5], 0
    %s21 = scalar_lea.sflag [#allocation5], 1
    %22 = vsyncpa %s21, 0
    %23 = vsyncpa [#allocation13], 0
    %s24 = scalar_lea.sflag [#allocation13], 1
    %25 = vsyncpa %s24, 0
    loop: start=0, step=1, limit=4
    $region2: #{tpu_custom_call.1} parent=1 // loop_pre_header
      _
    $region3: #{tpu_custom_call.1} parent=1 // loop_header
      %s27 = sphi 0, %s31
      %p28 = scmp.ge.s32.totalorder %s27, 4
      %s37 = sphi 0, %s39
      %s40 = sphi 0, %s37
      %s41 = sphi 0, %s40
      %s57 = sphi 0, %s41
      %s61 = sphi 0, %s61
      %s63 = sphi 0, %s61
      %s64 = sphi 0, %s63
      %s78 = sphi 0, %s64
      %s82 = sphi 0, %s82
      %s84 = sphi 0, %s82
      %s85 = sphi 0, %s84
      %s99 = sphi 0, %s85
      %s103 = sphi 0, %s103
      %s105 = sphi 0, %s103
      %s106 = sphi 0, %s105
      %s120 = sphi 0, %s106
      %s124 = sphi 0, %s124
      %s126 = sphi 0, %s124
      %s127 = sphi 0, %s126
      %s141 = sphi 0, %s127
      %s145 = sphi 0, %s145
      %s147 = sphi 0, %s145
      %s148 = sphi 0, %s147
      %s162 = sphi 0, %s148
      %s166 = sphi 0, %s166
      %s168 = sphi 0, %s166
      %s169 = sphi 0, %s168
      %s183 = sphi 0, %s169
      %s187 = sphi 0, %s187
      %s189 = sphi 0, %s187
      %s190 = sphi 0, %s189
      %s204 = sphi 0, %s190
      %s210 = sphi 0, %s212
      %s213 = sphi 0, %s210
      %s214 = sphi 0, %s213
      %s230 = sphi 0, %s214
      %s236 = sphi 0, %s238
      %s239 = sphi 0, %s236
      %s240 = sphi 0, %s239
      %s256 = sphi 0, %s240
    $region4: #{tpu_custom_call.1} parent=1 // loop_header_branch
      %30 = sbr.rel (%p28) target = $region8
    $region5: #{tpu_custom_call.1} parent=1 // loop_body
      %s32 = ssub.s32 %s27, 1
      %s33 = ssub.s32 %s27, 2
      %s34 = sadd.s32 %s27, 1
      %s35 = ssub.s32 %s27, %s34
      %p36 = scmp.eq.s32.totalorder %s35, 0
      %s38 = sadd.s32 %s37, 1
      %s39 = scalar_select %p36, %s37, %s38
      %p42 = pneg %p36
      %p43 = scmp.eq.s32.totalorder %s27, 1
      %p44 = por %p42, %p43
      %p45 = scmp.ne.s32.totalorder %s37, %s40
      %p46 = scmp.eq.s32.totalorder %s27, 0
      %p47 = por %p45, %p46
      %p48 = scmp.ne.s32.totalorder %s37, %s40
      %p49 = scmp.eq.s32.totalorder %s32, 1
      %p50 = por %p48, %p49
      %p51 = scmp.ne.s32.totalorder %s40, %s41
      %p52 = scmp.eq.s32.totalorder %s32, 0
      %p53 = por %p51, %p52
      %p54 = scmp.ne.s32.totalorder %s40, %s41
      %p55 = scmp.eq.s32.totalorder %s33, 1
      %p56 = por %p54, %p55
      %p58 = scmp.ne.s32.totalorder %s41, %s57
      %p59 = scmp.eq.s32.totalorder %s33, 0
      %p60 = por %p58, %p59
      %s62 = sadd.s32 %s61, 1
      %p65 = scmp.eq.s32.totalorder %s27, 1
      %p66 = scmp.ne.s32.totalorder %s61, %s63
      %p67 = scmp.eq.s32.totalorder %s27, 0
      %p68 = por %p66, %p67
      %p69 = scmp.ne.s32.totalorder %s61, %s63
      %p70 = scmp.eq.s32.totalorder %s32, 1
      %p71 = por %p69, %p70
      %p72 = scmp.ne.s32.totalorder %s63, %s64
      %p73 = scmp.eq.s32.totalorder %s32, 0
      %p74 = por %p72, %p73
      %p75 = scmp.ne.s32.totalorder %s63, %s64
      %p76 = scmp.eq.s32.totalorder %s33, 1
      %p77 = por %p75, %p76
      %p79 = scmp.ne.s32.totalorder %s64, %s78
      %p80 = scmp.eq.s32.totalorder %s33, 0
      %p81 = por %p79, %p80
      %s83 = sadd.s32 %s82, 1
      %p86 = scmp.eq.s32.totalorder %s27, 1
      %p87 = scmp.ne.s32.totalorder %s82, %s84
      %p88 = scmp.eq.s32.totalorder %s27, 0
      %p89 = por %p87, %p88
      %p90 = scmp.ne.s32.totalorder %s82, %s84
      %p91 = scmp.eq.s32.totalorder %s32, 1
      %p92 = por %p90, %p91
      %p93 = scmp.ne.s32.totalorder %s84, %s85
      %p94 = scmp.eq.s32.totalorder %s32, 0
      %p95 = por %p93, %p94
      %p96 = scmp.ne.s32.totalorder %s84, %s85
      %p97 = scmp.eq.s32.totalorder %s33, 1
      %p98 = por %p96, %p97
      %p100 = scmp.ne.s32.totalorder %s85, %s99
      %p101 = scmp.eq.s32.totalorder %s33, 0
      %p102 = por %p100, %p101
      %s104 = sadd.s32 %s103, 1
      %p107 = scmp.eq.s32.totalorder %s27, 1
      %p108 = scmp.ne.s32.totalorder %s103, %s105
      %p109 = scmp.eq.s32.totalorder %s27, 0
      %p110 = por %p108, %p109
      %p111 = scmp.ne.s32.totalorder %s103, %s105
      %p112 = scmp.eq.s32.totalorder %s32, 1
      %p113 = por %p111, %p112
      %p114 = scmp.ne.s32.totalorder %s105, %s106
      %p115 = scmp.eq.s32.totalorder %s32, 0
      %p116 = por %p114, %p115
      %p117 = scmp.ne.s32.totalorder %s105, %s106
      %p118 = scmp.eq.s32.totalorder %s33, 1
      %p119 = por %p117, %p118
      %p121 = scmp.ne.s32.totalorder %s106, %s120
      %p122 = scmp.eq.s32.totalorder %s33, 0
      %p123 = por %p121, %p122
      %s125 = sadd.s32 %s124, 1
      %p128 = scmp.eq.s32.totalorder %s27, 1
      %p129 = scmp.ne.s32.totalorder %s124, %s126
      %p130 = scmp.eq.s32.totalorder %s27, 0
      %p131 = por %p129, %p130
      %p132 = scmp.ne.s32.totalorder %s124, %s126
      %p133 = scmp.eq.s32.totalorder %s32, 1
      %p134 = por %p132, %p133
      %p135 = scmp.ne.s32.totalorder %s126, %s127
      %p136 = scmp.eq.s32.totalorder %s32, 0
      %p137 = por %p135, %p136
      %p138 = scmp.ne.s32.totalorder %s126, %s127
      %p139 = scmp.eq.s32.totalorder %s33, 1
      %p140 = por %p138, %p139
      %p142 = scmp.ne.s32.totalorder %s127, %s141
      %p143 = scmp.eq.s32.totalorder %s33, 0
      %p144 = por %p142, %p143
      %s146 = sadd.s32 %s145, 1
      %p149 = scmp.eq.s32.totalorder %s27, 1
      %p150 = scmp.ne.s32.totalorder %s145, %s147
      %p151 = scmp.eq.s32.totalorder %s27, 0
      %p152 = por %p150, %p151
      %p153 = scmp.ne.s32.totalorder %s145, %s147
      %p154 = scmp.eq.s32.totalorder %s32, 1
      %p155 = por %p153, %p154
      %p156 = scmp.ne.s32.totalorder %s147, %s148
      %p157 = scmp.eq.s32.totalorder %s32, 0
      %p158 = por %p156, %p157
      %p159 = scmp.ne.s32.totalorder %s147, %s148
      %p160 = scmp.eq.s32.totalorder %s33, 1
      %p161 = por %p159, %p160
      %p163 = scmp.ne.s32.totalorder %s148, %s162
      %p164 = scmp.eq.s32.totalorder %s33, 0
      %p165 = por %p163, %p164
      %s167 = sadd.s32 %s166, 1
      %p170 = scmp.eq.s32.totalorder %s27, 1
      %p171 = scmp.ne.s32.totalorder %s166, %s168
      %p172 = scmp.eq.s32.totalorder %s27, 0
      %p173 = por %p171, %p172
      %p174 = scmp.ne.s32.totalorder %s166, %s168
      %p175 = scmp.eq.s32.totalorder %s32, 1
      %p176 = por %p174, %p175
      %p177 = scmp.ne.s32.totalorder %s168, %s169
      %p178 = scmp.eq.s32.totalorder %s32, 0
      %p179 = por %p177, %p178
      %p180 = scmp.ne.s32.totalorder %s168, %s169
      %p181 = scmp.eq.s32.totalorder %s33, 1
      %p182 = por %p180, %p181
      %p184 = scmp.ne.s32.totalorder %s169, %s183
      %p185 = scmp.eq.s32.totalorder %s33, 0
      %p186 = por %p184, %p185
      %s188 = sadd.s32 %s187, 1
      %p191 = scmp.eq.s32.totalorder %s27, 1
      %p192 = scmp.ne.s32.totalorder %s187, %s189
      %p193 = scmp.eq.s32.totalorder %s27, 0
      %p194 = por %p192, %p193
      %p195 = scmp.ne.s32.totalorder %s187, %s189
      %p196 = scmp.eq.s32.totalorder %s32, 1
      %p197 = por %p195, %p196
      %p198 = scmp.ne.s32.totalorder %s189, %s190
      %p199 = scmp.eq.s32.totalorder %s32, 0
      %p200 = por %p198, %p199
      %p201 = scmp.ne.s32.totalorder %s189, %s190
      %p202 = scmp.eq.s32.totalorder %s33, 1
      %p203 = por %p201, %p202
      %p205 = scmp.ne.s32.totalorder %s190, %s204
      %p206 = scmp.eq.s32.totalorder %s33, 0
      %p207 = por %p205, %p206
      %s208 = ssub.s32 %s27, %s34
      %p209 = scmp.eq.s32.totalorder %s208, 0
      %s211 = sadd.s32 %s210, 1
      %s212 = scalar_select %p209, %s210, %s211
      %p215 = pneg %p209
      %p216 = scmp.eq.s32.totalorder %s27, 1
      %p217 = por %p215, %p216
      %p218 = scmp.ne.s32.totalorder %s210, %s213
      %p219 = scmp.eq.s32.totalorder %s27, 0
      %p220 = por %p218, %p219
      %p221 = scmp.ne.s32.totalorder %s210, %s213
      %p222 = scmp.eq.s32.totalorder %s32, 1
      %p223 = por %p221, %p222
      %p224 = scmp.ne.s32.totalorder %s213, %s214
      %p225 = scmp.eq.s32.totalorder %s32, 0
      %p226 = por %p224, %p225
      %p227 = scmp.ne.s32.totalorder %s213, %s214
      %p228 = scmp.eq.s32.totalorder %s33, 1
      %p229 = por %p227, %p228
      %p231 = scmp.ne.s32.totalorder %s214, %s230
      %p232 = scmp.eq.s32.totalorder %s33, 0
      %p233 = por %p231, %p232
      %s234 = ssub.s32 %s27, %s34
      %p235 = scmp.eq.s32.totalorder %s234, 0
      %s237 = sadd.s32 %s236, 1
      %s238 = scalar_select %p235, %s236, %s237
      %p241 = pneg %p235
      %p242 = scmp.eq.s32.totalorder %s27, 1
      %p243 = por %p241, %p242
      %p244 = scmp.ne.s32.totalorder %s236, %s239
      %p245 = scmp.eq.s32.totalorder %s27, 0
      %p246 = por %p244, %p245
      %p247 = scmp.ne.s32.totalorder %s236, %s239
      %p248 = scmp.eq.s32.totalorder %s32, 1
      %p249 = por %p247, %p248
      %p250 = scmp.ne.s32.totalorder %s239, %s240
      %p251 = scmp.eq.s32.totalorder %s32, 0
      %p252 = por %p250, %p251
      %p253 = scmp.ne.s32.totalorder %s239, %s240
      %p254 = scmp.eq.s32.totalorder %s33, 1
      %p255 = por %p253, %p254
      %p257 = scmp.ne.s32.totalorder %s240, %s256
      %p258 = scmp.eq.s32.totalorder %s33, 0
      %p259 = por %p257, %p258
      %p260 = scmp.le.s32.totalorder 1, %s27
      %p261 = scmp.lt.s32.totalorder %s27, 3
      %p262 = pnand %p260, %p261
      %p263 = pneg %p262
      // Predicated region
      $region9: #{tpu_custom_call.1} parent=5 // pred_check
        _
      $region10: #{tpu_custom_call.1} parent=5 // pred_check_branch
        %265 = sbr.rel (%p262) target = $region12
      $region11: #{tpu_custom_call.1} parent=5 // pred_region
        %s266 = ssub.s32 %s27, 1
        // Predicated region
        $region13: #{tpu_custom_call.1} parent=11 // pred_check
          %p267 = pneg %p74
        $region14: #{tpu_custom_call.1} parent=11 // pred_check_branch
          %269 = sbr.rel (%p267) target = $region16
        $region15: #{tpu_custom_call.1} parent=11 // pred_region
          _
        $region16: #{tpu_custom_call.1} parent=11 // pred_fallthru
          _
        // Predicated region
        $region17: #{tpu_custom_call.1} parent=11 // pred_check
          %p270 = pneg %p95
        $region18: #{tpu_custom_call.1} parent=11 // pred_check_branch
          %272 = sbr.rel (%p270) target = $region20
        $region19: #{tpu_custom_call.1} parent=11 // pred_region
          %s274 = ssub.s32 128, 128
          %275 = vsyncadd [#allocation7], %s274
          %s276 = sshll.u32 [#allocation6], 4
          %s277 = int_to_ptr.vmem [resolvable:$true] %s276
          %282 = dma.hbm_to_vmem [thread:$0]  %s2, 128, %s277, [#allocation7], 64, 64, 4
        $region20: #{tpu_custom_call.1} parent=11 // pred_fallthru
          _
        // Predicated region
        $region21: #{tpu_custom_call.1} parent=11 // pred_check
          %p283 = pneg %p116
        $region22: #{tpu_custom_call.1} parent=11 // pred_check_branch
          %285 = sbr.rel (%p283) target = $region24
        $region23: #{tpu_custom_call.1} parent=11 // pred_region
          %s287 = ssub.s32 128, 128
          %288 = vsyncadd [#allocation7], %s287
          %s289 = sshll.u32 [#allocation8], 4
          %s290 = int_to_ptr.vmem [resolvable:$true] %s289
          %295 = dma.hbm_to_vmem [thread:$0]  %s3, 128, %s290, [#allocation7], 64, 64, 4
        $region24: #{tpu_custom_call.1} parent=11 // pred_fallthru
          _
        // Predicated region
        $region25: #{tpu_custom_call.1} parent=11 // pred_check
          %p296 = pneg %p137
        $region26: #{tpu_custom_call.1} parent=11 // pred_check_branch
          %298 = sbr.rel (%p296) target = $region28
        $region27: #{tpu_custom_call.1} parent=11 // pred_region
          %s300 = ssub.s32 128, 128
          %301 = vsyncadd [#allocation10], %s300
          %s302 = sshll.u32 [#allocation9], 4
          %s303 = int_to_ptr.vmem [resolvable:$true] %s302
          %308 = dma.hbm_to_vmem [thread:$0]  %s4, 128, %s303, [#allocation10], 64, 64, 4
        $region28: #{tpu_custom_call.1} parent=11 // pred_fallthru
          _
        // Predicated region
        $region29: #{tpu_custom_call.1} parent=11 // pred_check
          %p309 = pneg %p158
        $region30: #{tpu_custom_call.1} parent=11 // pred_check_branch
          %311 = sbr.rel (%p309) target = $region32
        $region31: #{tpu_custom_call.1} parent=11 // pred_region
          _
        $region32: #{tpu_custom_call.1} parent=11 // pred_fallthru
          _
        // Predicated region
        $region33: #{tpu_custom_call.1} parent=11 // pred_check
          %p312 = pneg %p179
        $region34: #{tpu_custom_call.1} parent=11 // pred_check_branch
          %314 = sbr.rel (%p312) target = $region36
        $region35: #{tpu_custom_call.1} parent=11 // pred_region
          _
        $region36: #{tpu_custom_call.1} parent=11 // pred_fallthru
          _
        // Predicated region
        $region37: #{tpu_custom_call.1} parent=11 // pred_check
          %p315 = pneg %p200
        $region38: #{tpu_custom_call.1} parent=11 // pred_check_branch
          %317 = sbr.rel (%p315) target = $region40
        $region39: #{tpu_custom_call.1} parent=11 // pred_region
          _
        $region40: #{tpu_custom_call.1} parent=11 // pred_fallthru
          _
      $region12: #{tpu_custom_call.1} parent=5 // pred_fallthru
        _
      %p318 = scmp.lt.s32.totalorder %s27, 2
      // Predicated region
      $region41: #{tpu_custom_call.1} parent=5 // pred_check
        %p319 = pneg %p318
      $region42: #{tpu_custom_call.1} parent=5 // pred_check_branch
        %321 = sbr.rel (%p319) target = $region44
      $region43: #{tpu_custom_call.1} parent=5 // pred_region
        // Predicated region
        $region45: #{tpu_custom_call.1} parent=43 // pred_check
          %p322 = pneg %p47
        $region46: #{tpu_custom_call.1} parent=43 // pred_check_branch
          %324 = sbr.rel (%p322) target = $region48
        $region47: #{tpu_custom_call.1} parent=43 // pred_region
          %s325 = sand.u32 %s37, 1
          %s326 = scalar_lea.sflag [#allocation4], %s325
          %s327 = sand.u32 %s37, 1
          %s328 = smul.addr %s327, 64
          %s329 = scalar_lea.vmem [#allocation3], %s328
          %s330 = smul.u32 8, %s27
          %s332 = ssub.s32 1024, 1024
          %333 = vsyncadd %s326, %s332
          %s334 = smul.addr %s330, 2
          %s335 = smul.addr %s334, 64
          %s336 = scalar_lea.hbm %s0, %s335
          %s337 = sshll.u32 %s329, 4
          %s338 = int_to_ptr.vmem [resolvable:$true] %s337
          %343 = dma.hbm_to_vmem [thread:$0]  %s336, 1024, %s338, %s326, 64, 64, 4
        $region48: #{tpu_custom_call.1} parent=43 // pred_fallthru
          _
      $region44: #{tpu_custom_call.1} parent=5 // pred_fallthru
        _
      %p344 = scmp.le.s32.totalorder 1, %s27
      %p345 = scmp.lt.s32.totalorder %s27, 3
      %p346 = pnand %p344, %p345
      %p347 = pneg %p346
      // Predicated region
      $region49: #{tpu_custom_call.1} parent=5 // pred_check
        _
      $region50: #{tpu_custom_call.1} parent=5 // pred_check_branch
        %349 = sbr.rel (%p346) target = $region52
      $region51: #{tpu_custom_call.1} parent=5 // pred_region
        %s350 = ssub.s32 %s27, 1
        %s351 = sand.u32 %s40, 1
        %s352 = scalar_lea.sflag [#allocation4], %s351
        %s353 = sand.u32 %s40, 1
        %s354 = smul.addr %s353, 64
        %s355 = scalar_lea.vmem [#allocation3], %s354
        // Predicated region
        $region53: #{tpu_custom_call.1} parent=51 // pred_check
          %p356 = pneg %p53
        $region54: #{tpu_custom_call.1} parent=51 // pred_check_branch
          %358 = sbr.rel (%p356) target = $region56
        $region55: #{tpu_custom_call.1} parent=51 // pred_region
          %359 = dma.done %s352, 1024
        $region56: #{tpu_custom_call.1} parent=51 // pred_fallthru
          _
        // Predicated region
        $region57: #{tpu_custom_call.1} parent=51 // pred_check
          %p360 = pneg %p95
        $region58: #{tpu_custom_call.1} parent=51 // pred_check_branch
          %362 = sbr.rel (%p360) target = $region60
        $region59: #{tpu_custom_call.1} parent=51 // pred_region
          %363 = dma.done [#allocation7], 128
        $region60: #{tpu_custom_call.1} parent=51 // pred_fallthru
          _
        // Predicated region
        $region61: #{tpu_custom_call.1} parent=51 // pred_check
          %p364 = pneg %p116
        $region62: #{tpu_custom_call.1} parent=51 // pred_check_branch
          %366 = sbr.rel (%p364) target = $region64
        $region63: #{tpu_custom_call.1} parent=51 // pred_region
          %367 = dma.done [#allocation7], 128
        $region64: #{tpu_custom_call.1} parent=51 // pred_fallthru
          _
        // Predicated region
        $region65: #{tpu_custom_call.1} parent=51 // pred_check
          %p368 = pneg %p137
        $region66: #{tpu_custom_call.1} parent=51 // pred_check_branch
          %370 = sbr.rel (%p368) target = $region68
        $region67: #{tpu_custom_call.1} parent=51 // pred_region
          %371 = dma.done [#allocation10], 128
        $region68: #{tpu_custom_call.1} parent=51 // pred_fallthru
          _
        %s372 = sand.u32 %s40, 1
        %s373 = scalar_lea.sflag [#allocation4], %s372
        %s374 = sand.u32 %s40, 1
        %s375 = smul.addr %s374, 64
        %s376 = scalar_lea.vmem [#allocation3], %s375
        %p377 = pneg %p53
        %p378 = pneg %p50
        %p379 = pneg %p74
        %p380 = pneg %p71
        %p381 = pneg %p95
        %p382 = pneg %p92
        %p383 = pneg %p116
        %p384 = pneg %p113
        %p385 = pneg %p137
        %p386 = pneg %p134
        %p387 = pneg %p158
        %p388 = pneg %p155
        %p389 = pneg %p179
        %p390 = pneg %p176
        %p391 = pneg %p200
        %p392 = pneg %p197
        %p393 = pneg %p226
        %p394 = pneg %p223
        %s395 = sand.u32 %s213, 1
        %s396 = scalar_lea.sflag [#allocation5], %s395
        %s397 = sand.u32 %s213, 1
        %s398 = smul.addr %s397, 64
        %s399 = scalar_lea.vmem [#allocation11], %s398
        %p400 = pneg %p252
        %p401 = pneg %p249
        %s402 = sand.u32 %s239, 1
        %s403 = scalar_lea.sflag [#allocation13], %s402
        %s404 = sand.u32 %s239, 1
        %s405 = smul.addr %s404, 64
        %s406 = scalar_lea.vmem [#allocation12], %s405
        %s407 = smul.u32 8, %s32
        %s408 = smul.u32 8, %s32
        %s409 = smul.u32 8, %s32
        %v411 = vld [vmem:[%s1] sm:$0xf]
        %v412 = vld [vmem:[%s1 + $0x4] sm:$0xf]
        %v413 = vld [vmem:[%s1 + $0x8] sm:$0xf]
        %v414 = vld [vmem:[%s1 + $0xc] sm:$0xf]
        %v415 = vld [vmem:[#allocation6] sm:$0xf]
        %v416 = vld [vmem:[#allocation6 + $0x4] sm:$0xf]
        %v417 = vld [vmem:[%s5] sm:$0xf]
        %v418 = vld [vmem:[%s5 + $0x4] sm:$0xf]
        %v419 = vld [vmem:[%s5 + $0x8] sm:$0xf]
        %v420 = vld [vmem:[%s5 + $0xc] sm:$0xf]
        %v421 = vld [vmem:[%s6] sm:$0xf]
        %v422 = vld [vmem:[%s6 + $0x4] sm:$0xf]
        %v423 = vld [vmem:[%s6 + $0x8] sm:$0xf]
        %v424 = vld [vmem:[%s6 + $0xc] sm:$0xf]
        %v425 = vld [vmem:[#allocation8] sm:$0xf]
        %v426 = vld [vmem:[#allocation8 + $0x4] sm:$0xf]
        %v427 = vunpack.c.l.bf16 %v425
        %v428 = vunpack.c.l.bf16 %v426
        %v429 = vld [vmem:[#allocation9] sm:$0xf]
        %v430 = vld [vmem:[#allocation9 + $0x4] sm:$0xf]
        %v431 = vunpack.c.l.bf16 %v429
        %v432 = vunpack.c.l.bf16 %v430
        %v433 = vld [vmem:[%s7] sm:$0x1]
        %v434 = vld [vmem:[%s355] sm:$0xf]
        %v435 = vld [vmem:[%s355 + $0x4] sm:$0xf]
        %v440 = vunpack.c.l.b16 %v411
        %v441 = vunpack.c.l.b16 %v412
        %v442 = vunpack.c.l.b16 %v413
        %v443 = vunpack.c.l.b16 %v414
        %v444 = vpack.c.b16 %v441, %v440
        %v445 = vpack.c.b16 %v443, %v442
        %v448 = vunpack.c.l.b16 %v434
        %v449 = vunpack.c.l.b16 %v435
        %v450 = vpack.c.b16 %v449, %v448
        %vm452 = vcmask 130048
        %v454 = vsel %vm452, %v444, 0
        %v457 = vsel %vm452, %v445, 0
        %459 = vmatprep.subr.bf16.mxu0 0
        %460 = vmatpush1.bf16.msra.mxu0 %v450
        %461 = vmatprep.subr.bf16.mxu0 0
        %462 = vmatpush1.bf16.msra.mxu0 0
        %463 = vmatprep.subr.bf16.mxu0 0
        %464 = vmatpush1.bf16.msra.mxu0 0
        %465 = vmatprep.subr.bf16.mxu0 0
        %466 = vmatpush1.bf16.msra.mxu0 0
        %467 = vmatprep.subr.bf16.mxu0 0
        %468 = vmatpush1.bf16.msra.mxu0 0
        %469 = vmatprep.subr.bf16.mxu0 0
        %470 = vmatpush1.bf16.msra.mxu0 0
        %471 = vmatprep.subr.bf16.mxu0 0
        %472 = vmatpush1.bf16.msra.mxu0 0
        %473 = vmatprep.subr.bf16.mxu0 0
        %474 = vmatpush1.bf16.msra.mxu0 0
        %475 = vmatprep.subr.bf16.mxu0 0
        %476 = vmatpush1.bf16.msra.mxu0 0
        %477 = vmatprep.subr.bf16.mxu0 0
        %478 = vmatpush1.bf16.msra.mxu0 0
        %479 = vmatprep.subr.bf16.mxu0 0
        %480 = vmatpush1.bf16.msra.mxu0 0
        %481 = vmatprep.subr.bf16.mxu0 0
        %482 = vmatpush1.bf16.msra.mxu0 0
        %483 = vmatprep.subr.bf16.mxu0 0
        %484 = vmatpush1.bf16.msra.mxu0 0
        %485 = vmatprep.subr.bf16.mxu0 0
        %486 = vmatpush1.bf16.msra.mxu0 0
        %487 = vmatprep.subr.bf16.mxu0 0
        %488 = vmatpush1.bf16.msra.mxu0 0
        %489 = vmatprep.subr.bf16.mxu0 0
        %490 = vmatpush1.bf16.msra.mxu0 0
        %491 = vmatprep.mubr.bf16.mxu0 0
        %492 = vmatmul.mubr.bf16.gmra.mrb[0].mxu0 %v454
        %v493 = vpop.f32.mrb[0].mxu0
        %v494 = vadd.f32 0.0, %v493
        %v495 = vpop.f32.mrb[0].mxu0
        %v496 = vpop.f32.mrb[0].mxu0
        %v497 = vadd.f32 0.0, %v496
        %v498 = vpop.f32.mrb[0].mxu0
        %499 = vmatprep.mubr.bf16.mxu0 0
        %500 = vmatmul.mubr.bf16.gmra.mrb[0].mxu0 %v457
        %v501 = vpop.f32.mrb[0].mxu0
        %v502 = vadd.f32 0.0, %v501
        %v503 = vpop.f32.mrb[0].mxu0
        %v504 = vpop.f32.mrb[0].mxu0
        %v505 = vadd.f32 0.0, %v504
        %v506 = vpop.f32.mrb[0].mxu0
        %507 = vdwg.mxu0
        %v508 = vmul.f32 %v494, %v427
        %v509 = vmul.f32 %v497, %v428
        %v510 = vmul.f32 %v502, %v431
        %v511 = vmul.f32 %v505, %v432
        %v512 = vsub.f32 %v508, %v510
        %v513 = vsub.f32 %v509, %v511
        %v514 = vpack.c.bf16 %v513, %v512
        %vm515 = vcmask 261120
        %516 = vst.msk [vmem:[#allocation2] sm:$0xff] %vm515, %v514
        %v517 = vmul.f32 %v494, %v431
        %v518 = vmul.f32 %v497, %v432
        %v519 = vmul.f32 %v502, %v427
        %v520 = vmul.f32 %v505, %v428
        %v521 = vadd.f32 %v517, %v519
        %v522 = vadd.f32 %v518, %v520
        %v523 = vpack.c.bf16 %v522, %v521
        %524 = vst.msk [vmem:[#allocation2 + $0x8] sm:$0xff] %vm515, %v523
        %v525 = vld [vmem:[#allocation2] sm:$0xff]
        %v526 = vld [vmem:[#allocation2 + $0x8] sm:$0xff]
        %v529 = vunpack.c.l.b16 %v415
        %v530 = vunpack.c.l.b16 %v416
        %v531 = vpack.c.b16 %v530, %v529
        %v533 = vsel %vm515, %v531, 0
        %535 = vmatprep.subr.bf16.mxu0 0
        %536 = vmatpush1.bf16.msra.mxu0 %v525
        %537 = vmatprep.subr.bf16.mxu0 0
        %538 = vmatpush1.bf16.msra.mxu0 %v526
        %539 = vmatprep.subr.bf16.mxu0 0
        %540 = vmatpush1.bf16.msra.mxu0 0
        %541 = vmatprep.subr.bf16.mxu0 0
        %542 = vmatpush1.bf16.msra.mxu0 0
        %543 = vmatprep.subr.bf16.mxu0 0
        %544 = vmatpush1.bf16.msra.mxu0 0
        %545 = vmatprep.subr.bf16.mxu0 0
        %546 = vmatpush1.bf16.msra.mxu0 0
        %547 = vmatprep.subr.bf16.mxu0 0
        %548 = vmatpush1.bf16.msra.mxu0 0
        %549 = vmatprep.subr.bf16.mxu0 0
        %550 = vmatpush1.bf16.msra.mxu0 0
        %551 = vmatprep.subr.bf16.mxu0 0
        %552 = vmatpush1.bf16.msra.mxu0 0
        %553 = vmatprep.subr.bf16.mxu0 0
        %554 = vmatpush1.bf16.msra.mxu0 0
        %555 = vmatprep.subr.bf16.mxu0 0
        %556 = vmatpush1.bf16.msra.mxu0 0
        %557 = vmatprep.subr.bf16.mxu0 0
        %558 = vmatpush1.bf16.msra.mxu0 0
        %559 = vmatprep.subr.bf16.mxu0 0
        %560 = vmatpush1.bf16.msra.mxu0 0
        %561 = vmatprep.subr.bf16.mxu0 0
        %562 = vmatpush1.bf16.msra.mxu0 0
        %563 = vmatprep.subr.bf16.mxu0 0
        %564 = vmatpush1.bf16.msra.mxu0 0
        %565 = vmatprep.subr.bf16.mxu0 0
        %566 = vmatpush1.bf16.msra.mxu0 0
        %567 = vmatprep.mubr.bf16.mxu0 0
        %568 = vmatmul.mubr.bf16.gmra.mrb[0].mxu0 %v533
        %v569 = vpop.f32.mrb[0].mxu0
        %v570 = vadd.f32 0.0, %v569
        %v571 = vpop.f32.mrb[0].mxu0
        %v572 = vpop.f32.mrb[0].mxu0
        %v573 = vadd.f32 0.0, %v572
        %v574 = vpop.f32.mrb[0].mxu0
        %575 = vdwg.mxu0
        %v576 = vpack.c.bf16 %v573, %v570
        %v581 = vunpack.c.l.b16 %v421
        %v582 = vunpack.c.l.b16 %v422
        %v583 = vunpack.c.l.b16 %v423
        %v584 = vunpack.c.l.b16 %v424
        %v585 = vpack.c.b16 %v582, %v581
        %v586 = vpack.c.b16 %v584, %v583
        %v590 = vsel %vm515, %v450, 0
        %592 = vmatprep.subr.bf16.mxu0 0
        %593 = vmatpush1.bf16.msra.mxu0 %v585
        %594 = vmatprep.subr.bf16.mxu0 0
        %595 = vmatpush1.bf16.msra.mxu0 %v586
        %596 = vmatprep.subr.bf16.mxu0 0
        %597 = vmatpush1.bf16.msra.mxu0 0
        %598 = vmatprep.subr.bf16.mxu0 0
        %599 = vmatpush1.bf16.msra.mxu0 0
        %600 = vmatprep.subr.bf16.mxu0 0
        %601 = vmatpush1.bf16.msra.mxu0 0
        %602 = vmatprep.subr.bf16.mxu0 0
        %603 = vmatpush1.bf16.msra.mxu0 0
        %604 = vmatprep.subr.bf16.mxu0 0
        %605 = vmatpush1.bf16.msra.mxu0 0
        %606 = vmatprep.subr.bf16.mxu0 0
        %607 = vmatpush1.bf16.msra.mxu0 0
        %608 = vmatprep.subr.bf16.mxu0 0
        %609 = vmatpush1.bf16.msra.mxu0 0
        %610 = vmatprep.subr.bf16.mxu0 0
        %611 = vmatpush1.bf16.msra.mxu0 0
        %612 = vmatprep.subr.bf16.mxu0 0
        %613 = vmatpush1.bf16.msra.mxu0 0
        %614 = vmatprep.subr.bf16.mxu0 0
        %615 = vmatpush1.bf16.msra.mxu0 0
        %616 = vmatprep.subr.bf16.mxu0 0
        %617 = vmatpush1.bf16.msra.mxu0 0
        %618 = vmatprep.subr.bf16.mxu0 0
        %619 = vmatpush1.bf16.msra.mxu0 0
        %620 = vmatprep.subr.bf16.mxu0 0
        %621 = vmatpush1.bf16.msra.mxu0 0
        %622 = vmatprep.subr.bf16.mxu0 0
        %623 = vmatpush1.bf16.msra.mxu0 0
        %624 = vmatprep.mubr.bf16.mxu0 0
        %625 = vmatmul.mubr.bf16.gmra.mrb[0].mxu0 %v590
        %v626 = vpop.f32.mrb[0].mxu0
        %v627 = vadd.f32 0.0, %v626
        %v628 = vpop.f32.mrb[0].mxu0
        %v629 = vpop.f32.mrb[0].mxu0
        %v630 = vadd.f32 0.0, %v629
        %v631 = vpop.f32.mrb[0].mxu0
        %632 = vdwg.mxu0
        %v637 = vunpack.c.l.b16 %v417
        %v638 = vunpack.c.l.b16 %v418
        %v639 = vunpack.c.l.b16 %v419
        %v640 = vunpack.c.l.b16 %v420
        %v641 = vpack.c.b16 %v638, %v637
        %v642 = vpack.c.b16 %v640, %v639
        %v646 = vsel %vm515, %v576, 0
        %648 = vmatprep.subr.bf16.mxu0 0
        %649 = vmatpush1.bf16.msra.mxu0 %v641
        %650 = vmatprep.subr.bf16.mxu0 0
        %651 = vmatpush1.bf16.msra.mxu0 %v642
        %652 = vmatprep.subr.bf16.mxu0 0
        %653 = vmatpush1.bf16.msra.mxu0 0
        %654 = vmatprep.subr.bf16.mxu0 0
        %655 = vmatpush1.bf16.msra.mxu0 0
        %656 = vmatprep.subr.bf16.mxu0 0
        %657 = vmatpush1.bf16.msra.mxu0 0
        %658 = vmatprep.subr.bf16.mxu0 0
        %659 = vmatpush1.bf16.msra.mxu0 0
        %660 = vmatprep.subr.bf16.mxu0 0
        %661 = vmatpush1.bf16.msra.mxu0 0
        %662 = vmatprep.subr.bf16.mxu0 0
        %663 = vmatpush1.bf16.msra.mxu0 0
        %664 = vmatprep.subr.bf16.mxu0 0
        %665 = vmatpush1.bf16.msra.mxu0 0
        %666 = vmatprep.subr.bf16.mxu0 0
        %667 = vmatpush1.bf16.msra.mxu0 0
        %668 = vmatprep.subr.bf16.mxu0 0
        %669 = vmatpush1.bf16.msra.mxu0 0
        %670 = vmatprep.subr.bf16.mxu0 0
        %671 = vmatpush1.bf16.msra.mxu0 0
        %672 = vmatprep.subr.bf16.mxu0 0
        %673 = vmatpush1.bf16.msra.mxu0 0
        %674 = vmatprep.subr.bf16.mxu0 0
        %675 = vmatpush1.bf16.msra.mxu0 0
        %676 = vmatprep.subr.bf16.mxu0 0
        %677 = vmatpush1.bf16.msra.mxu0 0
        %678 = vmatprep.subr.bf16.mxu0 0
        %679 = vmatpush1.bf16.msra.mxu0 0
        %680 = vmatprep.mubr.bf16.mxu0 0
        %681 = vmatmul.mubr.bf16.gmra.mrb[0].mxu0 %v646
        %v682 = vpop.f32.mrb[0].mxu0
        %v683 = vadd.f32 %v627, %v682
        %v684 = vpop.f32.mrb[0].mxu0
        %v685 = vpop.f32.mrb[0].mxu0
        %v686 = vadd.f32 %v630, %v685
        %v687 = vpop.f32.mrb[0].mxu0
        %688 = vdwg.mxu0
        %v690 = vlaneseq
        %v691 = vshrl.u32 %v690, 7
        %v692 = vsub.s32 0, %v691
        %v693 = vrot.slane %v433, %v692
        %v695 = vadd.f32 %v683, %v693
        %v696 = vadd.f32 %v686, %v693
        %vm697 = vcmp.gt.f32.partialorder %v695, 0.0
        %vm698 = vcmp.gt.f32.partialorder %v696, 0.0
        %v699 = vmin.f32 %v695, 0.0
        %v700 = vmin.f32 %v696, 0.0
        %v701 = vmul.f32 %v699, 1.442695
        %v702 = vpow.pop %v701
        %v703 = vmul.f32 %v700, 1.442695
        %v704 = vpow.pop %v703
        %v705 = vsub.f32 %v702, 1.0
        %v706 = vsub.f32 %v704, 1.0
        %v707 = vsel %vm697, %v695, %v705
        %v708 = vsel %vm698, %v696, %v706
        %v709 = vpack.c.bf16 %v708, %v707
        %v711 = vunpack.c.l.b16 %v709
        %v712 = vunpack.c.h.b16 %v709
        %v713 = vpack.c.b16 %v711, %v711
        %v714 = vpack.c.b16 %v712, %v712
        %vm717 = vcmask 257024
        %718 = vst.msk [vmem:[%s399] sm:$0xf] %vm717, %v713
        %719 = vst.msk [vmem:[%s399 + $0x4] sm:$0xf] %vm717, %v714
        %vm720 = vcmp.gt.f32.partialorder %v570, 0.0
        %vm721 = vcmp.gt.f32.partialorder %v573, 0.0
        %v722 = vmin.f32 %v570, 0.0
        %v723 = vmin.f32 %v573, 0.0
        %v724 = vmul.f32 %v722, 1.442695
        %v725 = vpow.pop %v724
        %v726 = vmul.f32 %v723, 1.442695
        %v727 = vpow.pop %v726
        %v728 = vsub.f32 %v725, 1.0
        %v729 = vsub.f32 %v727, 1.0
        %v730 = vsel %vm720, %v570, %v728
        %v731 = vsel %vm721, %v573, %v729
        %v732 = vpack.c.bf16 %v731, %v730
        %v734 = vunpack.c.l.b16 %v732
        %v735 = vunpack.c.h.b16 %v732
        %v736 = vpack.c.b16 %v734, %v734
        %v737 = vpack.c.b16 %v735, %v735
        %740 = vst.msk [vmem:[%s406] sm:$0xf] %vm717, %v736
        %741 = vst.msk [vmem:[%s406 + $0x4] sm:$0xf] %vm717, %v737
        %s742 = scalar_lea.vmem %s355, 8 [#allocation3]
        %v743 = vld [vmem:[%s742] sm:$0xf]
        %v744 = vld [vmem:[%s742 + $0x4] sm:$0xf]
        %v747 = vunpack.c.l.b16 %v743
        %v748 = vunpack.c.l.b16 %v744
        %v749 = vpack.c.b16 %v748, %v747
        %751 = vmatprep.subr.bf16.mxu0 0
        %752 = vmatpush1.bf16.msra.mxu0 %v749
        %753 = vmatprep.subr.bf16.mxu0 0
        %754 = vmatpush1.bf16.msra.mxu0 0
        %755 = vmatprep.subr.bf16.mxu0 0
        %756 = vmatpush1.bf16.msra.mxu0 0
        %757 = vmatprep.subr.bf16.mxu0 0
        %758 = vmatpush1.bf16.msra.mxu0 0
        %759 = vmatprep.subr.bf16.mxu0 0
        %760 = vmatpush1.bf16.msra.mxu0 0
        %761 = vmatprep.subr.bf16.mxu0 0
        %762 = vmatpush1.bf16.msra.mxu0 0
        %763 = vmatprep.subr.bf16.mxu0 0
        %764 = vmatpush1.bf16.msra.mxu0 0
        %765 = vmatprep.subr.bf16.mxu0 0
        %766 = vmatpush1.bf16.msra.mxu0 0
        %767 = vmatprep.subr.bf16.mxu0 0
        %768 = vmatpush1.bf16.msra.mxu0 0
        %769 = vmatprep.subr.bf16.mxu0 0
        %770 = vmatpush1.bf16.msra.mxu0 0
        %771 = vmatprep.subr.bf16.mxu0 0
        %772 = vmatpush1.bf16.msra.mxu0 0
        %773 = vmatprep.subr.bf16.mxu0 0
        %774 = vmatpush1.bf16.msra.mxu0 0
        %775 = vmatprep.subr.bf16.mxu0 0
        %776 = vmatpush1.bf16.msra.mxu0 0
        %777 = vmatprep.subr.bf16.mxu0 0
        %778 = vmatpush1.bf16.msra.mxu0 0
        %779 = vmatprep.subr.bf16.mxu0 0
        %780 = vmatpush1.bf16.msra.mxu0 0
        %781 = vmatprep.subr.bf16.mxu0 0
        %782 = vmatpush1.bf16.msra.mxu0 0
        %783 = vmatprep.mubr.bf16.mxu0 0
        %784 = vmatmul.mubr.bf16.gmra.mrb[0].mxu0 %v454
        %v785 = vpop.f32.mrb[0].mxu0
        %v786 = vadd.f32 0.0, %v785
        %v787 = vpop.f32.mrb[0].mxu0
        %v788 = vpop.f32.mrb[0].mxu0
        %v789 = vadd.f32 0.0, %v788
        %v790 = vpop.f32.mrb[0].mxu0
        %791 = vmatprep.mubr.bf16.mxu0 0
        %792 = vmatmul.mubr.bf16.gmra.mrb[0].mxu0 %v457
        %v793 = vpop.f32.mrb[0].mxu0
        %v794 = vadd.f32 0.0, %v793
        %v795 = vpop.f32.mrb[0].mxu0
        %v796 = vpop.f32.mrb[0].mxu0
        %v797 = vadd.f32 0.0, %v796
        %v798 = vpop.f32.mrb[0].mxu0
        %799 = vdwg.mxu0
        %v800 = vmul.f32 %v786, %v427
        %v801 = vmul.f32 %v789, %v428
        %v802 = vmul.f32 %v794, %v431
        %v803 = vmul.f32 %v797, %v432
        %v804 = vsub.f32 %v800, %v802
        %v805 = vsub.f32 %v801, %v803
        %v806 = vpack.c.bf16 %v805, %v804
        %807 = vst.msk [vmem:[#allocation2] sm:$0xff] %vm515, %v806
        %v808 = vmul.f32 %v786, %v431
        %v809 = vmul.f32 %v789, %v432
        %v810 = vmul.f32 %v794, %v427
        %v811 = vmul.f32 %v797, %v428
        %v812 = vadd.f32 %v808, %v810
        %v813 = vadd.f32 %v809, %v811
        %v814 = vpack.c.bf16 %v813, %v812
        %815 = vst.msk [vmem:[#allocation2 + $0x8] sm:$0xff] %vm515, %v814
        %v816 = vld [vmem:[#allocation2] sm:$0xff]
        %v817 = vld [vmem:[#allocation2 + $0x8] sm:$0xff]
        %818 = vmatprep.subr.bf16.mxu0 0
        %819 = vmatpush1.bf16.msra.mxu0 %v816
        %820 = vmatprep.subr.bf16.mxu0 0
        %821 = vmatpush1.bf16.msra.mxu0 %v817
        %822 = vmatprep.subr.bf16.mxu0 0
        %823 = vmatpush1.bf16.msra.mxu0 0
        %824 = vmatprep.subr.bf16.mxu0 0
        %825 = vmatpush1.bf16.msra.mxu0 0
        %826 = vmatprep.subr.bf16.mxu0 0
        %827 = vmatpush1.bf16.msra.mxu0 0
        %828 = vmatprep.subr.bf16.mxu0 0
        %829 = vmatpush1.bf16.msra.mxu0 0
        %830 = vmatprep.subr.bf16.mxu0 0
        %831 = vmatpush1.bf16.msra.mxu0 0
        %832 = vmatprep.subr.bf16.mxu0 0
        %833 = vmatpush1.bf16.msra.mxu0 0
        %834 = vmatprep.subr.bf16.mxu0 0
        %835 = vmatpush1.bf16.msra.mxu0 0
        %836 = vmatprep.subr.bf16.mxu0 0
        %837 = vmatpush1.bf16.msra.mxu0 0
        %838 = vmatprep.subr.bf16.mxu0 0
        %839 = vmatpush1.bf16.msra.mxu0 0
        %840 = vmatprep.subr.bf16.mxu0 0
        %841 = vmatpush1.bf16.msra.mxu0 0
        %842 = vmatprep.subr.bf16.mxu0 0
        %843 = vmatpush1.bf16.msra.mxu0 0
        %844 = vmatprep.subr.bf16.mxu0 0
        %845 = vmatpush1.bf16.msra.mxu0 0
        %846 = vmatprep.subr.bf16.mxu0 0
        %847 = vmatpush1.bf16.msra.mxu0 0
        %848 = vmatprep.subr.bf16.mxu0 0
        %849 = vmatpush1.bf16.msra.mxu0 0
        %850 = vmatprep.mubr.bf16.mxu0 0
        %851 = vmatmul.mubr.bf16.gmra.mrb[0].mxu0 %v533
        %v852 = vpop.f32.mrb[0].mxu0
        %v853 = vadd.f32 0.0, %v852
        %v854 = vpop.f32.mrb[0].mxu0
        %v855 = vpop.f32.mrb[0].mxu0
        %v856 = vadd.f32 0.0, %v855
        %v857 = vpop.f32.mrb[0].mxu0
        %858 = vdwg.mxu0
        %v859 = vpack.c.bf16 %v856, %v853
        %v861 = vsel %vm515, %v749, 0
        %863 = vmatprep.subr.bf16.mxu0 0
        %864 = vmatpush1.bf16.msra.mxu0 %v585
        %865 = vmatprep.subr.bf16.mxu0 0
        %866 = vmatpush1.bf16.msra.mxu0 %v586
        %867 = vmatprep.subr.bf16.mxu0 0
        %868 = vmatpush1.bf16.msra.mxu0 0
        %869 = vmatprep.subr.bf16.mxu0 0
        %870 = vmatpush1.bf16.msra.mxu0 0
        %871 = vmatprep.subr.bf16.mxu0 0
        %872 = vmatpush1.bf16.msra.mxu0 0
        %873 = vmatprep.subr.bf16.mxu0 0
        %874 = vmatpush1.bf16.msra.mxu0 0
        %875 = vmatprep.subr.bf16.mxu0 0
        %876 = vmatpush1.bf16.msra.mxu0 0
        %877 = vmatprep.subr.bf16.mxu0 0
        %878 = vmatpush1.bf16.msra.mxu0 0
        %879 = vmatprep.subr.bf16.mxu0 0
        %880 = vmatpush1.bf16.msra.mxu0 0
        %881 = vmatprep.subr.bf16.mxu0 0
        %882 = vmatpush1.bf16.msra.mxu0 0
        %883 = vmatprep.subr.bf16.mxu0 0
        %884 = vmatpush1.bf16.msra.mxu0 0
        %885 = vmatprep.subr.bf16.mxu0 0
        %886 = vmatpush1.bf16.msra.mxu0 0
        %887 = vmatprep.subr.bf16.mxu0 0
        %888 = vmatpush1.bf16.msra.mxu0 0
        %889 = vmatprep.subr.bf16.mxu0 0
        %890 = vmatpush1.bf16.msra.mxu0 0
        %891 = vmatprep.subr.bf16.mxu0 0
        %892 = vmatpush1.bf16.msra.mxu0 0
        %893 = vmatprep.subr.bf16.mxu0 0
        %894 = vmatpush1.bf16.msra.mxu0 0
        %895 = vmatprep.mubr.bf16.mxu0 0
        %896 = vmatmul.mubr.bf16.gmra.mrb[0].mxu0 %v861
        %v897 = vpop.f32.mrb[0].mxu0
        %v898 = vadd.f32 0.0, %v897
        %v899 = vpop.f32.mrb[0].mxu0
        %v900 = vpop.f32.mrb[0].mxu0
        %v901 = vadd.f32 0.0, %v900
        %v902 = vpop.f32.mrb[0].mxu0
        %903 = vdwg.mxu0
        %v905 = vsel %vm515, %v859, 0
        %907 = vmatprep.subr.bf16.mxu0 0
        %908 = vmatpush1.bf16.msra.mxu0 %v641
        %909 = vmatprep.subr.bf16.mxu0 0
        %910 = vmatpush1.bf16.msra.mxu0 %v642
        %911 = vmatprep.subr.bf16.mxu0 0
        %912 = vmatpush1.bf16.msra.mxu0 0
        %913 = vmatprep.subr.bf16.mxu0 0
        %914 = vmatpush1.bf16.msra.mxu0 0
        %915 = vmatprep.subr.bf16.mxu0 0
        %916 = vmatpush1.bf16.msra.mxu0 0
        %917 = vmatprep.subr.bf16.mxu0 0
        %918 = vmatpush1.bf16.msra.mxu0 0
        %919 = vmatprep.subr.bf16.mxu0 0
        %920 = vmatpush1.bf16.msra.mxu0 0
        %921 = vmatprep.subr.bf16.mxu0 0
        %922 = vmatpush1.bf16.msra.mxu0 0
        %923 = vmatprep.subr.bf16.mxu0 0
        %924 = vmatpush1.bf16.msra.mxu0 0
        %925 = vmatprep.subr.bf16.mxu0 0
        %926 = vmatpush1.bf16.msra.mxu0 0
        %927 = vmatprep.subr.bf16.mxu0 0
        %928 = vmatpush1.bf16.msra.mxu0 0
        %929 = vmatprep.subr.bf16.mxu0 0
        %930 = vmatpush1.bf16.msra.mxu0 0
        %931 = vmatprep.subr.bf16.mxu0 0
        %932 = vmatpush1.bf16.msra.mxu0 0
        %933 = vmatprep.subr.bf16.mxu0 0
        %934 = vmatpush1.bf16.msra.mxu0 0
        %935 = vmatprep.subr.bf16.mxu0 0
        %936 = vmatpush1.bf16.msra.mxu0 0
        %937 = vmatprep.subr.bf16.mxu0 0
        %938 = vmatpush1.bf16.msra.mxu0 0
        %939 = vmatprep.mubr.bf16.mxu0 0
        %940 = vmatmul.mubr.bf16.gmra.mrb[0].mxu0 %v905
        %v941 = vpop.f32.mrb[0].mxu0
        %v942 = vadd.f32 %v898, %v941
        %v943 = vpop.f32.mrb[0].mxu0
        %v944 = vpop.f32.mrb[0].mxu0
        %v945 = vadd.f32 %v901, %v944
        %v946 = vpop.f32.mrb[0].mxu0
        %947 = vdwg.mxu0
        %v948 = vadd.f32 %v942, %v693
        %v949 = vadd.f32 %v945, %v693
        %vm950 = vcmp.gt.f32.partialorder %v948, 0.0
        %vm951 = vcmp.gt.f32.partialorder %v949, 0.0
        %v952 = vmin.f32 %v948, 0.0
        %v953 = vmin.f32 %v949, 0.0
        %v954 = vmul.f32 %v952, 1.442695
        %v955 = vpow.pop %v954
        %v956 = vmul.f32 %v953, 1.442695
        %v957 = vpow.pop %v956
        %v958 = vsub.f32 %v955, 1.0
        %v959 = vsub.f32 %v957, 1.0
        %v960 = vsel %vm950, %v948, %v958
        %v961 = vsel %vm951, %v949, %v959
        %v962 = vpack.c.bf16 %v961, %v960
        %v964 = vunpack.c.l.b16 %v962
        %v965 = vunpack.c.h.b16 %v962
        %v966 = vpack.c.b16 %v964, %v964
        %v967 = vpack.c.b16 %v965, %v965
        %s970 = scalar_lea.vmem %s399, 8 [#allocation11]
        %971 = vst.msk [vmem:[%s970] sm:$0xf] %vm717, %v966
        %972 = vst.msk [vmem:[%s970 + $0x4] sm:$0xf] %vm717, %v967
        %vm973 = vcmp.gt.f32.partialorder %v853, 0.0
        %vm974 = vcmp.gt.f32.partialorder %v856, 0.0
        %v975 = vmin.f32 %v853, 0.0
        %v976 = vmin.f32 %v856, 0.0
        %v977 = vmul.f32 %v975, 1.442695
        %v978 = vpow.pop %v977
        %v979 = vmul.f32 %v976, 1.442695
        %v980 = vpow.pop %v979
        %v981 = vsub.f32 %v978, 1.0
        %v982 = vsub.f32 %v980, 1.0
        %v983 = vsel %vm973, %v853, %v981
        %v984 = vsel %vm974, %v856, %v982
        %v985 = vpack.c.bf16 %v984, %v983
        %v987 = vunpack.c.l.b16 %v985
        %v988 = vunpack.c.h.b16 %v985
        %v989 = vpack.c.b16 %v987, %v987
        %v990 = vpack.c.b16 %v988, %v988
        %s993 = scalar_lea.vmem %s406, 8 [#allocation12]
        %994 = vst.msk [vmem:[%s993] sm:$0xf] %vm717, %v989
        %995 = vst.msk [vmem:[%s993 + $0x4] sm:$0xf] %vm717, %v990
        %s996 = scalar_lea.vmem %s355, 16 [#allocation3]
        %v997 = vld [vmem:[%s996] sm:$0xf]
        %v998 = vld [vmem:[%s996 + $0x4] sm:$0xf]
        %v1001 = vunpack.c.l.b16 %v997
        %v1002 = vunpack.c.l.b16 %v998
        %v1003 = vpack.c.b16 %v1002, %v1001
        %1005 = vmatprep.subr.bf16.mxu0 0
        %1006 = vmatpush1.bf16.msra.mxu0 %v1003
        %1007 = vmatprep.subr.bf16.mxu0 0
        %1008 = vmatpush1.bf16.msra.mxu0 0
        %1009 = vmatprep.subr.bf16.mxu0 0
        %1010 = vmatpush1.bf16.msra.mxu0 0
        %1011 = vmatprep.subr.bf16.mxu0 0
        %1012 = vmatpush1.bf16.msra.mxu0 0
        %1013 = vmatprep.subr.bf16.mxu0 0
        %1014 = vmatpush1.bf16.msra.mxu0 0
        %1015 = vmatprep.subr.bf16.mxu0 0
        %1016 = vmatpush1.bf16.msra.mxu0 0
        %1017 = vmatprep.subr.bf16.mxu0 0
        %1018 = vmatpush1.bf16.msra.mxu0 0
        %1019 = vmatprep.subr.bf16.mxu0 0
        %1020 = vmatpush1.bf16.msra.mxu0 0
        %1021 = vmatprep.subr.bf16.mxu0 0
        %1022 = vmatpush1.bf16.msra.mxu0 0
        %1023 = vmatprep.subr.bf16.mxu0 0
        %1024 = vmatpush1.bf16.msra.mxu0 0
        %1025 = vmatprep.subr.bf16.mxu0 0
        %1026 = vmatpush1.bf16.msra.mxu0 0
        %1027 = vmatprep.subr.bf16.mxu0 0
        %1028 = vmatpush1.bf16.msra.mxu0 0
        %1029 = vmatprep.subr.bf16.mxu0 0
        %1030 = vmatpush1.bf16.msra.mxu0 0
        %1031 = vmatprep.subr.bf16.mxu0 0
        %1032 = vmatpush1.bf16.msra.mxu0 0
        %1033 = vmatprep.subr.bf16.mxu0 0
        %1034 = vmatpush1.bf16.msra.mxu0 0
        %1035 = vmatprep.subr.bf16.mxu0 0
        %1036 = vmatpush1.bf16.msra.mxu0 0
        %1037 = vmatprep.mubr.bf16.mxu0 0
        %1038 = vmatmul.mubr.bf16.gmra.mrb[0].mxu0 %v454
        %v1039 = vpop.f32.mrb[0].mxu0
        %v1040 = vadd.f32 0.0, %v1039
        %v1041 = vpop.f32.mrb[0].mxu0
        %v1042 = vpop.f32.mrb[0].mxu0
        %v1043 = vadd.f32 0.0, %v1042
        %v1044 = vpop.f32.mrb[0].mxu0
        %1045 = vmatprep.mubr.bf16.mxu0 0
        %1046 = vmatmul.mubr.bf16.gmra.mrb[0].mxu0 %v457
        %v1047 = vpop.f32.mrb[0].mxu0
        %v1048 = vadd.f32 0.0, %v1047
        %v1049 = vpop.f32.mrb[0].mxu0
        %v1050 = vpop.f32.mrb[0].mxu0
        %v1051 = vadd.f32 0.0, %v1050
        %v1052 = vpop.f32.mrb[0].mxu0
        %1053 = vdwg.mxu0
        %v1054 = vmul.f32 %v1040, %v427
        %v1055 = vmul.f32 %v1043, %v428
        %v1056 = vmul.f32 %v1048, %v431
        %v1057 = vmul.f32 %v1051, %v432
        %v1058 = vsub.f32 %v1054, %v1056
        %v1059 = vsub.f32 %v1055, %v1057
        %v1060 = vpack.c.bf16 %v1059, %v1058
        %1061 = vst.msk [vmem:[#allocation2] sm:$0xff] %vm515, %v1060
        %v1062 = vmul.f32 %v1040, %v431
        %v1063 = vmul.f32 %v1043, %v432
        %v1064 = vmul.f32 %v1048, %v427
        %v1065 = vmul.f32 %v1051, %v428
        %v1066 = vadd.f32 %v1062, %v1064
        %v1067 = vadd.f32 %v1063, %v1065
        %v1068 = vpack.c.bf16 %v1067, %v1066
        %1069 = vst.msk [vmem:[#allocation2 + $0x8] sm:$0xff] %vm515, %v1068
        %v1070 = vld [vmem:[#allocation2] sm:$0xff]
        %v1071 = vld [vmem:[#allocation2 + $0x8] sm:$0xff]
        %1072 = vmatprep.subr.bf16.mxu0 0
        %1073 = vmatpush1.bf16.msra.mxu0 %v1070
        %1074 = vmatprep.subr.bf16.mxu0 0
        %1075 = vmatpush1.bf16.msra.mxu0 %v1071
        %1076 = vmatprep.subr.bf16.mxu0 0
        %1077 = vmatpush1.bf16.msra.mxu0 0
        %1078 = vmatprep.subr.bf16.mxu0 0
        %1079 = vmatpush1.bf16.msra.mxu0 0
        %1080 = vmatprep.subr.bf16.mxu0 0
        %1081 = vmatpush1.bf16.msra.mxu0 0
        %1082 = vmatprep.subr.bf16.mxu0 0
        %1083 = vmatpush1.bf16.msra.mxu0 0
        %1084 = vmatprep.subr.bf16.mxu0 0
        %1085 = vmatpush1.bf16.msra.mxu0 0
        %1086 = vmatprep.subr.bf16.mxu0 0
        %1087 = vmatpush1.bf16.msra.mxu0 0
        %1088 = vmatprep.subr.bf16.mxu0 0
        %1089 = vmatpush1.bf16.msra.mxu0 0
        %1090 = vmatprep.subr.bf16.mxu0 0
        %1091 = vmatpush1.bf16.msra.mxu0 0
        %1092 = vmatprep.subr.bf16.mxu0 0
        %1093 = vmatpush1.bf16.msra.mxu0 0
        %1094 = vmatprep.subr.bf16.mxu0 0
        %1095 = vmatpush1.bf16.msra.mxu0 0
        %1096 = vmatprep.subr.bf16.mxu0 0
        %1097 = vmatpush1.bf16.msra.mxu0 0
        %1098 = vmatprep.subr.bf16.mxu0 0
        %1099 = vmatpush1.bf16.msra.mxu0 0
        %1100 = vmatprep.subr.bf16.mxu0 0
        %1101 = vmatpush1.bf16.msra.mxu0 0
        %1102 = vmatprep.subr.bf16.mxu0 0
        %1103 = vmatpush1.bf16.msra.mxu0 0
        %1104 = vmatprep.mubr.bf16.mxu0 0
        %1105 = vmatmul.mubr.bf16.gmra.mrb[0].mxu0 %v533
        %v1106 = vpop.f32.mrb[0].mxu0
        %v1107 = vadd.f32 0.0, %v1106
        %v1108 = vpop.f32.mrb[0].mxu0
        %v1109 = vpop.f32.mrb[0].mxu0
        %v1110 = vadd.f32 0.0, %v1109
        %v1111 = vpop.f32.mrb[0].mxu0
        %1112 = vdwg.mxu0
        %v1113 = vpack.c.bf16 %v1110, %v1107
        %v1115 = vsel %vm515, %v1003, 0
        %1117 = vmatprep.subr.bf16.mxu0 0
        %1118 = vmatpush1.bf16.msra.mxu0 %v585
        %1119 = vmatprep.subr.bf16.mxu0 0
        %1120 = vmatpush1.bf16.msra.mxu0 %v586
        %1121 = vmatprep.subr.bf16.mxu0 0
        %1122 = vmatpush1.bf16.msra.mxu0 0
        %1123 = vmatprep.subr.bf16.mxu0 0
        %1124 = vmatpush1.bf16.msra.mxu0 0
        %1125 = vmatprep.subr.bf16.mxu0 0
        %1126 = vmatpush1.bf16.msra.mxu0 0
        %1127 = vmatprep.subr.bf16.mxu0 0
        %1128 = vmatpush1.bf16.msra.mxu0 0
        %1129 = vmatprep.subr.bf16.mxu0 0
        %1130 = vmatpush1.bf16.msra.mxu0 0
        %1131 = vmatprep.subr.bf16.mxu0 0
        %1132 = vmatpush1.bf16.msra.mxu0 0
        %1133 = vmatprep.subr.bf16.mxu0 0
        %1134 = vmatpush1.bf16.msra.mxu0 0
        %1135 = vmatprep.subr.bf16.mxu0 0
        %1136 = vmatpush1.bf16.msra.mxu0 0
        %1137 = vmatprep.subr.bf16.mxu0 0
        %1138 = vmatpush1.bf16.msra.mxu0 0
        %1139 = vmatprep.subr.bf16.mxu0 0
        %1140 = vmatpush1.bf16.msra.mxu0 0
        %1141 = vmatprep.subr.bf16.mxu0 0
        %1142 = vmatpush1.bf16.msra.mxu0 0
        %1143 = vmatprep.subr.bf16.mxu0 0
        %1144 = vmatpush1.bf16.msra.mxu0 0
        %1145 = vmatprep.subr.bf16.mxu0 0
        %1146 = vmatpush1.bf16.msra.mxu0 0
        %1147 = vmatprep.subr.bf16.mxu0 0
        %1148 = vmatpush1.bf16.msra.mxu0 0
        %1149 = vmatprep.mubr.bf16.mxu0 0
        %1150 = vmatmul.mubr.bf16.gmra.mrb[0].mxu0 %v1115
        %v1151 = vpop.f32.mrb[0].mxu0
        %v1152 = vadd.f32 0.0, %v1151
        %v1153 = vpop.f32.mrb[0].mxu0
        %v1154 = vpop.f32.mrb[0].mxu0
        %v1155 = vadd.f32 0.0, %v1154
        %v1156 = vpop.f32.mrb[0].mxu0
        %1157 = vdwg.mxu0
        %v1159 = vsel %vm515, %v1113, 0
        %1161 = vmatprep.subr.bf16.mxu0 0
        %1162 = vmatpush1.bf16.msra.mxu0 %v641
        %1163 = vmatprep.subr.bf16.mxu0 0
        %1164 = vmatpush1.bf16.msra.mxu0 %v642
        %1165 = vmatprep.subr.bf16.mxu0 0
        %1166 = vmatpush1.bf16.msra.mxu0 0
        %1167 = vmatprep.subr.bf16.mxu0 0
        %1168 = vmatpush1.bf16.msra.mxu0 0
        %1169 = vmatprep.subr.bf16.mxu0 0
        %1170 = vmatpush1.bf16.msra.mxu0 0
        %1171 = vmatprep.subr.bf16.mxu0 0
        %1172 = vmatpush1.bf16.msra.mxu0 0
        %1173 = vmatprep.subr.bf16.mxu0 0
        %1174 = vmatpush1.bf16.msra.mxu0 0
        %1175 = vmatprep.subr.bf16.mxu0 0
        %1176 = vmatpush1.bf16.msra.mxu0 0
        %1177 = vmatprep.subr.bf16.mxu0 0
        %1178 = vmatpush1.bf16.msra.mxu0 0
        %1179 = vmatprep.subr.bf16.mxu0 0
        %1180 = vmatpush1.bf16.msra.mxu0 0
        %1181 = vmatprep.subr.bf16.mxu0 0
        %1182 = vmatpush1.bf16.msra.mxu0 0
        %1183 = vmatprep.subr.bf16.mxu0 0
        %1184 = vmatpush1.bf16.msra.mxu0 0
        %1185 = vmatprep.subr.bf16.mxu0 0
        %1186 = vmatpush1.bf16.msra.mxu0 0
        %1187 = vmatprep.subr.bf16.mxu0 0
        %1188 = vmatpush1.bf16.msra.mxu0 0
        %1189 = vmatprep.subr.bf16.mxu0 0
        %1190 = vmatpush1.bf16.msra.mxu0 0
        %1191 = vmatprep.subr.bf16.mxu0 0
        %1192 = vmatpush1.bf16.msra.mxu0 0
        %1193 = vmatprep.mubr.bf16.mxu0 0
        %1194 = vmatmul.mubr.bf16.gmra.mrb[0].mxu0 %v1159
        %v1195 = vpop.f32.mrb[0].mxu0
        %v1196 = vadd.f32 %v1152, %v1195
        %v1197 = vpop.f32.mrb[0].mxu0
        %v1198 = vpop.f32.mrb[0].mxu0
        %v1199 = vadd.f32 %v1155, %v1198
        %v1200 = vpop.f32.mrb[0].mxu0
        %1201 = vdwg.mxu0
        %v1202 = vadd.f32 %v1196, %v693
        %v1203 = vadd.f32 %v1199, %v693
        %vm1204 = vcmp.gt.f32.partialorder %v1202, 0.0
        %vm1205 = vcmp.gt.f32.partialorder %v1203, 0.0
        %v1206 = vmin.f32 %v1202, 0.0
        %v1207 = vmin.f32 %v1203, 0.0
        %v1208 = vmul.f32 %v1206, 1.442695
        %v1209 = vpow.pop %v1208
        %v1210 = vmul.f32 %v1207, 1.442695
        %v1211 = vpow.pop %v1210
        %v1212 = vsub.f32 %v1209, 1.0
        %v1213 = vsub.f32 %v1211, 1.0
        %v1214 = vsel %vm1204, %v1202, %v1212
        %v1215 = vsel %vm1205, %v1203, %v1213
        %v1216 = vpack.c.bf16 %v1215, %v1214
        %v1218 = vunpack.c.l.b16 %v1216
        %v1219 = vunpack.c.h.b16 %v1216
        %v1220 = vpack.c.b16 %v1218, %v1218
        %v1221 = vpack.c.b16 %v1219, %v1219
        %s1224 = scalar_lea.vmem %s399, 16 [#allocation11]
        %1225 = vst.msk [vmem:[%s1224] sm:$0xf] %vm717, %v1220
        %1226 = vst.msk [vmem:[%s1224 + $0x4] sm:$0xf] %vm717, %v1221
        %vm1227 = vcmp.gt.f32.partialorder %v1107, 0.0
        %vm1228 = vcmp.gt.f32.partialorder %v1110, 0.0
        %v1229 = vmin.f32 %v1107, 0.0
        %v1230 = vmin.f32 %v1110, 0.0
        %v1231 = vmul.f32 %v1229, 1.442695
        %v1232 = vpow.pop %v1231
        %v1233 = vmul.f32 %v1230, 1.442695
        %v1234 = vpow.pop %v1233
        %v1235 = vsub.f32 %v1232, 1.0
        %v1236 = vsub.f32 %v1234, 1.0
        %v1237 = vsel %vm1227, %v1107, %v1235
        %v1238 = vsel %vm1228, %v1110, %v1236
        %v1239 = vpack.c.bf16 %v1238, %v1237
        %v1241 = vunpack.c.l.b16 %v1239
        %v1242 = vunpack.c.h.b16 %v1239
        %v1243 = vpack.c.b16 %v1241, %v1241
        %v1244 = vpack.c.b16 %v1242, %v1242
        %s1247 = scalar_lea.vmem %s406, 16 [#allocation12]
        %1248 = vst.msk [vmem:[%s1247] sm:$0xf] %vm717, %v1243
        %1249 = vst.msk [vmem:[%s1247 + $0x4] sm:$0xf] %vm717, %v1244
        %s1250 = scalar_lea.vmem %s355, 24 [#allocation3]
        %v1251 = vld [vmem:[%s1250] sm:$0xf]
        %v1252 = vld [vmem:[%s1250 + $0x4] sm:$0xf]
        %v1255 = vunpack.c.l.b16 %v1251
        %v1256 = vunpack.c.l.b16 %v1252
        %v1257 = vpack.c.b16 %v1256, %v1255
        %1259 = vmatprep.subr.bf16.mxu0 0
        %1260 = vmatpush1.bf16.msra.mxu0 %v1257
        %1261 = vmatprep.subr.bf16.mxu0 0
        %1262 = vmatpush1.bf16.msra.mxu0 0
        %1263 = vmatprep.subr.bf16.mxu0 0
        %1264 = vmatpush1.bf16.msra.mxu0 0
        %1265 = vmatprep.subr.bf16.mxu0 0
        %1266 = vmatpush1.bf16.msra.mxu0 0
        %1267 = vmatprep.subr.bf16.mxu0 0
        %1268 = vmatpush1.bf16.msra.mxu0 0
        %1269 = vmatprep.subr.bf16.mxu0 0
        %1270 = vmatpush1.bf16.msra.mxu0 0
        %1271 = vmatprep.subr.bf16.mxu0 0
        %1272 = vmatpush1.bf16.msra.mxu0 0
        %1273 = vmatprep.subr.bf16.mxu0 0
        %1274 = vmatpush1.bf16.msra.mxu0 0
        %1275 = vmatprep.subr.bf16.mxu0 0
        %1276 = vmatpush1.bf16.msra.mxu0 0
        %1277 = vmatprep.subr.bf16.mxu0 0
        %1278 = vmatpush1.bf16.msra.mxu0 0
        %1279 = vmatprep.subr.bf16.mxu0 0
        %1280 = vmatpush1.bf16.msra.mxu0 0
        %1281 = vmatprep.subr.bf16.mxu0 0
        %1282 = vmatpush1.bf16.msra.mxu0 0
        %1283 = vmatprep.subr.bf16.mxu0 0
        %1284 = vmatpush1.bf16.msra.mxu0 0
        %1285 = vmatprep.subr.bf16.mxu0 0
        %1286 = vmatpush1.bf16.msra.mxu0 0
        %1287 = vmatprep.subr.bf16.mxu0 0
        %1288 = vmatpush1.bf16.msra.mxu0 0
        %1289 = vmatprep.subr.bf16.mxu0 0
        %1290 = vmatpush1.bf16.msra.mxu0 0
        %1291 = vmatprep.mubr.bf16.mxu0 0
        %1292 = vmatmul.mubr.bf16.gmra.mrb[0].mxu0 %v454
        %v1293 = vpop.f32.mrb[0].mxu0
        %v1294 = vadd.f32 0.0, %v1293
        %v1295 = vpop.f32.mrb[0].mxu0
        %v1296 = vpop.f32.mrb[0].mxu0
        %v1297 = vadd.f32 0.0, %v1296
        %v1298 = vpop.f32.mrb[0].mxu0
        %1299 = vmatprep.mubr.bf16.mxu0 0
        %1300 = vmatmul.mubr.bf16.gmra.mrb[0].mxu0 %v457
        %v1301 = vpop.f32.mrb[0].mxu0
        %v1302 = vadd.f32 0.0, %v1301
        %v1303 = vpop.f32.mrb[0].mxu0
        %v1304 = vpop.f32.mrb[0].mxu0
        %v1305 = vadd.f32 0.0, %v1304
        %v1306 = vpop.f32.mrb[0].mxu0
        %1307 = vdwg.mxu0
        %v1308 = vmul.f32 %v1294, %v427
        %v1309 = vmul.f32 %v1297, %v428
        %v1310 = vmul.f32 %v1302, %v431
        %v1311 = vmul.f32 %v1305, %v432
        %v1312 = vsub.f32 %v1308, %v1310
        %v1313 = vsub.f32 %v1309, %v1311
        %v1314 = vpack.c.bf16 %v1313, %v1312
        %1315 = vst.msk [vmem:[#allocation2] sm:$0xff] %vm515, %v1314
        %v1316 = vmul.f32 %v1294, %v431
        %v1317 = vmul.f32 %v1297, %v432
        %v1318 = vmul.f32 %v1302, %v427
        %v1319 = vmul.f32 %v1305, %v428
        %v1320 = vadd.f32 %v1316, %v1318
        %v1321 = vadd.f32 %v1317, %v1319
        %v1322 = vpack.c.bf16 %v1321, %v1320
        %1323 = vst.msk [vmem:[#allocation2 + $0x8] sm:$0xff] %vm515, %v1322
        %v1324 = vld [vmem:[#allocation2] sm:$0xff]
        %v1325 = vld [vmem:[#allocation2 + $0x8] sm:$0xff]
        %1326 = vmatprep.subr.bf16.mxu0 0
        %1327 = vmatpush1.bf16.msra.mxu0 %v1324
        %1328 = vmatprep.subr.bf16.mxu0 0
        %1329 = vmatpush1.bf16.msra.mxu0 %v1325
        %1330 = vmatprep.subr.bf16.mxu0 0
        %1331 = vmatpush1.bf16.msra.mxu0 0
        %1332 = vmatprep.subr.bf16.mxu0 0
        %1333 = vmatpush1.bf16.msra.mxu0 0
        %1334 = vmatprep.subr.bf16.mxu0 0
        %1335 = vmatpush1.bf16.msra.mxu0 0
        %1336 = vmatprep.subr.bf16.mxu0 0
        %1337 = vmatpush1.bf16.msra.mxu0 0
        %1338 = vmatprep.subr.bf16.mxu0 0
        %1339 = vmatpush1.bf16.msra.mxu0 0
        %1340 = vmatprep.subr.bf16.mxu0 0
        %1341 = vmatpush1.bf16.msra.mxu0 0
        %1342 = vmatprep.subr.bf16.mxu0 0
        %1343 = vmatpush1.bf16.msra.mxu0 0
        %1344 = vmatprep.subr.bf16.mxu0 0
        %1345 = vmatpush1.bf16.msra.mxu0 0
        %1346 = vmatprep.subr.bf16.mxu0 0
        %1347 = vmatpush1.bf16.msra.mxu0 0
        %1348 = vmatprep.subr.bf16.mxu0 0
        %1349 = vmatpush1.bf16.msra.mxu0 0
        %1350 = vmatprep.subr.bf16.mxu0 0
        %1351 = vmatpush1.bf16.msra.mxu0 0
        %1352 = vmatprep.subr.bf16.mxu0 0
        %1353 = vmatpush1.bf16.msra.mxu0 0
        %1354 = vmatprep.subr.bf16.mxu0 0
        %1355 = vmatpush1.bf16.msra.mxu0 0
        %1356 = vmatprep.subr.bf16.mxu0 0
        %1357 = vmatpush1.bf16.msra.mxu0 0
        %1358 = vmatprep.mubr.bf16.mxu0 0
        %1359 = vmatmul.mubr.bf16.gmra.mrb[0].mxu0 %v533
        %v1360 = vpop.f32.mrb[0].mxu0
        %v1361 = vadd.f32 0.0, %v1360
        %v1362 = vpop.f32.mrb[0].mxu0
        %v1363 = vpop.f32.mrb[0].mxu0
        %v1364 = vadd.f32 0.0, %v1363
        %v1365 = vpop.f32.mrb[0].mxu0
        %1366 = vdwg.mxu0
        %v1367 = vpack.c.bf16 %v1364, %v1361
        %v1369 = vsel %vm515, %v1257, 0
        %1371 = vmatprep.subr.bf16.mxu0 0
        %1372 = vmatpush1.bf16.msra.mxu0 %v585
        %1373 = vmatprep.subr.bf16.mxu0 0
        %1374 = vmatpush1.bf16.msra.mxu0 %v586
        %1375 = vmatprep.subr.bf16.mxu0 0
        %1376 = vmatpush1.bf16.msra.mxu0 0
        %1377 = vmatprep.subr.bf16.mxu0 0
        %1378 = vmatpush1.bf16.msra.mxu0 0
        %1379 = vmatprep.subr.bf16.mxu0 0
        %1380 = vmatpush1.bf16.msra.mxu0 0
        %1381 = vmatprep.subr.bf16.mxu0 0
        %1382 = vmatpush1.bf16.msra.mxu0 0
        %1383 = vmatprep.subr.bf16.mxu0 0
        %1384 = vmatpush1.bf16.msra.mxu0 0
        %1385 = vmatprep.subr.bf16.mxu0 0
        %1386 = vmatpush1.bf16.msra.mxu0 0
        %1387 = vmatprep.subr.bf16.mxu0 0
        %1388 = vmatpush1.bf16.msra.mxu0 0
        %1389 = vmatprep.subr.bf16.mxu0 0
        %1390 = vmatpush1.bf16.msra.mxu0 0
        %1391 = vmatprep.subr.bf16.mxu0 0
        %1392 = vmatpush1.bf16.msra.mxu0 0
        %1393 = vmatprep.subr.bf16.mxu0 0
        %1394 = vmatpush1.bf16.msra.mxu0 0
        %1395 = vmatprep.subr.bf16.mxu0 0
        %1396 = vmatpush1.bf16.msra.mxu0 0
        %1397 = vmatprep.subr.bf16.mxu0 0
        %1398 = vmatpush1.bf16.msra.mxu0 0
        %1399 = vmatprep.subr.bf16.mxu0 0
        %1400 = vmatpush1.bf16.msra.mxu0 0
        %1401 = vmatprep.subr.bf16.mxu0 0
        %1402 = vmatpush1.bf16.msra.mxu0 0
        %1403 = vmatprep.mubr.bf16.mxu0 0
        %1404 = vmatmul.mubr.bf16.gmra.mrb[0].mxu0 %v1369
        %v1405 = vpop.f32.mrb[0].mxu0
        %v1406 = vadd.f32 0.0, %v1405
        %v1407 = vpop.f32.mrb[0].mxu0
        %v1408 = vpop.f32.mrb[0].mxu0
        %v1409 = vadd.f32 0.0, %v1408
        %v1410 = vpop.f32.mrb[0].mxu0
        %1411 = vdwg.mxu0
        %v1413 = vsel %vm515, %v1367, 0
        %1415 = vmatprep.subr.bf16.mxu0 0
        %1416 = vmatpush1.bf16.msra.mxu0 %v641
        %1417 = vmatprep.subr.bf16.mxu0 0
        %1418 = vmatpush1.bf16.msra.mxu0 %v642
        %1419 = vmatprep.subr.bf16.mxu0 0
        %1420 = vmatpush1.bf16.msra.mxu0 0
        %1421 = vmatprep.subr.bf16.mxu0 0
        %1422 = vmatpush1.bf16.msra.mxu0 0
        %1423 = vmatprep.subr.bf16.mxu0 0
        %1424 = vmatpush1.bf16.msra.mxu0 0
        %1425 = vmatprep.subr.bf16.mxu0 0
        %1426 = vmatpush1.bf16.msra.mxu0 0
        %1427 = vmatprep.subr.bf16.mxu0 0
        %1428 = vmatpush1.bf16.msra.mxu0 0
        %1429 = vmatprep.subr.bf16.mxu0 0
        %1430 = vmatpush1.bf16.msra.mxu0 0
        %1431 = vmatprep.subr.bf16.mxu0 0
        %1432 = vmatpush1.bf16.msra.mxu0 0
        %1433 = vmatprep.subr.bf16.mxu0 0
        %1434 = vmatpush1.bf16.msra.mxu0 0
        %1435 = vmatprep.subr.bf16.mxu0 0
        %1436 = vmatpush1.bf16.msra.mxu0 0
        %1437 = vmatprep.subr.bf16.mxu0 0
        %1438 = vmatpush1.bf16.msra.mxu0 0
        %1439 = vmatprep.subr.bf16.mxu0 0
        %1440 = vmatpush1.bf16.msra.mxu0 0
        %1441 = vmatprep.subr.bf16.mxu0 0
        %1442 = vmatpush1.bf16.msra.mxu0 0
        %1443 = vmatprep.subr.bf16.mxu0 0
        %1444 = vmatpush1.bf16.msra.mxu0 0
        %1445 = vmatprep.subr.bf16.mxu0 0
        %1446 = vmatpush1.bf16.msra.mxu0 0
        %1447 = vmatprep.mubr.bf16.mxu0 0
        %1448 = vmatmul.mubr.bf16.gmra.mrb[0].mxu0 %v1413
        %v1449 = vpop.f32.mrb[0].mxu0
        %v1450 = vadd.f32 %v1406, %v1449
        %v1451 = vpop.f32.mrb[0].mxu0
        %v1452 = vpop.f32.mrb[0].mxu0
        %v1453 = vadd.f32 %v1409, %v1452
        %v1454 = vpop.f32.mrb[0].mxu0
        %1455 = vdwg.mxu0
        %v1456 = vadd.f32 %v1450, %v693
        %v1457 = vadd.f32 %v1453, %v693
        %vm1458 = vcmp.gt.f32.partialorder %v1456, 0.0
        %vm1459 = vcmp.gt.f32.partialorder %v1457, 0.0
        %v1460 = vmin.f32 %v1456, 0.0
        %v1461 = vmin.f32 %v1457, 0.0
        %v1462 = vmul.f32 %v1460, 1.442695
        %v1463 = vpow.pop %v1462
        %v1464 = vmul.f32 %v1461, 1.442695
        %v1465 = vpow.pop %v1464
        %v1466 = vsub.f32 %v1463, 1.0
        %v1467 = vsub.f32 %v1465, 1.0
        %v1468 = vsel %vm1458, %v1456, %v1466
        %v1469 = vsel %vm1459, %v1457, %v1467
        %v1470 = vpack.c.bf16 %v1469, %v1468
        %v1472 = vunpack.c.l.b16 %v1470
        %v1473 = vunpack.c.h.b16 %v1470
        %v1474 = vpack.c.b16 %v1472, %v1472
        %v1475 = vpack.c.b16 %v1473, %v1473
        %s1478 = scalar_lea.vmem %s399, 24 [#allocation11]
        %1479 = vst.msk [vmem:[%s1478] sm:$0xf] %vm717, %v1474
        %1480 = vst.msk [vmem:[%s1478 + $0x4] sm:$0xf] %vm717, %v1475
        %vm1481 = vcmp.gt.f32.partialorder %v1361, 0.0
        %vm1482 = vcmp.gt.f32.partialorder %v1364, 0.0
        %v1483 = vmin.f32 %v1361, 0.0
        %v1484 = vmin.f32 %v1364, 0.0
        %v1485 = vmul.f32 %v1483, 1.442695
        %v1486 = vpow.pop %v1485
        %v1487 = vmul.f32 %v1484, 1.442695
        %v1488 = vpow.pop %v1487
        %v1489 = vsub.f32 %v1486, 1.0
        %v1490 = vsub.f32 %v1488, 1.0
        %v1491 = vsel %vm1481, %v1361, %v1489
        %v1492 = vsel %vm1482, %v1364, %v1490
        %v1493 = vpack.c.bf16 %v1492, %v1491
        %v1495 = vunpack.c.l.b16 %v1493
        %v1496 = vunpack.c.h.b16 %v1493
        %v1497 = vpack.c.b16 %v1495, %v1495
        %v1498 = vpack.c.b16 %v1496, %v1496
        %s1501 = scalar_lea.vmem %s406, 24 [#allocation12]
        %1502 = vst.msk [vmem:[%s1501] sm:$0xf] %vm717, %v1497
        %1503 = vst.msk [vmem:[%s1501 + $0x4] sm:$0xf] %vm717, %v1498
        %s1504 = scalar_lea.vmem %s355, 32 [#allocation3]
        %v1505 = vld [vmem:[%s1504] sm:$0xf]
        %v1506 = vld [vmem:[%s1504 + $0x4] sm:$0xf]
        %v1509 = vunpack.c.l.b16 %v1505
        %v1510 = vunpack.c.l.b16 %v1506
        %v1511 = vpack.c.b16 %v1510, %v1509
        %1513 = vmatprep.subr.bf16.mxu0 0
        %1514 = vmatpush1.bf16.msra.mxu0 %v1511
        %1515 = vmatprep.subr.bf16.mxu0 0
        %1516 = vmatpush1.bf16.msra.mxu0 0
        %1517 = vmatprep.subr.bf16.mxu0 0
        %1518 = vmatpush1.bf16.msra.mxu0 0
        %1519 = vmatprep.subr.bf16.mxu0 0
        %1520 = vmatpush1.bf16.msra.mxu0 0
        %1521 = vmatprep.subr.bf16.mxu0 0
        %1522 = vmatpush1.bf16.msra.mxu0 0
        %1523 = vmatprep.subr.bf16.mxu0 0
        %1524 = vmatpush1.bf16.msra.mxu0 0
        %1525 = vmatprep.subr.bf16.mxu0 0
        %1526 = vmatpush1.bf16.msra.mxu0 0
        %1527 = vmatprep.subr.bf16.mxu0 0
        %1528 = vmatpush1.bf16.msra.mxu0 0
        %1529 = vmatprep.subr.bf16.mxu0 0
        %1530 = vmatpush1.bf16.msra.mxu0 0
        %1531 = vmatprep.subr.bf16.mxu0 0
        %1532 = vmatpush1.bf16.msra.mxu0 0
        %1533 = vmatprep.subr.bf16.mxu0 0
        %1534 = vmatpush1.bf16.msra.mxu0 0
        %1535 = vmatprep.subr.bf16.mxu0 0
        %1536 = vmatpush1.bf16.msra.mxu0 0
        %1537 = vmatprep.subr.bf16.mxu0 0
        %1538 = vmatpush1.bf16.msra.mxu0 0
        %1539 = vmatprep.subr.bf16.mxu0 0
        %1540 = vmatpush1.bf16.msra.mxu0 0
        %1541 = vmatprep.subr.bf16.mxu0 0
        %1542 = vmatpush1.bf16.msra.mxu0 0
        %1543 = vmatprep.subr.bf16.mxu0 0
        %1544 = vmatpush1.bf16.msra.mxu0 0
        %1545 = vmatprep.mubr.bf16.mxu0 0
        %1546 = vmatmul.mubr.bf16.gmra.mrb[0].mxu0 %v454
        %v1547 = vpop.f32.mrb[0].mxu0
        %v1548 = vadd.f32 0.0, %v1547
        %v1549 = vpop.f32.mrb[0].mxu0
        %v1550 = vpop.f32.mrb[0].mxu0
        %v1551 = vadd.f32 0.0, %v1550
        %v1552 = vpop.f32.mrb[0].mxu0
        %1553 = vmatprep.mubr.bf16.mxu0 0
        %1554 = vmatmul.mubr.bf16.gmra.mrb[0].mxu0 %v457
        %v1555 = vpop.f32.mrb[0].mxu0
        %v1556 = vadd.f32 0.0, %v1555
        %v1557 = vpop.f32.mrb[0].mxu0
        %v1558 = vpop.f32.mrb[0].mxu0
        %v1559 = vadd.f32 0.0, %v1558
        %v1560 = vpop.f32.mrb[0].mxu0
        %1561 = vdwg.mxu0
        %v1562 = vmul.f32 %v1548, %v427
        %v1563 = vmul.f32 %v1551, %v428
        %v1564 = vmul.f32 %v1556, %v431
        %v1565 = vmul.f32 %v1559, %v432
        %v1566 = vsub.f32 %v1562, %v1564
        %v1567 = vsub.f32 %v1563, %v1565
        %v1568 = vpack.c.bf16 %v1567, %v1566
        %1569 = vst.msk [vmem:[#allocation2] sm:$0xff] %vm515, %v1568
        %v1570 = vmul.f32 %v1548, %v431
        %v1571 = vmul.f32 %v1551, %v432
        %v1572 = vmul.f32 %v1556, %v427
        %v1573 = vmul.f32 %v1559, %v428
        %v1574 = vadd.f32 %v1570, %v1572
        %v1575 = vadd.f32 %v1571, %v1573
        %v1576 = vpack.c.bf16 %v1575, %v1574
        %1577 = vst.msk [vmem:[#allocation2 + $0x8] sm:$0xff] %vm515, %v1576
        %v1578 = vld [vmem:[#allocation2] sm:$0xff]
        %v1579 = vld [vmem:[#allocation2 + $0x8] sm:$0xff]
        %1580 = vmatprep.subr.bf16.mxu0 0
        %1581 = vmatpush1.bf16.msra.mxu0 %v1578
        %1582 = vmatprep.subr.bf16.mxu0 0
        %1583 = vmatpush1.bf16.msra.mxu0 %v1579
        %1584 = vmatprep.subr.bf16.mxu0 0
        %1585 = vmatpush1.bf16.msra.mxu0 0
        %1586 = vmatprep.subr.bf16.mxu0 0
        %1587 = vmatpush1.bf16.msra.mxu0 0
        %1588 = vmatprep.subr.bf16.mxu0 0
        %1589 = vmatpush1.bf16.msra.mxu0 0
        %1590 = vmatprep.subr.bf16.mxu0 0
        %1591 = vmatpush1.bf16.msra.mxu0 0
        %1592 = vmatprep.subr.bf16.mxu0 0
        %1593 = vmatpush1.bf16.msra.mxu0 0
        %1594 = vmatprep.subr.bf16.mxu0 0
        %1595 = vmatpush1.bf16.msra.mxu0 0
        %1596 = vmatprep.subr.bf16.mxu0 0
        %1597 = vmatpush1.bf16.msra.mxu0 0
        %1598 = vmatprep.subr.bf16.mxu0 0
        %1599 = vmatpush1.bf16.msra.mxu0 0
        %1600 = vmatprep.subr.bf16.mxu0 0
        %1601 = vmatpush1.bf16.msra.mxu0 0
        %1602 = vmatprep.subr.bf16.mxu0 0
        %1603 = vmatpush1.bf16.msra.mxu0 0
        %1604 = vmatprep.subr.bf16.mxu0 0
        %1605 = vmatpush1.bf16.msra.mxu0 0
        %1606 = vmatprep.subr.bf16.mxu0 0
        %1607 = vmatpush1.bf16.msra.mxu0 0
        %1608 = vmatprep.subr.bf16.mxu0 0
        %1609 = vmatpush1.bf16.msra.mxu0 0
        %1610 = vmatprep.subr.bf16.mxu0 0
        %1611 = vmatpush1.bf16.msra.mxu0 0
        %1612 = vmatprep.mubr.bf16.mxu0 0
        %1613 = vmatmul.mubr.bf16.gmra.mrb[0].mxu0 %v533
        %v1614 = vpop.f32.mrb[0].mxu0
        %v1615 = vadd.f32 0.0, %v1614
        %v1616 = vpop.f32.mrb[0].mxu0
        %v1617 = vpop.f32.mrb[0].mxu0
        %v1618 = vadd.f32 0.0, %v1617
        %v1619 = vpop.f32.mrb[0].mxu0
        %1620 = vdwg.mxu0
        %v1621 = vpack.c.bf16 %v1618, %v1615
        %v1623 = vsel %vm515, %v1511, 0
        %1625 = vmatprep.subr.bf16.mxu0 0
        %1626 = vmatpush1.bf16.msra.mxu0 %v585
        %1627 = vmatprep.subr.bf16.mxu0 0
        %1628 = vmatpush1.bf16.msra.mxu0 %v586
        %1629 = vmatprep.subr.bf16.mxu0 0
        %1630 = vmatpush1.bf16.msra.mxu0 0
        %1631 = vmatprep.subr.bf16.mxu0 0
        %1632 = vmatpush1.bf16.msra.mxu0 0
        %1633 = vmatprep.subr.bf16.mxu0 0
        %1634 = vmatpush1.bf16.msra.mxu0 0
        %1635 = vmatprep.subr.bf16.mxu0 0
        %1636 = vmatpush1.bf16.msra.mxu0 0
        %1637 = vmatprep.subr.bf16.mxu0 0
        %1638 = vmatpush1.bf16.msra.mxu0 0
        %1639 = vmatprep.subr.bf16.mxu0 0
        %1640 = vmatpush1.bf16.msra.mxu0 0
        %1641 = vmatprep.subr.bf16.mxu0 0
        %1642 = vmatpush1.bf16.msra.mxu0 0
        %1643 = vmatprep.subr.bf16.mxu0 0
        %1644 = vmatpush1.bf16.msra.mxu0 0
        %1645 = vmatprep.subr.bf16.mxu0 0
        %1646 = vmatpush1.bf16.msra.mxu0 0
        %1647 = vmatprep.subr.bf16.mxu0 0
        %1648 = vmatpush1.bf16.msra.mxu0 0
        %1649 = vmatprep.subr.bf16.mxu0 0
        %1650 = vmatpush1.bf16.msra.mxu0 0
        %1651 = vmatprep.subr.bf16.mxu0 0
        %1652 = vmatpush1.bf16.msra.mxu0 0
        %1653 = vmatprep.subr.bf16.mxu0 0
        %1654 = vmatpush1.bf16.msra.mxu0 0
        %1655 = vmatprep.subr.bf16.mxu0 0
        %1656 = vmatpush1.bf16.msra.mxu0 0
        %1657 = vmatprep.mubr.bf16.mxu0 0
        %1658 = vmatmul.mubr.bf16.gmra.mrb[0].mxu0 %v1623
        %v1659 = vpop.f32.mrb[0].mxu0
        %v1660 = vadd.f32 0.0, %v1659
        %v1661 = vpop.f32.mrb[0].mxu0
        %v1662 = vpop.f32.mrb[0].mxu0
        %v1663 = vadd.f32 0.0, %v1662
        %v1664 = vpop.f32.mrb[0].mxu0
        %1665 = vdwg.mxu0
        %v1667 = vsel %vm515, %v1621, 0
        %1669 = vmatprep.subr.bf16.mxu0 0
        %1670 = vmatpush1.bf16.msra.mxu0 %v641
        %1671 = vmatprep.subr.bf16.mxu0 0
        %1672 = vmatpush1.bf16.msra.mxu0 %v642
        %1673 = vmatprep.subr.bf16.mxu0 0
        %1674 = vmatpush1.bf16.msra.mxu0 0
        %1675 = vmatprep.subr.bf16.mxu0 0
        %1676 = vmatpush1.bf16.msra.mxu0 0
        %1677 = vmatprep.subr.bf16.mxu0 0
        %1678 = vmatpush1.bf16.msra.mxu0 0
        %1679 = vmatprep.subr.bf16.mxu0 0
        %1680 = vmatpush1.bf16.msra.mxu0 0
        %1681 = vmatprep.subr.bf16.mxu0 0
        %1682 = vmatpush1.bf16.msra.mxu0 0
        %1683 = vmatprep.subr.bf16.mxu0 0
        %1684 = vmatpush1.bf16.msra.mxu0 0
        %1685 = vmatprep.subr.bf16.mxu0 0
        %1686 = vmatpush1.bf16.msra.mxu0 0
        %1687 = vmatprep.subr.bf16.mxu0 0
        %1688 = vmatpush1.bf16.msra.mxu0 0
        %1689 = vmatprep.subr.bf16.mxu0 0
        %1690 = vmatpush1.bf16.msra.mxu0 0
        %1691 = vmatprep.subr.bf16.mxu0 0
        %1692 = vmatpush1.bf16.msra.mxu0 0
        %1693 = vmatprep.subr.bf16.mxu0 0
        %1694 = vmatpush1.bf16.msra.mxu0 0
        %1695 = vmatprep.subr.bf16.mxu0 0
        %1696 = vmatpush1.bf16.msra.mxu0 0
        %1697 = vmatprep.subr.bf16.mxu0 0
        %1698 = vmatpush1.bf16.msra.mxu0 0
        %1699 = vmatprep.subr.bf16.mxu0 0
        %1700 = vmatpush1.bf16.msra.mxu0 0
        %1701 = vmatprep.mubr.bf16.mxu0 0
        %1702 = vmatmul.mubr.bf16.gmra.mrb[0].mxu0 %v1667
        %v1703 = vpop.f32.mrb[0].mxu0
        %v1704 = vadd.f32 %v1660, %v1703
        %v1705 = vpop.f32.mrb[0].mxu0
        %v1706 = vpop.f32.mrb[0].mxu0
        %v1707 = vadd.f32 %v1663, %v1706
        %v1708 = vpop.f32.mrb[0].mxu0
        %1709 = vdwg.mxu0
        %v1710 = vadd.f32 %v1704, %v693
        %v1711 = vadd.f32 %v1707, %v693
        %vm1712 = vcmp.gt.f32.partialorder %v1710, 0.0
        %vm1713 = vcmp.gt.f32.partialorder %v1711, 0.0
        %v1714 = vmin.f32 %v1710, 0.0
        %v1715 = vmin.f32 %v1711, 0.0
        %v1716 = vmul.f32 %v1714, 1.442695
        %v1717 = vpow.pop %v1716
        %v1718 = vmul.f32 %v1715, 1.442695
        %v1719 = vpow.pop %v1718
        %v1720 = vsub.f32 %v1717, 1.0
        %v1721 = vsub.f32 %v1719, 1.0
        %v1722 = vsel %vm1712, %v1710, %v1720
        %v1723 = vsel %vm1713, %v1711, %v1721
        %v1724 = vpack.c.bf16 %v1723, %v1722
        %v1726 = vunpack.c.l.b16 %v1724
        %v1727 = vunpack.c.h.b16 %v1724
        %v1728 = vpack.c.b16 %v1726, %v1726
        %v1729 = vpack.c.b16 %v1727, %v1727
        %s1732 = scalar_lea.vmem %s399, 32 [#allocation11]
        %1733 = vst.msk [vmem:[%s1732] sm:$0xf] %vm717, %v1728
        %1734 = vst.msk [vmem:[%s1732 + $0x4] sm:$0xf] %vm717, %v1729
        %vm1735 = vcmp.gt.f32.partialorder %v1615, 0.0
        %vm1736 = vcmp.gt.f32.partialorder %v1618, 0.0
        %v1737 = vmin.f32 %v1615, 0.0
        %v1738 = vmin.f32 %v1618, 0.0
        %v1739 = vmul.f32 %v1737, 1.442695
        %v1740 = vpow.pop %v1739
        %v1741 = vmul.f32 %v1738, 1.442695
        %v1742 = vpow.pop %v1741
        %v1743 = vsub.f32 %v1740, 1.0
        %v1744 = vsub.f32 %v1742, 1.0
        %v1745 = vsel %vm1735, %v1615, %v1743
        %v1746 = vsel %vm1736, %v1618, %v1744
        %v1747 = vpack.c.bf16 %v1746, %v1745
        %v1749 = vunpack.c.l.b16 %v1747
        %v1750 = vunpack.c.h.b16 %v1747
        %v1751 = vpack.c.b16 %v1749, %v1749
        %v1752 = vpack.c.b16 %v1750, %v1750
        %s1755 = scalar_lea.vmem %s406, 32 [#allocation12]
        %1756 = vst.msk [vmem:[%s1755] sm:$0xf] %vm717, %v1751
        %1757 = vst.msk [vmem:[%s1755 + $0x4] sm:$0xf] %vm717, %v1752
        %s1758 = scalar_lea.vmem %s355, 40 [#allocation3]
        %v1759 = vld [vmem:[%s1758] sm:$0xf]
        %v1760 = vld [vmem:[%s1758 + $0x4] sm:$0xf]
        %v1763 = vunpack.c.l.b16 %v1759
        %v1764 = vunpack.c.l.b16 %v1760
        %v1765 = vpack.c.b16 %v1764, %v1763
        %1767 = vmatprep.subr.bf16.mxu0 0
        %1768 = vmatpush1.bf16.msra.mxu0 %v1765
        %1769 = vmatprep.subr.bf16.mxu0 0
        %1770 = vmatpush1.bf16.msra.mxu0 0
        %1771 = vmatprep.subr.bf16.mxu0 0
        %1772 = vmatpush1.bf16.msra.mxu0 0
        %1773 = vmatprep.subr.bf16.mxu0 0
        %1774 = vmatpush1.bf16.msra.mxu0 0
        %1775 = vmatprep.subr.bf16.mxu0 0
        %1776 = vmatpush1.bf16.msra.mxu0 0
        %1777 = vmatprep.subr.bf16.mxu0 0
        %1778 = vmatpush1.bf16.msra.mxu0 0
        %1779 = vmatprep.subr.bf16.mxu0 0
        %1780 = vmatpush1.bf16.msra.mxu0 0
        %1781 = vmatprep.subr.bf16.mxu0 0
        %1782 = vmatpush1.bf16.msra.mxu0 0
        %1783 = vmatprep.subr.bf16.mxu0 0
        %1784 = vmatpush1.bf16.msra.mxu0 0
        %1785 = vmatprep.subr.bf16.mxu0 0
        %1786 = vmatpush1.bf16.msra.mxu0 0
        %1787 = vmatprep.subr.bf16.mxu0 0
        %1788 = vmatpush1.bf16.msra.mxu0 0
        %1789 = vmatprep.subr.bf16.mxu0 0
        %1790 = vmatpush1.bf16.msra.mxu0 0
        %1791 = vmatprep.subr.bf16.mxu0 0
        %1792 = vmatpush1.bf16.msra.mxu0 0
        %1793 = vmatprep.subr.bf16.mxu0 0
        %1794 = vmatpush1.bf16.msra.mxu0 0
        %1795 = vmatprep.subr.bf16.mxu0 0
        %1796 = vmatpush1.bf16.msra.mxu0 0
        %1797 = vmatprep.subr.bf16.mxu0 0
        %1798 = vmatpush1.bf16.msra.mxu0 0
        %1799 = vmatprep.mubr.bf16.mxu0 0
        %1800 = vmatmul.mubr.bf16.gmra.mrb[0].mxu0 %v454
        %v1801 = vpop.f32.mrb[0].mxu0
        %v1802 = vadd.f32 0.0, %v1801
        %v1803 = vpop.f32.mrb[0].mxu0
        %v1804 = vpop.f32.mrb[0].mxu0
        %v1805 = vadd.f32 0.0, %v1804
        %v1806 = vpop.f32.mrb[0].mxu0
        %1807 = vmatprep.mubr.bf16.mxu0 0
        %1808 = vmatmul.mubr.bf16.gmra.mrb[0].mxu0 %v457
        %v1809 = vpop.f32.mrb[0].mxu0
        %v1810 = vadd.f32 0.0, %v1809
        %v1811 = vpop.f32.mrb[0].mxu0
        %v1812 = vpop.f32.mrb[0].mxu0
        %v1813 = vadd.f32 0.0, %v1812
        %v1814 = vpop.f32.mrb[0].mxu0
        %1815 = vdwg.mxu0
        %v1816 = vmul.f32 %v1802, %v427
        %v1817 = vmul.f32 %v1805, %v428
        %v1818 = vmul.f32 %v1810, %v431
        %v1819 = vmul.f32 %v1813, %v432
        %v1820 = vsub.f32 %v1816, %v1818
        %v1821 = vsub.f32 %v1817, %v1819
        %v1822 = vpack.c.bf16 %v1821, %v1820
        %1823 = vst.msk [vmem:[#allocation2] sm:$0xff] %vm515, %v1822
        %v1824 = vmul.f32 %v1802, %v431
        %v1825 = vmul.f32 %v1805, %v432
        %v1826 = vmul.f32 %v1810, %v427
        %v1827 = vmul.f32 %v1813, %v428
        %v1828 = vadd.f32 %v1824, %v1826
        %v1829 = vadd.f32 %v1825, %v1827
        %v1830 = vpack.c.bf16 %v1829, %v1828
        %1831 = vst.msk [vmem:[#allocation2 + $0x8] sm:$0xff] %vm515, %v1830
        %v1832 = vld [vmem:[#allocation2] sm:$0xff]
        %v1833 = vld [vmem:[#allocation2 + $0x8] sm:$0xff]
        %1834 = vmatprep.subr.bf16.mxu0 0
        %1835 = vmatpush1.bf16.msra.mxu0 %v1832
        %1836 = vmatprep.subr.bf16.mxu0 0
        %1837 = vmatpush1.bf16.msra.mxu0 %v1833
        %1838 = vmatprep.subr.bf16.mxu0 0
        %1839 = vmatpush1.bf16.msra.mxu0 0
        %1840 = vmatprep.subr.bf16.mxu0 0
        %1841 = vmatpush1.bf16.msra.mxu0 0
        %1842 = vmatprep.subr.bf16.mxu0 0
        %1843 = vmatpush1.bf16.msra.mxu0 0
        %1844 = vmatprep.subr.bf16.mxu0 0
        %1845 = vmatpush1.bf16.msra.mxu0 0
        %1846 = vmatprep.subr.bf16.mxu0 0
        %1847 = vmatpush1.bf16.msra.mxu0 0
        %1848 = vmatprep.subr.bf16.mxu0 0
        %1849 = vmatpush1.bf16.msra.mxu0 0
        %1850 = vmatprep.subr.bf16.mxu0 0
        %1851 = vmatpush1.bf16.msra.mxu0 0
        %1852 = vmatprep.subr.bf16.mxu0 0
        %1853 = vmatpush1.bf16.msra.mxu0 0
        %1854 = vmatprep.subr.bf16.mxu0 0
        %1855 = vmatpush1.bf16.msra.mxu0 0
        %1856 = vmatprep.subr.bf16.mxu0 0
        %1857 = vmatpush1.bf16.msra.mxu0 0
        %1858 = vmatprep.subr.bf16.mxu0 0
        %1859 = vmatpush1.bf16.msra.mxu0 0
        %1860 = vmatprep.subr.bf16.mxu0 0
        %1861 = vmatpush1.bf16.msra.mxu0 0
        %1862 = vmatprep.subr.bf16.mxu0 0
        %1863 = vmatpush1.bf16.msra.mxu0 0
        %1864 = vmatprep.subr.bf16.mxu0 0
        %1865 = vmatpush1.bf16.msra.mxu0 0
        %1866 = vmatprep.mubr.bf16.mxu0 0
        %1867 = vmatmul.mubr.bf16.gmra.mrb[0].mxu0 %v533
        %v1868 = vpop.f32.mrb[0].mxu0
        %v1869 = vadd.f32 0.0, %v1868
        %v1870 = vpop.f32.mrb[0].mxu0
        %v1871 = vpop.f32.mrb[0].mxu0
        %v1872 = vadd.f32 0.0, %v1871
        %v1873 = vpop.f32.mrb[0].mxu0
        %1874 = vdwg.mxu0
        %v1875 = vpack.c.bf16 %v1872, %v1869
        %v1877 = vsel %vm515, %v1765, 0
        %1879 = vmatprep.subr.bf16.mxu0 0
        %1880 = vmatpush1.bf16.msra.mxu0 %v585
        %1881 = vmatprep.subr.bf16.mxu0 0
        %1882 = vmatpush1.bf16.msra.mxu0 %v586
        %1883 = vmatprep.subr.bf16.mxu0 0
        %1884 = vmatpush1.bf16.msra.mxu0 0
        %1885 = vmatprep.subr.bf16.mxu0 0
        %1886 = vmatpush1.bf16.msra.mxu0 0
        %1887 = vmatprep.subr.bf16.mxu0 0
        %1888 = vmatpush1.bf16.msra.mxu0 0
        %1889 = vmatprep.subr.bf16.mxu0 0
        %1890 = vmatpush1.bf16.msra.mxu0 0
        %1891 = vmatprep.subr.bf16.mxu0 0
        %1892 = vmatpush1.bf16.msra.mxu0 0
        %1893 = vmatprep.subr.bf16.mxu0 0
        %1894 = vmatpush1.bf16.msra.mxu0 0
        %1895 = vmatprep.subr.bf16.mxu0 0
        %1896 = vmatpush1.bf16.msra.mxu0 0
        %1897 = vmatprep.subr.bf16.mxu0 0
        %1898 = vmatpush1.bf16.msra.mxu0 0
        %1899 = vmatprep.subr.bf16.mxu0 0
        %1900 = vmatpush1.bf16.msra.mxu0 0
        %1901 = vmatprep.subr.bf16.mxu0 0
        %1902 = vmatpush1.bf16.msra.mxu0 0
        %1903 = vmatprep.subr.bf16.mxu0 0
        %1904 = vmatpush1.bf16.msra.mxu0 0
        %1905 = vmatprep.subr.bf16.mxu0 0
        %1906 = vmatpush1.bf16.msra.mxu0 0
        %1907 = vmatprep.subr.bf16.mxu0 0
        %1908 = vmatpush1.bf16.msra.mxu0 0
        %1909 = vmatprep.subr.bf16.mxu0 0
        %1910 = vmatpush1.bf16.msra.mxu0 0
        %1911 = vmatprep.mubr.bf16.mxu0 0
        %1912 = vmatmul.mubr.bf16.gmra.mrb[0].mxu0 %v1877
        %v1913 = vpop.f32.mrb[0].mxu0
        %v1914 = vadd.f32 0.0, %v1913
        %v1915 = vpop.f32.mrb[0].mxu0
        %v1916 = vpop.f32.mrb[0].mxu0
        %v1917 = vadd.f32 0.0, %v1916
        %v1918 = vpop.f32.mrb[0].mxu0
        %1919 = vdwg.mxu0
        %v1921 = vsel %vm515, %v1875, 0
        %1923 = vmatprep.subr.bf16.mxu0 0
        %1924 = vmatpush1.bf16.msra.mxu0 %v641
        %1925 = vmatprep.subr.bf16.mxu0 0
        %1926 = vmatpush1.bf16.msra.mxu0 %v642
        %1927 = vmatprep.subr.bf16.mxu0 0
        %1928 = vmatpush1.bf16.msra.mxu0 0
        %1929 = vmatprep.subr.bf16.mxu0 0
        %1930 = vmatpush1.bf16.msra.mxu0 0
        %1931 = vmatprep.subr.bf16.mxu0 0
        %1932 = vmatpush1.bf16.msra.mxu0 0
        %1933 = vmatprep.subr.bf16.mxu0 0
        %1934 = vmatpush1.bf16.msra.mxu0 0
        %1935 = vmatprep.subr.bf16.mxu0 0
        %1936 = vmatpush1.bf16.msra.mxu0 0
        %1937 = vmatprep.subr.bf16.mxu0 0
        %1938 = vmatpush1.bf16.msra.mxu0 0
        %1939 = vmatprep.subr.bf16.mxu0 0
        %1940 = vmatpush1.bf16.msra.mxu0 0
        %1941 = vmatprep.subr.bf16.mxu0 0
        %1942 = vmatpush1.bf16.msra.mxu0 0
        %1943 = vmatprep.subr.bf16.mxu0 0
        %1944 = vmatpush1.bf16.msra.mxu0 0
        %1945 = vmatprep.subr.bf16.mxu0 0
        %1946 = vmatpush1.bf16.msra.mxu0 0
        %1947 = vmatprep.subr.bf16.mxu0 0
        %1948 = vmatpush1.bf16.msra.mxu0 0
        %1949 = vmatprep.subr.bf16.mxu0 0
        %1950 = vmatpush1.bf16.msra.mxu0 0
        %1951 = vmatprep.subr.bf16.mxu0 0
        %1952 = vmatpush1.bf16.msra.mxu0 0
        %1953 = vmatprep.subr.bf16.mxu0 0
        %1954 = vmatpush1.bf16.msra.mxu0 0
        %1955 = vmatprep.mubr.bf16.mxu0 0
        %1956 = vmatmul.mubr.bf16.gmra.mrb[0].mxu0 %v1921
        %v1957 = vpop.f32.mrb[0].mxu0
        %v1958 = vadd.f32 %v1914, %v1957
        %v1959 = vpop.f32.mrb[0].mxu0
        %v1960 = vpop.f32.mrb[0].mxu0
        %v1961 = vadd.f32 %v1917, %v1960
        %v1962 = vpop.f32.mrb[0].mxu0
        %1963 = vdwg.mxu0
        %v1964 = vadd.f32 %v1958, %v693
        %v1965 = vadd.f32 %v1961, %v693
        %vm1966 = vcmp.gt.f32.partialorder %v1964, 0.0
        %vm1967 = vcmp.gt.f32.partialorder %v1965, 0.0
        %v1968 = vmin.f32 %v1964, 0.0
        %v1969 = vmin.f32 %v1965, 0.0
        %v1970 = vmul.f32 %v1968, 1.442695
        %v1971 = vpow.pop %v1970
        %v1972 = vmul.f32 %v1969, 1.442695
        %v1973 = vpow.pop %v1972
        %v1974 = vsub.f32 %v1971, 1.0
        %v1975 = vsub.f32 %v1973, 1.0
        %v1976 = vsel %vm1966, %v1964, %v1974
        %v1977 = vsel %vm1967, %v1965, %v1975
        %v1978 = vpack.c.bf16 %v1977, %v1976
        %v1980 = vunpack.c.l.b16 %v1978
        %v1981 = vunpack.c.h.b16 %v1978
        %v1982 = vpack.c.b16 %v1980, %v1980
        %v1983 = vpack.c.b16 %v1981, %v1981
        %s1986 = scalar_lea.vmem %s399, 40 [#allocation11]
        %1987 = vst.msk [vmem:[%s1986] sm:$0xf] %vm717, %v1982
        %1988 = vst.msk [vmem:[%s1986 + $0x4] sm:$0xf] %vm717, %v1983
        %vm1989 = vcmp.gt.f32.partialorder %v1869, 0.0
        %vm1990 = vcmp.gt.f32.partialorder %v1872, 0.0
        %v1991 = vmin.f32 %v1869, 0.0
        %v1992 = vmin.f32 %v1872, 0.0
        %v1993 = vmul.f32 %v1991, 1.442695
        %v1994 = vpow.pop %v1993
        %v1995 = vmul.f32 %v1992, 1.442695
        %v1996 = vpow.pop %v1995
        %v1997 = vsub.f32 %v1994, 1.0
        %v1998 = vsub.f32 %v1996, 1.0
        %v1999 = vsel %vm1989, %v1869, %v1997
        %v2000 = vsel %vm1990, %v1872, %v1998
        %v2001 = vpack.c.bf16 %v2000, %v1999
        %v2003 = vunpack.c.l.b16 %v2001
        %v2004 = vunpack.c.h.b16 %v2001
        %v2005 = vpack.c.b16 %v2003, %v2003
        %v2006 = vpack.c.b16 %v2004, %v2004
        %s2009 = scalar_lea.vmem %s406, 40 [#allocation12]
        %2010 = vst.msk [vmem:[%s2009] sm:$0xf] %vm717, %v2005
        %2011 = vst.msk [vmem:[%s2009 + $0x4] sm:$0xf] %vm717, %v2006
        %s2012 = scalar_lea.vmem %s355, 48 [#allocation3]
        %v2013 = vld [vmem:[%s2012] sm:$0xf]
        %v2014 = vld [vmem:[%s2012 + $0x4] sm:$0xf]
        %v2017 = vunpack.c.l.b16 %v2013
        %v2018 = vunpack.c.l.b16 %v2014
        %v2019 = vpack.c.b16 %v2018, %v2017
        %2021 = vmatprep.subr.bf16.mxu0 0
        %2022 = vmatpush1.bf16.msra.mxu0 %v2019
        %2023 = vmatprep.subr.bf16.mxu0 0
        %2024 = vmatpush1.bf16.msra.mxu0 0
        %2025 = vmatprep.subr.bf16.mxu0 0
        %2026 = vmatpush1.bf16.msra.mxu0 0
        %2027 = vmatprep.subr.bf16.mxu0 0
        %2028 = vmatpush1.bf16.msra.mxu0 0
        %2029 = vmatprep.subr.bf16.mxu0 0
        %2030 = vmatpush1.bf16.msra.mxu0 0
        %2031 = vmatprep.subr.bf16.mxu0 0
        %2032 = vmatpush1.bf16.msra.mxu0 0
        %2033 = vmatprep.subr.bf16.mxu0 0
        %2034 = vmatpush1.bf16.msra.mxu0 0
        %2035 = vmatprep.subr.bf16.mxu0 0
        %2036 = vmatpush1.bf16.msra.mxu0 0
        %2037 = vmatprep.subr.bf16.mxu0 0
        %2038 = vmatpush1.bf16.msra.mxu0 0
        %2039 = vmatprep.subr.bf16.mxu0 0
        %2040 = vmatpush1.bf16.msra.mxu0 0
        %2041 = vmatprep.subr.bf16.mxu0 0
        %2042 = vmatpush1.bf16.msra.mxu0 0
        %2043 = vmatprep.subr.bf16.mxu0 0
        %2044 = vmatpush1.bf16.msra.mxu0 0
        %2045 = vmatprep.subr.bf16.mxu0 0
        %2046 = vmatpush1.bf16.msra.mxu0 0
        %2047 = vmatprep.subr.bf16.mxu0 0
        %2048 = vmatpush1.bf16.msra.mxu0 0
        %2049 = vmatprep.subr.bf16.mxu0 0
        %2050 = vmatpush1.bf16.msra.mxu0 0
        %2051 = vmatprep.subr.bf16.mxu0 0
        %2052 = vmatpush1.bf16.msra.mxu0 0
        %2053 = vmatprep.mubr.bf16.mxu0 0
        %2054 = vmatmul.mubr.bf16.gmra.mrb[0].mxu0 %v454
        %v2055 = vpop.f32.mrb[0].mxu0
        %v2056 = vadd.f32 0.0, %v2055
        %v2057 = vpop.f32.mrb[0].mxu0
        %v2058 = vpop.f32.mrb[0].mxu0
        %v2059 = vadd.f32 0.0, %v2058
        %v2060 = vpop.f32.mrb[0].mxu0
        %2061 = vmatprep.mubr.bf16.mxu0 0
        %2062 = vmatmul.mubr.bf16.gmra.mrb[0].mxu0 %v457
        %v2063 = vpop.f32.mrb[0].mxu0
        %v2064 = vadd.f32 0.0, %v2063
        %v2065 = vpop.f32.mrb[0].mxu0
        %v2066 = vpop.f32.mrb[0].mxu0
        %v2067 = vadd.f32 0.0, %v2066
        %v2068 = vpop.f32.mrb[0].mxu0
        %2069 = vdwg.mxu0
        %v2070 = vmul.f32 %v2056, %v427
        %v2071 = vmul.f32 %v2059, %v428
        %v2072 = vmul.f32 %v2064, %v431
        %v2073 = vmul.f32 %v2067, %v432
        %v2074 = vsub.f32 %v2070, %v2072
        %v2075 = vsub.f32 %v2071, %v2073
        %v2076 = vpack.c.bf16 %v2075, %v2074
        %2077 = vst.msk [vmem:[#allocation2] sm:$0xff] %vm515, %v2076
        %v2078 = vmul.f32 %v2056, %v431
        %v2079 = vmul.f32 %v2059, %v432
        %v2080 = vmul.f32 %v2064, %v427
        %v2081 = vmul.f32 %v2067, %v428
        %v2082 = vadd.f32 %v2078, %v2080
        %v2083 = vadd.f32 %v2079, %v2081
        %v2084 = vpack.c.bf16 %v2083, %v2082
        %2085 = vst.msk [vmem:[#allocation2 + $0x8] sm:$0xff] %vm515, %v2084
        %v2086 = vld [vmem:[#allocation2] sm:$0xff]
        %v2087 = vld [vmem:[#allocation2 + $0x8] sm:$0xff]
        %2088 = vmatprep.subr.bf16.mxu0 0
        %2089 = vmatpush1.bf16.msra.mxu0 %v2086
        %2090 = vmatprep.subr.bf16.mxu0 0
        %2091 = vmatpush1.bf16.msra.mxu0 %v2087
        %2092 = vmatprep.subr.bf16.mxu0 0
        %2093 = vmatpush1.bf16.msra.mxu0 0
        %2094 = vmatprep.subr.bf16.mxu0 0
        %2095 = vmatpush1.bf16.msra.mxu0 0
        %2096 = vmatprep.subr.bf16.mxu0 0
        %2097 = vmatpush1.bf16.msra.mxu0 0
        %2098 = vmatprep.subr.bf16.mxu0 0
        %2099 = vmatpush1.bf16.msra.mxu0 0
        %2100 = vmatprep.subr.bf16.mxu0 0
        %2101 = vmatpush1.bf16.msra.mxu0 0
        %2102 = vmatprep.subr.bf16.mxu0 0
        %2103 = vmatpush1.bf16.msra.mxu0 0
        %2104 = vmatprep.subr.bf16.mxu0 0
        %2105 = vmatpush1.bf16.msra.mxu0 0
        %2106 = vmatprep.subr.bf16.mxu0 0
        %2107 = vmatpush1.bf16.msra.mxu0 0
        %2108 = vmatprep.subr.bf16.mxu0 0
        %2109 = vmatpush1.bf16.msra.mxu0 0
        %2110 = vmatprep.subr.bf16.mxu0 0
        %2111 = vmatpush1.bf16.msra.mxu0 0
        %2112 = vmatprep.subr.bf16.mxu0 0
        %2113 = vmatpush1.bf16.msra.mxu0 0
        %2114 = vmatprep.subr.bf16.mxu0 0
        %2115 = vmatpush1.bf16.msra.mxu0 0
        %2116 = vmatprep.subr.bf16.mxu0 0
        %2117 = vmatpush1.bf16.msra.mxu0 0
        %2118 = vmatprep.subr.bf16.mxu0 0
        %2119 = vmatpush1.bf16.msra.mxu0 0
        %2120 = vmatprep.mubr.bf16.mxu0 0
        %2121 = vmatmul.mubr.bf16.gmra.mrb[0].mxu0 %v533
        %v2122 = vpop.f32.mrb[0].mxu0
        %v2123 = vadd.f32 0.0, %v2122
        %v2124 = vpop.f32.mrb[0].mxu0
        %v2125 = vpop.f32.mrb[0].mxu0
        %v2126 = vadd.f32 0.0, %v2125
        %v2127 = vpop.f32.mrb[0].mxu0
        %2128 = vdwg.mxu0
        %v2129 = vpack.c.bf16 %v2126, %v2123
        %v2131 = vsel %vm515, %v2019, 0
        %2133 = vmatprep.subr.bf16.mxu0 0
        %2134 = vmatpush1.bf16.msra.mxu0 %v585
        %2135 = vmatprep.subr.bf16.mxu0 0
        %2136 = vmatpush1.bf16.msra.mxu0 %v586
        %2137 = vmatprep.subr.bf16.mxu0 0
        %2138 = vmatpush1.bf16.msra.mxu0 0
        %2139 = vmatprep.subr.bf16.mxu0 0
        %2140 = vmatpush1.bf16.msra.mxu0 0
        %2141 = vmatprep.subr.bf16.mxu0 0
        %2142 = vmatpush1.bf16.msra.mxu0 0
        %2143 = vmatprep.subr.bf16.mxu0 0
        %2144 = vmatpush1.bf16.msra.mxu0 0
        %2145 = vmatprep.subr.bf16.mxu0 0
        %2146 = vmatpush1.bf16.msra.mxu0 0
        %2147 = vmatprep.subr.bf16.mxu0 0
        %2148 = vmatpush1.bf16.msra.mxu0 0
        %2149 = vmatprep.subr.bf16.mxu0 0
        %2150 = vmatpush1.bf16.msra.mxu0 0
        %2151 = vmatprep.subr.bf16.mxu0 0
        %2152 = vmatpush1.bf16.msra.mxu0 0
        %2153 = vmatprep.subr.bf16.mxu0 0
        %2154 = vmatpush1.bf16.msra.mxu0 0
        %2155 = vmatprep.subr.bf16.mxu0 0
        %2156 = vmatpush1.bf16.msra.mxu0 0
        %2157 = vmatprep.subr.bf16.mxu0 0
        %2158 = vmatpush1.bf16.msra.mxu0 0
        %2159 = vmatprep.subr.bf16.mxu0 0
        %2160 = vmatpush1.bf16.msra.mxu0 0
        %2161 = vmatprep.subr.bf16.mxu0 0
        %2162 = vmatpush1.bf16.msra.mxu0 0
        %2163 = vmatprep.subr.bf16.mxu0 0
        %2164 = vmatpush1.bf16.msra.mxu0 0
        %2165 = vmatprep.mubr.bf16.mxu0 0
        %2166 = vmatmul.mubr.bf16.gmra.mrb[0].mxu0 %v2131
        %v2167 = vpop.f32.mrb[0].mxu0
        %v2168 = vadd.f32 0.0, %v2167
        %v2169 = vpop.f32.mrb[0].mxu0
        %v2170 = vpop.f32.mrb[0].mxu0
        %v2171 = vadd.f32 0.0, %v2170
        %v2172 = vpop.f32.mrb[0].mxu0
        %2173 = vdwg.mxu0
        %v2175 = vsel %vm515, %v2129, 0
        %2177 = vmatprep.subr.bf16.mxu0 0
        %2178 = vmatpush1.bf16.msra.mxu0 %v641
        %2179 = vmatprep.subr.bf16.mxu0 0
        %2180 = vmatpush1.bf16.msra.mxu0 %v642
        %2181 = vmatprep.subr.bf16.mxu0 0
        %2182 = vmatpush1.bf16.msra.mxu0 0
        %2183 = vmatprep.subr.bf16.mxu0 0
        %2184 = vmatpush1.bf16.msra.mxu0 0
        %2185 = vmatprep.subr.bf16.mxu0 0
        %2186 = vmatpush1.bf16.msra.mxu0 0
        %2187 = vmatprep.subr.bf16.mxu0 0
        %2188 = vmatpush1.bf16.msra.mxu0 0
        %2189 = vmatprep.subr.bf16.mxu0 0
        %2190 = vmatpush1.bf16.msra.mxu0 0
        %2191 = vmatprep.subr.bf16.mxu0 0
        %2192 = vmatpush1.bf16.msra.mxu0 0
        %2193 = vmatprep.subr.bf16.mxu0 0
        %2194 = vmatpush1.bf16.msra.mxu0 0
        %2195 = vmatprep.subr.bf16.mxu0 0
        %2196 = vmatpush1.bf16.msra.mxu0 0
        %2197 = vmatprep.subr.bf16.mxu0 0
        %2198 = vmatpush1.bf16.msra.mxu0 0
        %2199 = vmatprep.subr.bf16.mxu0 0
        %2200 = vmatpush1.bf16.msra.mxu0 0
        %2201 = vmatprep.subr.bf16.mxu0 0
        %2202 = vmatpush1.bf16.msra.mxu0 0
        %2203 = vmatprep.subr.bf16.mxu0 0
        %2204 = vmatpush1.bf16.msra.mxu0 0
        %2205 = vmatprep.subr.bf16.mxu0 0
        %2206 = vmatpush1.bf16.msra.mxu0 0
        %2207 = vmatprep.subr.bf16.mxu0 0
        %2208 = vmatpush1.bf16.msra.mxu0 0
        %2209 = vmatprep.mubr.bf16.mxu0 0
        %2210 = vmatmul.mubr.bf16.gmra.mrb[0].mxu0 %v2175
        %v2211 = vpop.f32.mrb[0].mxu0
        %v2212 = vadd.f32 %v2168, %v2211
        %v2213 = vpop.f32.mrb[0].mxu0
        %v2214 = vpop.f32.mrb[0].mxu0
        %v2215 = vadd.f32 %v2171, %v2214
        %v2216 = vpop.f32.mrb[0].mxu0
        %2217 = vdwg.mxu0
        %v2218 = vadd.f32 %v2212, %v693
        %v2219 = vadd.f32 %v2215, %v693
        %vm2220 = vcmp.gt.f32.partialorder %v2218, 0.0
        %vm2221 = vcmp.gt.f32.partialorder %v2219, 0.0
        %v2222 = vmin.f32 %v2218, 0.0
        %v2223 = vmin.f32 %v2219, 0.0
        %v2224 = vmul.f32 %v2222, 1.442695
        %v2225 = vpow.pop %v2224
        %v2226 = vmul.f32 %v2223, 1.442695
        %v2227 = vpow.pop %v2226
        %v2228 = vsub.f32 %v2225, 1.0
        %v2229 = vsub.f32 %v2227, 1.0
        %v2230 = vsel %vm2220, %v2218, %v2228
        %v2231 = vsel %vm2221, %v2219, %v2229
        %v2232 = vpack.c.bf16 %v2231, %v2230
        %v2234 = vunpack.c.l.b16 %v2232
        %v2235 = vunpack.c.h.b16 %v2232
        %v2236 = vpack.c.b16 %v2234, %v2234
        %v2237 = vpack.c.b16 %v2235, %v2235
        %s2240 = scalar_lea.vmem %s399, 48 [#allocation11]
        %2241 = vst.msk [vmem:[%s2240] sm:$0xf] %vm717, %v2236
        %2242 = vst.msk [vmem:[%s2240 + $0x4] sm:$0xf] %vm717, %v2237
        %vm2243 = vcmp.gt.f32.partialorder %v2123, 0.0
        %vm2244 = vcmp.gt.f32.partialorder %v2126, 0.0
        %v2245 = vmin.f32 %v2123, 0.0
        %v2246 = vmin.f32 %v2126, 0.0
        %v2247 = vmul.f32 %v2245, 1.442695
        %v2248 = vpow.pop %v2247
        %v2249 = vmul.f32 %v2246, 1.442695
        %v2250 = vpow.pop %v2249
        %v2251 = vsub.f32 %v2248, 1.0
        %v2252 = vsub.f32 %v2250, 1.0
        %v2253 = vsel %vm2243, %v2123, %v2251
        %v2254 = vsel %vm2244, %v2126, %v2252
        %v2255 = vpack.c.bf16 %v2254, %v2253
        %v2257 = vunpack.c.l.b16 %v2255
        %v2258 = vunpack.c.h.b16 %v2255
        %v2259 = vpack.c.b16 %v2257, %v2257
        %v2260 = vpack.c.b16 %v2258, %v2258
        %s2263 = scalar_lea.vmem %s406, 48 [#allocation12]
        %2264 = vst.msk [vmem:[%s2263] sm:$0xf] %vm717, %v2259
        %2265 = vst.msk [vmem:[%s2263 + $0x4] sm:$0xf] %vm717, %v2260
        %s2266 = scalar_lea.vmem %s355, 56 [#allocation3]
        %v2267 = vld [vmem:[%s2266] sm:$0xf]
        %v2268 = vld [vmem:[%s2266 + $0x4] sm:$0xf]
        %v2271 = vunpack.c.l.b16 %v2267
        %v2272 = vunpack.c.l.b16 %v2268
        %v2273 = vpack.c.b16 %v2272, %v2271
        %2275 = vmatprep.subr.bf16.mxu0 0
        %2276 = vmatpush1.bf16.msra.mxu0 %v2273
        %2277 = vmatprep.subr.bf16.mxu0 0
        %2278 = vmatpush1.bf16.msra.mxu0 0
        %2279 = vmatprep.subr.bf16.mxu0 0
        %2280 = vmatpush1.bf16.msra.mxu0 0
        %2281 = vmatprep.subr.bf16.mxu0 0
        %2282 = vmatpush1.bf16.msra.mxu0 0
        %2283 = vmatprep.subr.bf16.mxu0 0
        %2284 = vmatpush1.bf16.msra.mxu0 0
        %2285 = vmatprep.subr.bf16.mxu0 0
        %2286 = vmatpush1.bf16.msra.mxu0 0
        %2287 = vmatprep.subr.bf16.mxu0 0
        %2288 = vmatpush1.bf16.msra.mxu0 0
        %2289 = vmatprep.subr.bf16.mxu0 0
        %2290 = vmatpush1.bf16.msra.mxu0 0
        %2291 = vmatprep.subr.bf16.mxu0 0
        %2292 = vmatpush1.bf16.msra.mxu0 0
        %2293 = vmatprep.subr.bf16.mxu0 0
        %2294 = vmatpush1.bf16.msra.mxu0 0
        %2295 = vmatprep.subr.bf16.mxu0 0
        %2296 = vmatpush1.bf16.msra.mxu0 0
        %2297 = vmatprep.subr.bf16.mxu0 0
        %2298 = vmatpush1.bf16.msra.mxu0 0
        %2299 = vmatprep.subr.bf16.mxu0 0
        %2300 = vmatpush1.bf16.msra.mxu0 0
        %2301 = vmatprep.subr.bf16.mxu0 0
        %2302 = vmatpush1.bf16.msra.mxu0 0
        %2303 = vmatprep.subr.bf16.mxu0 0
        %2304 = vmatpush1.bf16.msra.mxu0 0
        %2305 = vmatprep.subr.bf16.mxu0 0
        %2306 = vmatpush1.bf16.msra.mxu0 0
        %2307 = vmatprep.mubr.bf16.mxu0 0
        %2308 = vmatmul.mubr.bf16.gmra.mrb[0].mxu0 %v454
        %v2309 = vpop.f32.mrb[0].mxu0
        %v2310 = vadd.f32 0.0, %v2309
        %v2311 = vpop.f32.mrb[0].mxu0
        %v2312 = vpop.f32.mrb[0].mxu0
        %v2313 = vadd.f32 0.0, %v2312
        %v2314 = vpop.f32.mrb[0].mxu0
        %2315 = vmatprep.mubr.bf16.mxu0 0
        %2316 = vmatmul.mubr.bf16.gmra.mrb[0].mxu0 %v457
        %v2317 = vpop.f32.mrb[0].mxu0
        %v2318 = vadd.f32 0.0, %v2317
        %v2319 = vpop.f32.mrb[0].mxu0
        %v2320 = vpop.f32.mrb[0].mxu0
        %v2321 = vadd.f32 0.0, %v2320
        %v2322 = vpop.f32.mrb[0].mxu0
        %2323 = vdwg.mxu0
        %v2324 = vmul.f32 %v2310, %v427
        %v2325 = vmul.f32 %v2313, %v428
        %v2326 = vmul.f32 %v2318, %v431
        %v2327 = vmul.f32 %v2321, %v432
        %v2328 = vsub.f32 %v2324, %v2326
        %v2329 = vsub.f32 %v2325, %v2327
        %v2330 = vpack.c.bf16 %v2329, %v2328
        %2331 = vst.msk [vmem:[#allocation2] sm:$0xff] %vm515, %v2330
        %v2332 = vmul.f32 %v2310, %v431
        %v2333 = vmul.f32 %v2313, %v432
        %v2334 = vmul.f32 %v2318, %v427
        %v2335 = vmul.f32 %v2321, %v428
        %v2336 = vadd.f32 %v2332, %v2334
        %v2337 = vadd.f32 %v2333, %v2335
        %v2338 = vpack.c.bf16 %v2337, %v2336
        %2339 = vst.msk [vmem:[#allocation2 + $0x8] sm:$0xff] %vm515, %v2338
        %v2340 = vld [vmem:[#allocation2] sm:$0xff]
        %v2341 = vld [vmem:[#allocation2 + $0x8] sm:$0xff]
        %2342 = vmatprep.subr.bf16.mxu0 0
        %2343 = vmatpush1.bf16.msra.mxu0 %v2340
        %2344 = vmatprep.subr.bf16.mxu0 0
        %2345 = vmatpush1.bf16.msra.mxu0 %v2341
        %2346 = vmatprep.subr.bf16.mxu0 0
        %2347 = vmatpush1.bf16.msra.mxu0 0
        %2348 = vmatprep.subr.bf16.mxu0 0
        %2349 = vmatpush1.bf16.msra.mxu0 0
        %2350 = vmatprep.subr.bf16.mxu0 0
        %2351 = vmatpush1.bf16.msra.mxu0 0
        %2352 = vmatprep.subr.bf16.mxu0 0
        %2353 = vmatpush1.bf16.msra.mxu0 0
        %2354 = vmatprep.subr.bf16.mxu0 0
        %2355 = vmatpush1.bf16.msra.mxu0 0
        %2356 = vmatprep.subr.bf16.mxu0 0
        %2357 = vmatpush1.bf16.msra.mxu0 0
        %2358 = vmatprep.subr.bf16.mxu0 0
        %2359 = vmatpush1.bf16.msra.mxu0 0
        %2360 = vmatprep.subr.bf16.mxu0 0
        %2361 = vmatpush1.bf16.msra.mxu0 0
        %2362 = vmatprep.subr.bf16.mxu0 0
        %2363 = vmatpush1.bf16.msra.mxu0 0
        %2364 = vmatprep.subr.bf16.mxu0 0
        %2365 = vmatpush1.bf16.msra.mxu0 0
        %2366 = vmatprep.subr.bf16.mxu0 0
        %2367 = vmatpush1.bf16.msra.mxu0 0
        %2368 = vmatprep.subr.bf16.mxu0 0
        %2369 = vmatpush1.bf16.msra.mxu0 0
        %2370 = vmatprep.subr.bf16.mxu0 0
        %2371 = vmatpush1.bf16.msra.mxu0 0
        %2372 = vmatprep.subr.bf16.mxu0 0
        %2373 = vmatpush1.bf16.msra.mxu0 0
        %2374 = vmatprep.mubr.bf16.mxu0 0
        %2375 = vmatmul.mubr.bf16.gmra.mrb[0].mxu0 %v533
        %v2376 = vpop.f32.mrb[0].mxu0
        %v2377 = vadd.f32 0.0, %v2376
        %v2378 = vpop.f32.mrb[0].mxu0
        %v2379 = vpop.f32.mrb[0].mxu0
        %v2380 = vadd.f32 0.0, %v2379
        %v2381 = vpop.f32.mrb[0].mxu0
        %2382 = vdwg.mxu0
        %v2383 = vpack.c.bf16 %v2380, %v2377
        %v2385 = vsel %vm515, %v2273, 0
        %2387 = vmatprep.subr.bf16.mxu0 0
        %2388 = vmatpush1.bf16.msra.mxu0 %v585
        %2389 = vmatprep.subr.bf16.mxu0 0
        %2390 = vmatpush1.bf16.msra.mxu0 %v586
        %2391 = vmatprep.subr.bf16.mxu0 0
        %2392 = vmatpush1.bf16.msra.mxu0 0
        %2393 = vmatprep.subr.bf16.mxu0 0
        %2394 = vmatpush1.bf16.msra.mxu0 0
        %2395 = vmatprep.subr.bf16.mxu0 0
        %2396 = vmatpush1.bf16.msra.mxu0 0
        %2397 = vmatprep.subr.bf16.mxu0 0
        %2398 = vmatpush1.bf16.msra.mxu0 0
        %2399 = vmatprep.subr.bf16.mxu0 0
        %2400 = vmatpush1.bf16.msra.mxu0 0
        %2401 = vmatprep.subr.bf16.mxu0 0
        %2402 = vmatpush1.bf16.msra.mxu0 0
        %2403 = vmatprep.subr.bf16.mxu0 0
        %2404 = vmatpush1.bf16.msra.mxu0 0
        %2405 = vmatprep.subr.bf16.mxu0 0
        %2406 = vmatpush1.bf16.msra.mxu0 0
        %2407 = vmatprep.subr.bf16.mxu0 0
        %2408 = vmatpush1.bf16.msra.mxu0 0
        %2409 = vmatprep.subr.bf16.mxu0 0
        %2410 = vmatpush1.bf16.msra.mxu0 0
        %2411 = vmatprep.subr.bf16.mxu0 0
        %2412 = vmatpush1.bf16.msra.mxu0 0
        %2413 = vmatprep.subr.bf16.mxu0 0
        %2414 = vmatpush1.bf16.msra.mxu0 0
        %2415 = vmatprep.subr.bf16.mxu0 0
        %2416 = vmatpush1.bf16.msra.mxu0 0
        %2417 = vmatprep.subr.bf16.mxu0 0
        %2418 = vmatpush1.bf16.msra.mxu0 0
        %2419 = vmatprep.mubr.bf16.mxu0 0
        %2420 = vmatmul.mubr.bf16.gmra.mrb[0].mxu0 %v2385
        %v2421 = vpop.f32.mrb[0].mxu0
        %v2422 = vadd.f32 0.0, %v2421
        %v2423 = vpop.f32.mrb[0].mxu0
        %v2424 = vpop.f32.mrb[0].mxu0
        %v2425 = vadd.f32 0.0, %v2424
        %v2426 = vpop.f32.mrb[0].mxu0
        %2427 = vdwg.mxu0
        %v2429 = vsel %vm515, %v2383, 0
        %2431 = vmatprep.subr.bf16.mxu0 0
        %2432 = vmatpush1.bf16.msra.mxu0 %v641
        %2433 = vmatprep.subr.bf16.mxu0 0
        %2434 = vmatpush1.bf16.msra.mxu0 %v642
        %2435 = vmatprep.subr.bf16.mxu0 0
        %2436 = vmatpush1.bf16.msra.mxu0 0
        %2437 = vmatprep.subr.bf16.mxu0 0
        %2438 = vmatpush1.bf16.msra.mxu0 0
        %2439 = vmatprep.subr.bf16.mxu0 0
        %2440 = vmatpush1.bf16.msra.mxu0 0
        %2441 = vmatprep.subr.bf16.mxu0 0
        %2442 = vmatpush1.bf16.msra.mxu0 0
        %2443 = vmatprep.subr.bf16.mxu0 0
        %2444 = vmatpush1.bf16.msra.mxu0 0
        %2445 = vmatprep.subr.bf16.mxu0 0
        %2446 = vmatpush1.bf16.msra.mxu0 0
        %2447 = vmatprep.subr.bf16.mxu0 0
        %2448 = vmatpush1.bf16.msra.mxu0 0
        %2449 = vmatprep.subr.bf16.mxu0 0
        %2450 = vmatpush1.bf16.msra.mxu0 0
        %2451 = vmatprep.subr.bf16.mxu0 0
        %2452 = vmatpush1.bf16.msra.mxu0 0
        %2453 = vmatprep.subr.bf16.mxu0 0
        %2454 = vmatpush1.bf16.msra.mxu0 0
        %2455 = vmatprep.subr.bf16.mxu0 0
        %2456 = vmatpush1.bf16.msra.mxu0 0
        %2457 = vmatprep.subr.bf16.mxu0 0
        %2458 = vmatpush1.bf16.msra.mxu0 0
        %2459 = vmatprep.subr.bf16.mxu0 0
        %2460 = vmatpush1.bf16.msra.mxu0 0
        %2461 = vmatprep.subr.bf16.mxu0 0
        %2462 = vmatpush1.bf16.msra.mxu0 0
        %2463 = vmatprep.mubr.bf16.mxu0 0
        %2464 = vmatmul.mubr.bf16.gmra.mrb[0].mxu0 %v2429
        %v2465 = vpop.f32.mrb[0].mxu0
        %v2466 = vadd.f32 %v2422, %v2465
        %v2467 = vpop.f32.mrb[0].mxu0
        %v2468 = vpop.f32.mrb[0].mxu0
        %v2469 = vadd.f32 %v2425, %v2468
        %v2470 = vpop.f32.mrb[0].mxu0
        %2471 = vdwg.mxu0
        %v2472 = vadd.f32 %v2466, %v693
        %v2473 = vadd.f32 %v2469, %v693
        %vm2474 = vcmp.gt.f32.partialorder %v2472, 0.0
        %vm2475 = vcmp.gt.f32.partialorder %v2473, 0.0
        %v2476 = vmin.f32 %v2472, 0.0
        %v2477 = vmin.f32 %v2473, 0.0
        %v2478 = vmul.f32 %v2476, 1.442695
        %v2479 = vpow.pop %v2478
        %v2480 = vmul.f32 %v2477, 1.442695
        %v2481 = vpow.pop %v2480
        %v2482 = vsub.f32 %v2479, 1.0
        %v2483 = vsub.f32 %v2481, 1.0
        %v2484 = vsel %vm2474, %v2472, %v2482
        %v2485 = vsel %vm2475, %v2473, %v2483
        %v2486 = vpack.c.bf16 %v2485, %v2484
        %v2488 = vunpack.c.l.b16 %v2486
        %v2489 = vunpack.c.h.b16 %v2486
        %v2490 = vpack.c.b16 %v2488, %v2488
        %v2491 = vpack.c.b16 %v2489, %v2489
        %s2494 = scalar_lea.vmem %s399, 56 [#allocation11]
        %2495 = vst.msk [vmem:[%s2494] sm:$0xf] %vm717, %v2490
        %2496 = vst.msk [vmem:[%s2494 + $0x4] sm:$0xf] %vm717, %v2491
        %vm2497 = vcmp.gt.f32.partialorder %v2377, 0.0
        %vm2498 = vcmp.gt.f32.partialorder %v2380, 0.0
        %v2499 = vmin.f32 %v2377, 0.0
        %v2500 = vmin.f32 %v2380, 0.0
        %v2501 = vmul.f32 %v2499, 1.442695
        %v2502 = vpow.pop %v2501
        %v2503 = vmul.f32 %v2500, 1.442695
        %v2504 = vpow.pop %v2503
        %v2505 = vsub.f32 %v2502, 1.0
        %v2506 = vsub.f32 %v2504, 1.0
        %v2507 = vsel %vm2497, %v2377, %v2505
        %v2508 = vsel %vm2498, %v2380, %v2506
        %v2509 = vpack.c.bf16 %v2508, %v2507
        %v2511 = vunpack.c.l.b16 %v2509
        %v2512 = vunpack.c.h.b16 %v2509
        %v2513 = vpack.c.b16 %v2511, %v2511
        %v2514 = vpack.c.b16 %v2512, %v2512
        %s2517 = scalar_lea.vmem %s406, 56 [#allocation12]
        %2518 = vst.msk [vmem:[%s2517] sm:$0xf] %vm717, %v2513
        %2519 = vst.msk [vmem:[%s2517 + $0x4] sm:$0xf] %vm717, %v2514
        %s2520 = sand.u32 %s213, 1
        %s2521 = scalar_lea.sflag [#allocation5], %s2520
        %s2522 = sand.u32 %s213, 1
        %s2523 = smul.addr %s2522, 64
        %s2524 = scalar_lea.vmem [#allocation11], %s2523
        %s2525 = sand.u32 %s239, 1
        %s2526 = scalar_lea.sflag [#allocation13], %s2525
        %s2527 = sand.u32 %s239, 1
        %s2528 = smul.addr %s2527, 64
        %s2529 = scalar_lea.vmem [#allocation12], %s2528
        // Predicated region
        $region69: #{tpu_custom_call.1} parent=51 // pred_check
          %p2530 = pneg %p223
        $region70: #{tpu_custom_call.1} parent=51 // pred_check_branch
          %2532 = sbr.rel (%p2530) target = $region72
        $region71: #{tpu_custom_call.1} parent=51 // pred_region
          %s2533 = smul.u32 8, %s32
          %s2535 = ssub.s32 1024, 1024
          %2536 = vsyncadd %s2521, %s2535
          %s2537 = smul.addr %s2533, 2
          %s2538 = smul.addr %s2537, 64
          %s2539 = scalar_lea.hbm %s8, %s2538
          %s2540 = sshll.u32 %s2524, 4
          %s2541 = int_to_ptr.vmem [resolvable:$true] %s2540
          %2546 = dma.vmem_to_hbm [thread:$0]  %s2541, 1024, %s2539, %s2521, 64, 64, 4
        $region72: #{tpu_custom_call.1} parent=51 // pred_fallthru
          _
        // Predicated region
        $region73: #{tpu_custom_call.1} parent=51 // pred_check
          %p2547 = pneg %p249
        $region74: #{tpu_custom_call.1} parent=51 // pred_check_branch
          %2549 = sbr.rel (%p2547) target = $region76
        $region75: #{tpu_custom_call.1} parent=51 // pred_region
          %s2550 = smul.u32 8, %s32
          %s2552 = ssub.s32 1024, 1024
          %2553 = vsyncadd %s2526, %s2552
          %s2554 = smul.addr %s2550, 2
          %s2555 = smul.addr %s2554, 64
          %s2556 = scalar_lea.hbm %s9, %s2555
          %s2557 = sshll.u32 %s2529, 4
          %s2558 = int_to_ptr.vmem [resolvable:$true] %s2557
          %2563 = dma.vmem_to_hbm [thread:$0]  %s2558, 1024, %s2556, %s2526, 64, 64, 4
        $region76: #{tpu_custom_call.1} parent=51 // pred_fallthru
          _
      $region52: #{tpu_custom_call.1} parent=5 // pred_fallthru
        _
      %p2564 = scmp.le.s32.totalorder 2, %s27
      // Predicated region
      $region77: #{tpu_custom_call.1} parent=5 // pred_check
        %p2565 = pneg %p2564
      $region78: #{tpu_custom_call.1} parent=5 // pred_check_branch
        %2567 = sbr.rel (%p2565) target = $region80
      $region79: #{tpu_custom_call.1} parent=5 // pred_region
        %s2568 = ssub.s32 %s27, 2
        // Predicated region
        $region81: #{tpu_custom_call.1} parent=79 // pred_check
          %p2569 = pneg %p229
        $region82: #{tpu_custom_call.1} parent=79 // pred_check_branch
          %2571 = sbr.rel (%p2569) target = $region84
        $region83: #{tpu_custom_call.1} parent=79 // pred_region
          %s2572 = sand.u32 %s214, 1
          %s2573 = scalar_lea.sflag [#allocation5], %s2572
          %s2574 = sand.u32 %s214, 1
          %s2575 = smul.addr %s2574, 64
          %s2576 = scalar_lea.vmem [#allocation11], %s2575
          %2577 = dma.done %s2573, 1024
        $region84: #{tpu_custom_call.1} parent=79 // pred_fallthru
          _
        // Predicated region
        $region85: #{tpu_custom_call.1} parent=79 // pred_check
          %p2578 = pneg %p255
        $region86: #{tpu_custom_call.1} parent=79 // pred_check_branch
          %2580 = sbr.rel (%p2578) target = $region88
        $region87: #{tpu_custom_call.1} parent=79 // pred_region
          %s2581 = sand.u32 %s240, 1
          %s2582 = scalar_lea.sflag [#allocation13], %s2581
          %s2583 = sand.u32 %s240, 1
          %s2584 = smul.addr %s2583, 64
          %s2585 = scalar_lea.vmem [#allocation12], %s2584
          %2586 = dma.done %s2582, 1024
        $region88: #{tpu_custom_call.1} parent=79 // pred_fallthru
          _
      $region80: #{tpu_custom_call.1} parent=5 // pred_fallthru
        _
    $region6: #{tpu_custom_call.1} parent=1 // loop_footer
      %s31 = sadd.s32 1, %s27
    $region7: #{tpu_custom_call.1} parent=1 // loop_footer_branch
      %26 = sbr.rel target = $region3
    $region8: #{tpu_custom_call.1} parent=1 // loop_exit
      _
    %2587 = vsyncpa [#allocation4], 1
    %s2588 = scalar_lea.sflag [#allocation4], 1
    %2589 = vsyncpa %s2588, 1
    %2590 = vsyncpa [#allocation7], 1
    %2591 = vsyncpa [#allocation10], 1
    %2592 = vsyncpa [#allocation5], 1
    %s2593 = scalar_lea.sflag [#allocation5], 1
    %2594 = vsyncpa %s2593, 1
    %2595 = vsyncpa [#allocation13], 1
    %s2596 = scalar_lea.sflag [#allocation13], 1
    %2597 = vsyncpa %s2596, 1

</llo_original>
